<compile_context>
chip_gen: v7x
topology: tpu7x:2x2x1
jax: 0.10.0
libtpu: 0.0.40
codegen_flags: <defaults>
</compile_context>

<pallas_src>
import numpy as np
import jax
import jax.numpy as jnp
from jax.experimental import pallas as pl
from jax.experimental.pallas import tpu as pltpu


# ---------------------------------------------------------------------------
# Fused forward kernel (one grid step == one sample)
# ---------------------------------------------------------------------------
def _mynet_kernel(lhs1_ref,              # (1, 36, 36, 128)  conv1 patch-unrolled input
                  w1_ref, b1_ref,        # (128, 128), (1, 128)   conv1 (K=125 real)
                  w2_ref, b2_ref,        # (3, 48, 128), (1, 128) conv2 row taps, K=48
                  w3_ref, b3_ref,        # (3, 144, 128), (1, 128) conv3 row taps, K=144
                  w4_ref, b4_ref,        # (256, 128), (1, 128)   conv4 fully K-fused
                  w5_ref, b5_ref,        # (512, 128), (1, 128)   fc1 fully K-fused
                  w6_ref, b6_ref,        # (128, 128), (1, 128)   fc2
                  out_ref,               # (1, 8, 128)
                  ph1, ph2, ph3):        # H-pooled scratch (W pooled via strided reads)
    f32 = jnp.float32

    # ---------------- conv1 (5x5, 5->16): ONE matmul, pool, then tanh+bias ---
    acc1 = jnp.dot(lhs1_ref[...].reshape(36 * 36, 128), w1_ref[...],
                   preferred_element_type=f32)                       # (1296, 128)
    y = acc1.reshape(18, 2, 36, 128)
    ph1[...] = jnp.maximum(y[:, 0], y[:, 1])                         # pool H -> (18,36,128)
    pooled = jnp.maximum(ph1[:, pl.ds(0, 18, stride=2), :],
                         ph1[:, pl.ds(1, 18, stride=2), :])          # pool W -> (18,18,128)
    a1 = jnp.tanh(pooled + b1_ref[...])                              # 16 real channels

    # ---------------- conv2 (3x3, 16->48): kw-packed K=48, 3 row taps --------
    p2 = jnp.concatenate([a1[:, j:j + 16, :16] for j in range(3)], axis=-1)   # (18,16,48)
    acc2 = jnp.dot(p2[0:16].reshape(256, 48), w2_ref[0], preferred_element_type=f32)
    acc2 = acc2 + jnp.dot(p2[1:17].reshape(256, 48), w2_ref[1], preferred_element_type=f32)
    acc2 = acc2 + jnp.dot(p2[2:18].reshape(256, 48), w2_ref[2], preferred_element_type=f32)
    y = acc2.reshape(8, 2, 16, 128)
    ph2[...] = jnp.maximum(y[:, 0], y[:, 1])                         # (8,16,128)
    pooled = jnp.maximum(ph2[:, pl.ds(0, 8, stride=2), :],
                         ph2[:, pl.ds(1, 8, stride=2), :])           # (8,8,128)
    a2 = jnp.tanh(pooled + b2_ref[...])                              # 48 real channels

    # ---------------- conv3 (3x3, 48->64): kw-packed K=144, 3 row taps -------
    p3 = jnp.concatenate([a2[:, j:j + 6, :48] for j in range(3)], axis=-1)    # (8,6,144)
    acc3 = jnp.dot(p3[0:6].reshape(36, 144), w3_ref[0], preferred_element_type=f32)
    acc3 = acc3 + jnp.dot(p3[1:7].reshape(36, 144), w3_ref[1], preferred_element_type=f32)
    acc3 = acc3 + jnp.dot(p3[2:8].reshape(36, 144), w3_ref[2], preferred_element_type=f32)
    y = acc3.reshape(3, 2, 6, 128)
    ph3[...] = jnp.maximum(y[:, 0], y[:, 1])                         # (3,6,128)
    pooled = jnp.maximum(ph3[:, pl.ds(0, 3, stride=2), :],
                         ph3[:, pl.ds(1, 3, stride=2), :])           # (3,3,128)
    a3 = jnp.tanh(pooled + b3_ref[...])                              # 64 real channels

    # ---------------- conv4 (2x2, 64->64): ONE K=256 matmul + tanh -----------
    p4 = jnp.concatenate([a3[:, 0:2, :64], a3[:, 1:3, :64]], axis=-1)     # (3,2,128)
    lhs4 = jnp.concatenate([p4[0:2], p4[1:3]], axis=-1).reshape(4, 256)   # rows = 2h+w
    lhs4 = jnp.concatenate([lhs4, jnp.zeros((4, 256), f32)], axis=0)      # pad M to 8
    a4 = jnp.tanh(jnp.dot(lhs4, w4_ref[...], preferred_element_type=f32)
                  + b4_ref[...])                                          # (8,128)

    # ---------------- fc1 (256->100): ONE K=512 matmul + tanh ----------------
    # torch .view(-1, 256) (C,H,W) flatten order is baked into w5.
    lhs5 = jnp.concatenate([a4[0:1], a4[1:2], a4[2:3], a4[3:4]], axis=-1)  # (1,512)
    z = jnp.tanh(jnp.dot(jnp.broadcast_to(lhs5, (8, 512)), w5_ref[...],
                         preferred_element_type=f32) + b5_ref[...])        # (8,128) identical rows

    # ---------------- fc2 (100->6) -------------------------------------------
    o = jnp.dot(z, w6_ref[...], preferred_element_type=f32) + b6_ref[...]  # (8,128)
    out_ref[...] = o.reshape(1, 8, 128)


# ---------------------------------------------------------------------------
# Weight re-layout (done once) to match the in-kernel K orderings
# ---------------------------------------------------------------------------
def _pad_to(a, shape):
    return jnp.pad(a, [(0, t - s) for s, t in zip(a.shape, shape)])


def _conv1_mat(w):          # (16,5,5,5) -> (128,128), row = 25*kh + 5*kw + cin
    t = jnp.transpose(w, (2, 3, 1, 0)).reshape(125, 16)
    return _pad_to(t, (128, 128))


def _conv2_taps(w):         # (48,16,3,3) -> (3,48,128), row = 16*kw + cin
    t = jnp.transpose(w, (2, 3, 1, 0)).reshape(3, 48, 48)
    return _pad_to(t, (3, 48, 128))


def _conv3_taps(w):         # (64,48,3,3) -> (3,144,128), row = 48*kw + cin
    t = jnp.transpose(w, (2, 3, 1, 0)).reshape(3, 144, 64)
    return _pad_to(t, (3, 144, 128))


def _conv4_mat(w):          # (64,64,2,2) -> (256,128), row = 128*kh + 64*kw + cin
    t = jnp.transpose(w, (2, 3, 1, 0)).reshape(256, 64)
    return _pad_to(t, (256, 128))


def _fc1_mat(w):            # (100,256) -> (512,128), row = 128*(2h+w) + c
    t = w.reshape(100, 64, 2, 2)              # torch flat index = 4c + 2h + w
    t = jnp.transpose(t, (2, 3, 1, 0))        # (h, w, c, n)
    t = _pad_to(t, (2, 2, 128, 128))
    return t.reshape(512, 128)


def _fc2_mat(w):            # (6,100) -> (128,128)
    return _pad_to(w.T, (128, 128))


def _bias(b):               # (n,) -> (1, 128)
    return _pad_to(b, (128,)).reshape(1, 128)


def prepare_params(params):
    (w1, b1), (w2, b2), (w3, b3), (w4, b4), (wf1, bf1), (wf2, bf2) = params
    return (_conv1_mat(w1), _bias(b1),
            _conv2_taps(w2), _bias(b2),
            _conv3_taps(w3), _bias(b3),
            _conv4_mat(w4), _bias(b4),
            _fc1_mat(wf1), _bias(bf1),
            _fc2_mat(wf2), _bias(bf2))


# ---------------------------------------------------------------------------
# Wrapper: conv1 patch unroll (layout plumbing) + batched-grid pallas_call
# ---------------------------------------------------------------------------
@jax.jit
def mynet_forward(x_nchw, prepped):
    B = x_nchw.shape[0]
    x = jnp.transpose(x_nchw, (0, 2, 3, 1)).astype(jnp.float32)          # (B,40,40,5)
    # conv1 patch unroll: lane = 25*kh + 5*kw + cin  (K = 125 -> pad to 128)
    patches = [x[:, i:i + 36, j:j + 36, :] for i in range(5) for j in range(5)]
    lhs1 = jnp.concatenate(patches, axis=-1)                             # (B,36,36,125)
    lhs1 = jnp.pad(lhs1, ((0, 0), (0, 0), (0, 0), (0, 3)))               # (B,36,36,128)

    inputs = (lhs1,) + tuple(prepped)

    def const_spec(a):
        nd = a.ndim
        return pl.BlockSpec(a.shape, lambda b: (0,) * nd)

    in_specs = [pl.BlockSpec((1, 36, 36, 128), lambda b: (b, 0, 0, 0))]
    in_specs += [const_spec(a) for a in prepped]

    out = pl.pallas_call(
        _mynet_kernel,
        out_shape=jax.ShapeDtypeStruct((B, 8, 128), jnp.float32),
        grid=(B,),
        in_specs=in_specs,
        out_specs=pl.BlockSpec((1, 8, 128), lambda b: (b, 0, 0)),
        scratch_shapes=[
            pltpu.VMEM((18, 36, 128), jnp.float32),   # conv1 H-pooled
            pltpu.VMEM((8, 16, 128), jnp.float32),    # conv2 H-pooled
            pltpu.VMEM((3, 6, 128), jnp.float32),     # conv3 H-pooled
        ],
        compiler_params=pltpu.CompilerParams(
            dimension_semantics=("parallel",),
            vmem_limit_bytes=32 * 1024 * 1024),
    )(*inputs)
    return out[:, 0, :6]


# ---------------------------------------------------------------------------
# Deterministic parameter init (PyTorch default-style uniform bounds)
# ---------------------------------------------------------------------------
def init_params(key):
    conv_specs = [(16, 5, 5), (48, 16, 3), (64, 48, 3), (64, 64, 2)]
    fc_specs = [(100, 256), (6, 100)]
    keys = jax.random.split(key, 2 * (len(conv_specs) + len(fc_specs)))
    params, ki = [], 0
    for cout, cin, k in conv_specs:
        bound = 1.0 / float(np.sqrt(cin * k * k))
        w = jax.random.uniform(keys[ki], (cout, cin, k, k), jnp.float32, -bound, bound); ki += 1
        b = jax.random.uniform(keys[ki], (cout,), jnp.float32, -bound, bound); ki += 1
        params.append((w, b))
    for out_f, in_f in fc_specs:
        bound = 1.0 / float(np.sqrt(in_f))
        w = jax.random.uniform(keys[ki], (out_f, in_f), jnp.float32, -bound, bound); ki += 1
        b = jax.random.uniform(keys[ki], (out_f,), jnp.float32, -bound, bound); ki += 1
        params.append((w, b))
    return params


# ---------------------------------------------------------------------------
# Pure-JAX reference (mirrors the PyTorch module exactly)
# ---------------------------------------------------------------------------
def reference_forward(x, params):
    (w1, b1), (w2, b2), (w3, b3), (w4, b4), (wf1, bf1), (wf2, bf2) = params

    def conv(x, w, b):
        y = jax.lax.conv_general_dilated(
            x, w, (1, 1), 'VALID',
            dimension_numbers=('NCHW', 'OIHW', 'NCHW'),
            precision=jax.lax.Precision.HIGHEST)
        return y + b[None, :, None, None]

    def pool(x):
        return jax.lax.reduce_window(x, -jnp.inf, jax.lax.max,
                                     (1, 1, 2, 2), (1, 1, 2, 2), 'VALID')

    x = pool(jnp.tanh(conv(x, w1, b1)))
    x = pool(jnp.tanh(conv(x, w2, b2)))
    x = pool(jnp.tanh(conv(x, w3, b3)))
    x = jnp.tanh(conv(x, w4, b4))
    x = x.reshape(-1, 64 * 2 * 2)
    x = jnp.tanh(jnp.dot(x, wf1.T, precision=jax.lax.Precision.HIGHEST) + bf1)
    return jnp.dot(x, wf2.T, precision=jax.lax.Precision.HIGHEST) + bf2


if __name__ == "__main__":
    key = jax.random.PRNGKey(0)
    kp, kx = jax.random.split(key)
    params = init_params(kp)
    # 5x40x40 input is the size implied by the net (conv4 output must be 2x2x64)
    x = jax.random.normal(kx, (2, 5, 40, 40), jnp.float32)

    prepped = prepare_params(params)
    out = mynet_forward(x, prepped)
    out = jax.block_until_ready(out)

    assert out.shape == (2, 6), out.shape
    ref = reference_forward(x, params)
    np.testing.assert_allclose(np.asarray(out), np.asarray(ref),
                               rtol=2e-3, atol=2e-3)
    print("KERNEL_OK")
</pallas_src>

<mosaic_0001>
module attributes {stable_mosaic.version = 11 : i64} {
  func.func @_mynet_kernel(%arg0: i32, %arg1: memref<1x36x36x128xf32, #tpu.memory_space<vmem>>, %arg2: memref<128x128xf32, #tpu.memory_space<vmem>>, %arg3: memref<1x128xf32, #tpu.memory_space<vmem>>, %arg4: memref<3x48x128xf32, #tpu.memory_space<vmem>>, %arg5: memref<1x128xf32, #tpu.memory_space<vmem>>, %arg6: memref<3x144x128xf32, #tpu.memory_space<vmem>>, %arg7: memref<1x128xf32, #tpu.memory_space<vmem>>, %arg8: memref<256x128xf32, #tpu.memory_space<vmem>>, %arg9: memref<1x128xf32, #tpu.memory_space<vmem>>, %arg10: memref<512x128xf32, #tpu.memory_space<vmem>>, %arg11: memref<1x128xf32, #tpu.memory_space<vmem>>, %arg12: memref<128x128xf32, #tpu.memory_space<vmem>>, %arg13: memref<1x128xf32, #tpu.memory_space<vmem>>, %arg14: memref<1x8x128xf32, #tpu.memory_space<vmem>>, %arg15: memref<18x36x128xf32, #tpu.memory_space<vmem>>, %arg16: memref<8x16x128xf32, #tpu.memory_space<vmem>>, %arg17: memref<3x6x128xf32, #tpu.memory_space<vmem>>) attributes {dimension_semantics = [#tpu.dimension_semantics<parallel>], iteration_bounds = array<i64: 2>, scalar_prefetch = 0 : i64, scratch_operands = 3 : i64, tpu.core_type = #tpu.core_type<tc>, window_params = [{transform_indices = @transform_0, window_bounds = array<i64: 1, 36, 36, 128>}, {pipeline_mode = #tpu.pipeline_mode<synchronous>, transform_indices = @transform_1, window_bounds = array<i64: 128, 128>}, {pipeline_mode = #tpu.pipeline_mode<synchronous>, transform_indices = @transform_2, window_bounds = array<i64: 1, 128>}, {pipeline_mode = #tpu.pipeline_mode<synchronous>, transform_indices = @transform_3, window_bounds = array<i64: 3, 48, 128>}, {pipeline_mode = #tpu.pipeline_mode<synchronous>, transform_indices = @transform_4, window_bounds = array<i64: 1, 128>}, {pipeline_mode = #tpu.pipeline_mode<synchronous>, transform_indices = @transform_5, window_bounds = array<i64: 3, 144, 128>}, {pipeline_mode = #tpu.pipeline_mode<synchronous>, transform_indices = @transform_6, window_bounds = array<i64: 1, 128>}, {pipeline_mode = #tpu.pipeline_mode<synchronous>, transform_indices = @transform_7, window_bounds = array<i64: 256, 128>}, {pipeline_mode = #tpu.pipeline_mode<synchronous>, transform_indices = @transform_8, window_bounds = array<i64: 1, 128>}, {pipeline_mode = #tpu.pipeline_mode<synchronous>, transform_indices = @transform_9, window_bounds = array<i64: 512, 128>}, {pipeline_mode = #tpu.pipeline_mode<synchronous>, transform_indices = @transform_10, window_bounds = array<i64: 1, 128>}, {pipeline_mode = #tpu.pipeline_mode<synchronous>, transform_indices = @transform_11, window_bounds = array<i64: 128, 128>}, {pipeline_mode = #tpu.pipeline_mode<synchronous>, transform_indices = @transform_12, window_bounds = array<i64: 1, 128>}, {transform_indices = @transform_13, window_bounds = array<i64: 1, 8, 128>}]} {
    %c0 = arith.constant 0 : index
    %c0_0 = arith.constant 0 : index
    %c0_1 = arith.constant 0 : index
    %c0_2 = arith.constant 0 : index
    %0 = vector.load %arg1[%c0, %c0_0, %c0_1, %c0_2] : memref<1x36x36x128xf32, #tpu.memory_space<vmem>>, vector<1x36x36x128xf32>
    %1 = vector.shape_cast %0 : vector<1x36x36x128xf32> to vector<1296x128xf32>
    %c0_3 = arith.constant 0 : index
    %c0_4 = arith.constant 0 : index
    %2 = vector.load %arg2[%c0_3, %c0_4] : memref<128x128xf32, #tpu.memory_space<vmem>>, vector<128x128xf32>
    %cst = arith.constant dense<0.000000e+00> : vector<1296x128xf32>
    %3 = tpu.matmul %1, %2, %cst {dimension_numbers = #tpu.dot_dimension_numbers<[1], [0], [0], [1], [0, 0, 1, 1], [], []>} : vector<1296x128xf32>, vector<128x128xf32>, vector<1296x128xf32> -> vector<1296x128xf32>
    %4 = vector.shape_cast %3 : vector<1296x128xf32> to vector<18x2x36x128xf32>
    %5 = vector.extract_strided_slice %4 {offsets = [0, 0, 0, 0], sizes = [18, 1, 36, 128], strides = [1, 1, 1, 1]} : vector<18x2x36x128xf32> to vector<18x1x36x128xf32>
    %6 = vector.shape_cast %5 : vector<18x1x36x128xf32> to vector<18x36x128xf32>
    %7 = vector.extract_strided_slice %4 {offsets = [0, 1, 0, 0], sizes = [18, 1, 36, 128], strides = [1, 1, 1, 1]} : vector<18x2x36x128xf32> to vector<18x1x36x128xf32>
    %8 = vector.shape_cast %7 : vector<18x1x36x128xf32> to vector<18x36x128xf32>
    %9 = arith.maximumf %6, %8 : vector<18x36x128xf32>
    %c0_5 = arith.constant 0 : index
    %c0_6 = arith.constant 0 : index
    %c0_7 = arith.constant 0 : index
    %10 = vector.load %arg15[%c0_5, %c0_6, %c0_7] : memref<18x36x128xf32, #tpu.memory_space<vmem>>, vector<18x36x128xf32>
    tpu.vector_store %arg15[%c0_5, %c0_6, %c0_7], %9 {strides = array<i32>} : memref<18x36x128xf32, #tpu.memory_space<vmem>>, vector<18x36x128xf32>,
    %c0_8 = arith.constant 0 : index
    %c0_9 = arith.constant 0 : index
    %c0_10 = arith.constant 0 : index
    %11 = tpu.strided_load %arg15[%c0_8, %c0_9, %c0_10] {strides = array<i32: 1, 2, 1>} : memref<18x36x128xf32, #tpu.memory_space<vmem>>, vector<18x18x128xf32>
    %c0_11 = arith.constant 0 : index
    %c1 = arith.constant 1 : index
    %c0_12 = arith.constant 0 : index
    %12 = tpu.strided_load %arg15[%c0_11, %c1, %c0_12] {strides = array<i32: 1, 2, 1>} : memref<18x36x128xf32, #tpu.memory_space<vmem>>, vector<18x18x128xf32>
    %13 = arith.maximumf %11, %12 : vector<18x18x128xf32>
    %c0_13 = arith.constant 0 : index
    %c0_14 = arith.constant 0 : index
    %14 = vector.load %arg3[%c0_13, %c0_14] : memref<1x128xf32, #tpu.memory_space<vmem>>, vector<1x128xf32>
    %15 = vector.shape_cast %14 : vector<1x128xf32> to vector<1x1x128xf32>
    %16 = vector.broadcast %15 : vector<1x1x128xf32> to vector<18x18x128xf32>
    %17 = arith.addf %13, %16 : vector<18x18x128xf32>
    %18 = math.tanh %17 : vector<18x18x128xf32>
    %19 = vector.extract_strided_slice %18 {offsets = [0, 0, 0], sizes = [18, 16, 16], strides = [1, 1, 1]} : vector<18x18x128xf32> to vector<18x16x16xf32>
    %20 = vector.extract_strided_slice %18 {offsets = [0, 1, 0], sizes = [18, 16, 16], strides = [1, 1, 1]} : vector<18x18x128xf32> to vector<18x16x16xf32>
    %21 = vector.extract_strided_slice %18 {offsets = [0, 2, 0], sizes = [18, 16, 16], strides = [1, 1, 1]} : vector<18x18x128xf32> to vector<18x16x16xf32>
    %22 = tpu.concatenate %19, %20, %21 in 2 : vector<18x16x16xf32>, vector<18x16x16xf32>, vector<18x16x16xf32> -> vector<18x16x48xf32>
    %23 = vector.extract_strided_slice %22 {offsets = [0, 0, 0], sizes = [16, 16, 48], strides = [1, 1, 1]} : vector<18x16x48xf32> to vector<16x16x48xf32>
    %24 = vector.shape_cast %23 : vector<16x16x48xf32> to vector<256x48xf32>
    %c0_15 = arith.constant 0 : index
    %c0_16 = arith.constant 0 : index
    %c0_17 = arith.constant 0 : index
    %25 = vector.load %arg4[%c0_15, %c0_16, %c0_17] : memref<3x48x128xf32, #tpu.memory_space<vmem>>, vector<1x48x128xf32>
    %26 = vector.shape_cast %25 : vector<1x48x128xf32> to vector<48x128xf32>
    %cst_18 = arith.constant dense<0.000000e+00> : vector<256x128xf32>
    %27 = tpu.matmul %24, %26, %cst_18 {dimension_numbers = #tpu.dot_dimension_numbers<[1], [0], [0], [1], [0, 0, 1, 1], [], []>} : vector<256x48xf32>, vector<48x128xf32>, vector<256x128xf32> -> vector<256x128xf32>
    %28 = vector.extract_strided_slice %22 {offsets = [1, 0, 0], sizes = [16, 16, 48], strides = [1, 1, 1]} : vector<18x16x48xf32> to vector<16x16x48xf32>
    %29 = vector.shape_cast %28 : vector<16x16x48xf32> to vector<256x48xf32>
    %c1_19 = arith.constant 1 : index
    %c0_20 = arith.constant 0 : index
    %c0_21 = arith.constant 0 : index
    %30 = vector.load %arg4[%c1_19, %c0_20, %c0_21] : memref<3x48x128xf32, #tpu.memory_space<vmem>>, vector<1x48x128xf32>
    %31 = vector.shape_cast %30 : vector<1x48x128xf32> to vector<48x128xf32>
    %cst_22 = arith.constant dense<0.000000e+00> : vector<256x128xf32>
    %32 = tpu.matmul %29, %31, %cst_22 {dimension_numbers = #tpu.dot_dimension_numbers<[1], [0], [0], [1], [0, 0, 1, 1], [], []>} : vector<256x48xf32>, vector<48x128xf32>, vector<256x128xf32> -> vector<256x128xf32>
    %33 = arith.addf %27, %32 : vector<256x128xf32>
    %34 = vector.extract_strided_slice %22 {offsets = [2, 0, 0], sizes = [16, 16, 48], strides = [1, 1, 1]} : vector<18x16x48xf32> to vector<16x16x48xf32>
    %35 = vector.shape_cast %34 : vector<16x16x48xf32> to vector<256x48xf32>
    %c2 = arith.constant 2 : index
    %c0_23 = arith.constant 0 : index
    %c0_24 = arith.constant 0 : index
    %36 = vector.load %arg4[%c2, %c0_23, %c0_24] : memref<3x48x128xf32, #tpu.memory_space<vmem>>, vector<1x48x128xf32>
    %37 = vector.shape_cast %36 : vector<1x48x128xf32> to vector<48x128xf32>
    %cst_25 = arith.constant dense<0.000000e+00> : vector<256x128xf32>
    %38 = tpu.matmul %35, %37, %cst_25 {dimension_numbers = #tpu.dot_dimension_numbers<[1], [0], [0], [1], [0, 0, 1, 1], [], []>} : vector<256x48xf32>, vector<48x128xf32>, vector<256x128xf32> -> vector<256x128xf32>
    %39 = arith.addf %33, %38 : vector<256x128xf32>
    %40 = vector.shape_cast %39 : vector<256x128xf32> to vector<8x2x16x128xf32>
    %41 = vector.extract_strided_slice %40 {offsets = [0, 0, 0, 0], sizes = [8, 1, 16, 128], strides = [1, 1, 1, 1]} : vector<8x2x16x128xf32> to vector<8x1x16x128xf32>
    %42 = vector.shape_cast %41 : vector<8x1x16x128xf32> to vector<8x16x128xf32>
    %43 = vector.extract_strided_slice %40 {offsets = [0, 1, 0, 0], sizes = [8, 1, 16, 128], strides = [1, 1, 1, 1]} : vector<8x2x16x128xf32> to vector<8x1x16x128xf32>
    %44 = vector.shape_cast %43 : vector<8x1x16x128xf32> to vector<8x16x128xf32>
    %45 = arith.maximumf %42, %44 : vector<8x16x128xf32>
    %c0_26 = arith.constant 0 : index
    %c0_27 = arith.constant 0 : index
    %c0_28 = arith.constant 0 : index
    %46 = vector.load %arg16[%c0_26, %c0_27, %c0_28] : memref<8x16x128xf32, #tpu.memory_space<vmem>>, vector<8x16x128xf32>
    tpu.vector_store %arg16[%c0_26, %c0_27, %c0_28], %45 {strides = array<i32>} : memref<8x16x128xf32, #tpu.memory_space<vmem>>, vector<8x16x128xf32>,
    %c0_29 = arith.constant 0 : index
    %c0_30 = arith.constant 0 : index
    %c0_31 = arith.constant 0 : index
    %47 = tpu.strided_load %arg16[%c0_29, %c0_30, %c0_31] {strides = array<i32: 1, 2, 1>} : memref<8x16x128xf32, #tpu.memory_space<vmem>>, vector<8x8x128xf32>
    %c0_32 = arith.constant 0 : index
    %c1_33 = arith.constant 1 : index
    %c0_34 = arith.constant 0 : index
    %48 = tpu.strided_load %arg16[%c0_32, %c1_33, %c0_34] {strides = array<i32: 1, 2, 1>} : memref<8x16x128xf32, #tpu.memory_space<vmem>>, vector<8x8x128xf32>
    %49 = arith.maximumf %47, %48 : vector<8x8x128xf32>
    %c0_35 = arith.constant 0 : index
    %c0_36 = arith.constant 0 : index
    %50 = vector.load %arg5[%c0_35, %c0_36] : memref<1x128xf32, #tpu.memory_space<vmem>>, vector<1x128xf32>
    %51 = vector.shape_cast %50 : vector<1x128xf32> to vector<1x1x128xf32>
    %52 = vector.broadcast %51 : vector<1x1x128xf32> to vector<8x8x128xf32>
    %53 = arith.addf %49, %52 : vector<8x8x128xf32>
    %54 = math.tanh %53 : vector<8x8x128xf32>
    %55 = vector.extract_strided_slice %54 {offsets = [0, 0, 0], sizes = [8, 6, 48], strides = [1, 1, 1]} : vector<8x8x128xf32> to vector<8x6x48xf32>
    %56 = vector.extract_strided_slice %54 {offsets = [0, 1, 0], sizes = [8, 6, 48], strides = [1, 1, 1]} : vector<8x8x128xf32> to vector<8x6x48xf32>
    %57 = vector.extract_strided_slice %54 {offsets = [0, 2, 0], sizes = [8, 6, 48], strides = [1, 1, 1]} : vector<8x8x128xf32> to vector<8x6x48xf32>
    %58 = tpu.concatenate %55, %56, %57 in 2 : vector<8x6x48xf32>, vector<8x6x48xf32>, vector<8x6x48xf32> -> vector<8x6x144xf32>
    %59 = vector.extract_strided_slice %58 {offsets = [0, 0, 0], sizes = [6, 6, 144], strides = [1, 1, 1]} : vector<8x6x144xf32> to vector<6x6x144xf32>
    %60 = vector.shape_cast %59 : vector<6x6x144xf32> to vector<36x144xf32>
    %c0_37 = arith.constant 0 : index
    %c0_38 = arith.constant 0 : index
    %c0_39 = arith.constant 0 : index
    %61 = vector.load %arg6[%c0_37, %c0_38, %c0_39] : memref<3x144x128xf32, #tpu.memory_space<vmem>>, vector<1x144x128xf32>
    %62 = vector.shape_cast %61 : vector<1x144x128xf32> to vector<144x128xf32>
    %cst_40 = arith.constant dense<0.000000e+00> : vector<36x128xf32>
    %63 = tpu.matmul %60, %62, %cst_40 {dimension_numbers = #tpu.dot_dimension_numbers<[1], [0], [0], [1], [0, 0, 1, 1], [], []>} : vector<36x144xf32>, vector<144x128xf32>, vector<36x128xf32> -> vector<36x128xf32>
    %64 = vector.extract_strided_slice %58 {offsets = [1, 0, 0], sizes = [6, 6, 144], strides = [1, 1, 1]} : vector<8x6x144xf32> to vector<6x6x144xf32>
    %65 = vector.shape_cast %64 : vector<6x6x144xf32> to vector<36x144xf32>
    %c1_41 = arith.constant 1 : index
    %c0_42 = arith.constant 0 : index
    %c0_43 = arith.constant 0 : index
    %66 = vector.load %arg6[%c1_41, %c0_42, %c0_43] : memref<3x144x128xf32, #tpu.memory_space<vmem>>, vector<1x144x128xf32>
    %67 = vector.shape_cast %66 : vector<1x144x128xf32> to vector<144x128xf32>
    %cst_44 = arith.constant dense<0.000000e+00> : vector<36x128xf32>
    %68 = tpu.matmul %65, %67, %cst_44 {dimension_numbers = #tpu.dot_dimension_numbers<[1], [0], [0], [1], [0, 0, 1, 1], [], []>} : vector<36x144xf32>, vector<144x128xf32>, vector<36x128xf32> -> vector<36x128xf32>
    %69 = arith.addf %63, %68 : vector<36x128xf32>
    %70 = vector.extract_strided_slice %58 {offsets = [2, 0, 0], sizes = [6, 6, 144], strides = [1, 1, 1]} : vector<8x6x144xf32> to vector<6x6x144xf32>
    %71 = vector.shape_cast %70 : vector<6x6x144xf32> to vector<36x144xf32>
    %c2_45 = arith.constant 2 : index
    %c0_46 = arith.constant 0 : index
    %c0_47 = arith.constant 0 : index
    %72 = vector.load %arg6[%c2_45, %c0_46, %c0_47] : memref<3x144x128xf32, #tpu.memory_space<vmem>>, vector<1x144x128xf32>
    %73 = vector.shape_cast %72 : vector<1x144x128xf32> to vector<144x128xf32>
    %cst_48 = arith.constant dense<0.000000e+00> : vector<36x128xf32>
    %74 = tpu.matmul %71, %73, %cst_48 {dimension_numbers = #tpu.dot_dimension_numbers<[1], [0], [0], [1], [0, 0, 1, 1], [], []>} : vector<36x144xf32>, vector<144x128xf32>, vector<36x128xf32> -> vector<36x128xf32>
    %75 = arith.addf %69, %74 : vector<36x128xf32>
    %76 = vector.shape_cast %75 : vector<36x128xf32> to vector<3x2x6x128xf32>
    %77 = vector.extract_strided_slice %76 {offsets = [0, 0, 0, 0], sizes = [3, 1, 6, 128], strides = [1, 1, 1, 1]} : vector<3x2x6x128xf32> to vector<3x1x6x128xf32>
    %78 = vector.shape_cast %77 : vector<3x1x6x128xf32> to vector<3x6x128xf32>
    %79 = vector.extract_strided_slice %76 {offsets = [0, 1, 0, 0], sizes = [3, 1, 6, 128], strides = [1, 1, 1, 1]} : vector<3x2x6x128xf32> to vector<3x1x6x128xf32>
    %80 = vector.shape_cast %79 : vector<3x1x6x128xf32> to vector<3x6x128xf32>
    %81 = arith.maximumf %78, %80 : vector<3x6x128xf32>
    %c0_49 = arith.constant 0 : index
    %c0_50 = arith.constant 0 : index
    %c0_51 = arith.constant 0 : index
    %82 = vector.load %arg17[%c0_49, %c0_50, %c0_51] : memref<3x6x128xf32, #tpu.memory_space<vmem>>, vector<3x6x128xf32>
    tpu.vector_store %arg17[%c0_49, %c0_50, %c0_51], %81 {strides = array<i32>} : memref<3x6x128xf32, #tpu.memory_space<vmem>>, vector<3x6x128xf32>,
    %c0_52 = arith.constant 0 : index
    %c0_53 = arith.constant 0 : index
    %c0_54 = arith.constant 0 : index
    %83 = tpu.strided_load %arg17[%c0_52, %c0_53, %c0_54] {strides = array<i32: 1, 2, 1>} : memref<3x6x128xf32, #tpu.memory_space<vmem>>, vector<3x3x128xf32>
    %c0_55 = arith.constant 0 : index
    %c1_56 = arith.constant 1 : index
    %c0_57 = arith.constant 0 : index
    %84 = tpu.strided_load %arg17[%c0_55, %c1_56, %c0_57] {strides = array<i32: 1, 2, 1>} : memref<3x6x128xf32, #tpu.memory_space<vmem>>, vector<3x3x128xf32>
    %85 = arith.maximumf %83, %84 : vector<3x3x128xf32>
    %c0_58 = arith.constant 0 : index
    %c0_59 = arith.constant 0 : index
    %86 = vector.load %arg7[%c0_58, %c0_59] : memref<1x128xf32, #tpu.memory_space<vmem>>, vector<1x128xf32>
    %87 = vector.shape_cast %86 : vector<1x128xf32> to vector<1x1x128xf32>
    %88 = vector.broadcast %87 : vector<1x1x128xf32> to vector<3x3x128xf32>
    %89 = arith.addf %85, %88 : vector<3x3x128xf32>
    %90 = math.tanh %89 : vector<3x3x128xf32>
    %91 = vector.extract_strided_slice %90 {offsets = [0, 0, 0], sizes = [3, 2, 64], strides = [1, 1, 1]} : vector<3x3x128xf32> to vector<3x2x64xf32>
    %92 = vector.extract_strided_slice %90 {offsets = [0, 1, 0], sizes = [3, 2, 64], strides = [1, 1, 1]} : vector<3x3x128xf32> to vector<3x2x64xf32>
    %93 = tpu.concatenate %91, %92 in 2 : vector<3x2x64xf32>, vector<3x2x64xf32> -> vector<3x2x128xf32>
    %94 = vector.extract_strided_slice %93 {offsets = [0, 0, 0], sizes = [2, 2, 128], strides = [1, 1, 1]} : vector<3x2x128xf32> to vector<2x2x128xf32>
    %95 = vector.extract_strided_slice %93 {offsets = [1, 0, 0], sizes = [2, 2, 128], strides = [1, 1, 1]} : vector<3x2x128xf32> to vector<2x2x128xf32>
    %96 = tpu.concatenate %94, %95 in 2 : vector<2x2x128xf32>, vector<2x2x128xf32> -> vector<2x2x256xf32>
    %97 = vector.shape_cast %96 : vector<2x2x256xf32> to vector<4x256xf32>
    %cst_60 = arith.constant 0.000000e+00 : f32
    %98 = vector.broadcast %cst_60 : f32 to vector<4x256xf32>
    %99 = tpu.concatenate %97, %98 in 0 : vector<4x256xf32>, vector<4x256xf32> -> vector<8x256xf32>
    %c0_61 = arith.constant 0 : index
    %c0_62 = arith.constant 0 : index
    %100 = vector.load %arg8[%c0_61, %c0_62] : memref<256x128xf32, #tpu.memory_space<vmem>>, vector<256x128xf32>
    %cst_63 = arith.constant dense<0.000000e+00> : vector<8x128xf32>
    %101 = tpu.matmul %99, %100, %cst_63 {dimension_numbers = #tpu.dot_dimension_numbers<[1], [0], [0], [1], [0, 0, 1, 1], [], []>} : vector<8x256xf32>, vector<256x128xf32>, vector<8x128xf32> -> vector<8x128xf32>
    %c0_64 = arith.constant 0 : index
    %c0_65 = arith.constant 0 : index
    %102 = vector.load %arg9[%c0_64, %c0_65] : memref<1x128xf32, #tpu.memory_space<vmem>>, vector<1x128xf32>
    %103 = vector.broadcast %102 : vector<1x128xf32> to vector<8x128xf32>
    %104 = arith.addf %101, %103 : vector<8x128xf32>
    %105 = math.tanh %104 : vector<8x128xf32>
    %106 = vector.extract_strided_slice %105 {offsets = [0, 0], sizes = [1, 128], strides = [1, 1]} : vector<8x128xf32> to vector<1x128xf32>
    %107 = vector.extract_strided_slice %105 {offsets = [1, 0], sizes = [1, 128], strides = [1, 1]} : vector<8x128xf32> to vector<1x128xf32>
    %108 = vector.extract_strided_slice %105 {offsets = [2, 0], sizes = [1, 128], strides = [1, 1]} : vector<8x128xf32> to vector<1x128xf32>
    %109 = vector.extract_strided_slice %105 {offsets = [3, 0], sizes = [1, 128], strides = [1, 1]} : vector<8x128xf32> to vector<1x128xf32>
    %110 = tpu.concatenate %106, %107, %108, %109 in 1 : vector<1x128xf32>, vector<1x128xf32>, vector<1x128xf32>, vector<1x128xf32> -> vector<1x512xf32>
    %111 = vector.shape_cast %110 : vector<1x512xf32> to vector<1x512xf32>
    %112 = vector.broadcast %111 : vector<1x512xf32> to vector<8x512xf32>
    %c0_66 = arith.constant 0 : index
    %c0_67 = arith.constant 0 : index
    %113 = vector.load %arg10[%c0_66, %c0_67] : memref<512x128xf32, #tpu.memory_space<vmem>>, vector<512x128xf32>
    %cst_68 = arith.constant dense<0.000000e+00> : vector<8x128xf32>
    %114 = tpu.matmul %112, %113, %cst_68 {dimension_numbers = #tpu.dot_dimension_numbers<[1], [0], [0], [1], [0, 0, 1, 1], [], []>} : vector<8x512xf32>, vector<512x128xf32>, vector<8x128xf32> -> vector<8x128xf32>
    %c0_69 = arith.constant 0 : index
    %c0_70 = arith.constant 0 : index
    %115 = vector.load %arg11[%c0_69, %c0_70] : memref<1x128xf32, #tpu.memory_space<vmem>>, vector<1x128xf32>
    %116 = vector.broadcast %115 : vector<1x128xf32> to vector<8x128xf32>
    %117 = arith.addf %114, %116 : vector<8x128xf32>
    %118 = math.tanh %117 : vector<8x128xf32>
    %c0_71 = arith.constant 0 : index
    %c0_72 = arith.constant 0 : index
    %119 = vector.load %arg12[%c0_71, %c0_72] : memref<128x128xf32, #tpu.memory_space<vmem>>, vector<128x128xf32>
    %cst_73 = arith.constant dense<0.000000e+00> : vector<8x128xf32>
    %120 = tpu.matmul %118, %119, %cst_73 {dimension_numbers = #tpu.dot_dimension_numbers<[1], [0], [0], [1], [0, 0, 1, 1], [], []>} : vector<8x128xf32>, vector<128x128xf32>, vector<8x128xf32> -> vector<8x128xf32>
    %c0_74 = arith.constant 0 : index
    %c0_75 = arith.constant 0 : index
    %121 = vector.load %arg13[%c0_74, %c0_75] : memref<1x128xf32, #tpu.memory_space<vmem>>, vector<1x128xf32>
    %122 = vector.broadcast %121 : vector<1x128xf32> to vector<8x128xf32>
    %123 = arith.addf %120, %122 : vector<8x128xf32>
    %124 = vector.shape_cast %123 : vector<8x128xf32> to vector<1x8x128xf32>
    %c0_76 = arith.constant 0 : index
    %c0_77 = arith.constant 0 : index
    %c0_78 = arith.constant 0 : index
    %125 = vector.load %arg14[%c0_76, %c0_77, %c0_78] : memref<1x8x128xf32, #tpu.memory_space<vmem>>, vector<1x8x128xf32>
    tpu.vector_store %arg14[%c0_76, %c0_77, %c0_78], %124 {strides = array<i32>} : memref<1x8x128xf32, #tpu.memory_space<vmem>>, vector<1x8x128xf32>,
    return
  }
  func.func @transform_0(%arg0: i32) -> (i32, i32, i32, i32) {
    %c0_i32 = arith.constant 0 : i32
    %c0_i32_0 = arith.constant 0 : i32
    %c0_i32_1 = arith.constant 0 : i32
    %c0_i32_2 = arith.constant 0 : i32
    return %arg0, %c0_i32, %c0_i32_0, %c0_i32_1 : i32, i32, i32, i32
  }
  func.func @transform_1(%arg0: i32) -> (i32, i32) {
    %c0_i32 = arith.constant 0 : i32
    %c0_i32_0 = arith.constant 0 : i32
    %c0_i32_1 = arith.constant 0 : i32
    return %c0_i32, %c0_i32_0 : i32, i32
  }
  func.func @transform_2(%arg0: i32) -> (i32, i32) {
    %c0_i32 = arith.constant 0 : i32
    %c0_i32_0 = arith.constant 0 : i32
    %c0_i32_1 = arith.constant 0 : i32
    return %c0_i32, %c0_i32_0 : i32, i32
  }
  func.func @transform_3(%arg0: i32) -> (i32, i32, i32) {
    %c0_i32 = arith.constant 0 : i32
    %c0_i32_0 = arith.constant 0 : i32
    %c0_i32_1 = arith.constant 0 : i32
    %c0_i32_2 = arith.constant 0 : i32
    return %c0_i32, %c0_i32_0, %c0_i32_1 : i32, i32, i32
  }
  func.func @transform_4(%arg0: i32) -> (i32, i32) {
    %c0_i32 = arith.constant 0 : i32
    %c0_i32_0 = arith.constant 0 : i32
    %c0_i32_1 = arith.constant 0 : i32
    return %c0_i32, %c0_i32_0 : i32, i32
  }
  func.func @transform_5(%arg0: i32) -> (i32, i32, i32) {
    %c0_i32 = arith.constant 0 : i32
    %c0_i32_0 = arith.constant 0 : i32
    %c0_i32_1 = arith.constant 0 : i32
    %c0_i32_2 = arith.constant 0 : i32
    return %c0_i32, %c0_i32_0, %c0_i32_1 : i32, i32, i32
  }
  func.func @transform_6(%arg0: i32) -> (i32, i32) {
    %c0_i32 = arith.constant 0 : i32
    %c0_i32_0 = arith.constant 0 : i32
    %c0_i32_1 = arith.constant 0 : i32
    return %c0_i32, %c0_i32_0 : i32, i32
  }
  func.func @transform_7(%arg0: i32) -> (i32, i32) {
    %c0_i32 = arith.constant 0 : i32
    %c0_i32_0 = arith.constant 0 : i32
    %c0_i32_1 = arith.constant 0 : i32
    return %c0_i32, %c0_i32_0 : i32, i32
  }
  func.func @transform_8(%arg0: i32) -> (i32, i32) {
    %c0_i32 = arith.constant 0 : i32
    %c0_i32_0 = arith.constant 0 : i32
    %c0_i32_1 = arith.constant 0 : i32
    return %c0_i32, %c0_i32_0 : i32, i32
  }
  func.func @transform_9(%arg0: i32) -> (i32, i32) {
    %c0_i32 = arith.constant 0 : i32
    %c0_i32_0 = arith.constant 0 : i32
    %c0_i32_1 = arith.constant 0 : i32
    return %c0_i32, %c0_i32_0 : i32, i32
  }
  func.func @transform_10(%arg0: i32) -> (i32, i32) {
    %c0_i32 = arith.constant 0 : i32
    %c0_i32_0 = arith.constant 0 : i32
    %c0_i32_1 = arith.constant 0 : i32
    return %c0_i32, %c0_i32_0 : i32, i32
  }
  func.func @transform_11(%arg0: i32) -> (i32, i32) {
    %c0_i32 = arith.constant 0 : i32
    %c0_i32_0 = arith.constant 0 : i32
    %c0_i32_1 = arith.constant 0 : i32
    return %c0_i32, %c0_i32_0 : i32, i32
  }
  func.func @transform_12(%arg0: i32) -> (i32, i32) {
    %c0_i32 = arith.constant 0 : i32
    %c0_i32_0 = arith.constant 0 : i32
    %c0_i32_1 = arith.constant 0 : i32
    return %c0_i32, %c0_i32_0 : i32, i32
  }
  func.func @transform_13(%arg0: i32) -> (i32, i32, i32) {
    %c0_i32 = arith.constant 0 : i32
    %c0_i32_0 = arith.constant 0 : i32
    %c0_i32_1 = arith.constant 0 : i32
    return %arg0, %c0_i32, %c0_i32_0 : i32, i32, i32
  }
}

</mosaic_0001>

<llo_original>
// kernel: mynet_forward.1
$region0: #{mynet_forward.1}
  #allocation0 [shape = 'u32[]', space=smem, size = 0x4, offset = 0x4, fixed_abs, tag = 'smem constant byte address 0x4 - core index']
  #allocation1 [shape = 'u32[144,128]{1,0:T(1,128)}', space=vmem, size = 0x12000, scoped, tag = 'internal scratch']
  #allocation2 [shape = 'f32[18,36,128]{2,1,0:T(8,128)}', space=vmem, size = 0x5a000, scoped, tag = 'scratch operand']
  #allocation3 [shape = 'f32[8,16,128]{2,1,0:T(8,128)}', space=vmem, size = 0x10000, scoped, tag = 'scratch operand']
  #allocation4 [shape = 'f32[3,6,128]{2,1,0:T(8,128)}', space=vmem, size = 0x3000, scoped, tag = 'scratch operand']
  %s0 = inlined_call_operand.vmem [shape: f32[2,36,36,128], index: 0, kind: input, shape index: {}]
  %s1 = inlined_call_operand.vmem [shape: f32[128,128], index: 1, kind: input, shape index: {}]
  %s2 = inlined_call_operand.vmem [shape: f32[1,128], index: 2, kind: input, shape index: {}]
  %s3 = inlined_call_operand.vmem [shape: f32[3,48,128], index: 3, kind: input, shape index: {}]
  %s4 = inlined_call_operand.vmem [shape: f32[1,128], index: 4, kind: input, shape index: {}]
  %s5 = inlined_call_operand.vmem [shape: f32[3,144,128], index: 5, kind: input, shape index: {}]
  %s6 = inlined_call_operand.vmem [shape: f32[1,128], index: 6, kind: input, shape index: {}]
  %s7 = inlined_call_operand.vmem [shape: f32[256,128], index: 7, kind: input, shape index: {}]
  %s8 = inlined_call_operand.vmem [shape: f32[1,128], index: 8, kind: input, shape index: {}]
  %s9 = inlined_call_operand.vmem [shape: f32[512,128], index: 9, kind: input, shape index: {}]
  %s10 = inlined_call_operand.vmem [shape: f32[1,128], index: 10, kind: input, shape index: {}]
  %s11 = inlined_call_operand.vmem [shape: f32[128,128], index: 11, kind: input, shape index: {}]
  %s12 = inlined_call_operand.vmem [shape: f32[1,128], index: 12, kind: input, shape index: {}]
  %s13 = inlined_call_operand.vmem [shape: f32[2,8,128], index: 13, kind: output, shape index: {}]
  %s14 = sld [smem:[#allocation0]]
  $region85: #{mynet_forward.1} parent=0
    _
  %s16 = ssub.s32 1, %s14
  %s17 = scalar_select 0, %s16, %s14
  loop: start=0, step=1, limit=4
  $region2: #{mynet_forward.1} parent=0 // loop_pre_header
    _
  $region3: #{mynet_forward.1} parent=0 // loop_header
    %s19 = sphi 0, %s23
    %p20 = scmp.ge.s32.totalorder %s19, 4
    %s29 = sphi 0, %s31
    %s32 = sphi 0, %s29
    %s33 = sphi 0, %s32
    %s49 = sphi 0, %s33
    %s53 = sphi 0, %s53
    %s55 = sphi 0, %s53
    %s56 = sphi 0, %s55
    %s70 = sphi 0, %s56
    %s74 = sphi 0, %s74
    %s76 = sphi 0, %s74
    %s77 = sphi 0, %s76
    %s91 = sphi 0, %s77
    %s95 = sphi 0, %s95
    %s97 = sphi 0, %s95
    %s98 = sphi 0, %s97
    %s112 = sphi 0, %s98
    %s116 = sphi 0, %s116
    %s118 = sphi 0, %s116
    %s119 = sphi 0, %s118
    %s133 = sphi 0, %s119
    %s137 = sphi 0, %s137
    %s139 = sphi 0, %s137
    %s140 = sphi 0, %s139
    %s154 = sphi 0, %s140
    %s158 = sphi 0, %s158
    %s160 = sphi 0, %s158
    %s161 = sphi 0, %s160
    %s175 = sphi 0, %s161
    %s179 = sphi 0, %s179
    %s181 = sphi 0, %s179
    %s182 = sphi 0, %s181
    %s196 = sphi 0, %s182
    %s200 = sphi 0, %s200
    %s202 = sphi 0, %s200
    %s203 = sphi 0, %s202
    %s217 = sphi 0, %s203
    %s221 = sphi 0, %s221
    %s223 = sphi 0, %s221
    %s224 = sphi 0, %s223
    %s238 = sphi 0, %s224
    %s242 = sphi 0, %s242
    %s244 = sphi 0, %s242
    %s245 = sphi 0, %s244
    %s259 = sphi 0, %s245
    %s263 = sphi 0, %s263
    %s265 = sphi 0, %s263
    %s266 = sphi 0, %s265
    %s280 = sphi 0, %s266
    %s284 = sphi 0, %s284
    %s286 = sphi 0, %s284
    %s287 = sphi 0, %s286
    %s301 = sphi 0, %s287
    %s307 = sphi 0, %s309
    %s310 = sphi 0, %s307
    %s311 = sphi 0, %s310
    %s327 = sphi 0, %s311
  $region4: #{mynet_forward.1} parent=0 // loop_header_branch
    %22 = sbr.rel (%p20) target = $region8
  $region5: #{mynet_forward.1} parent=0 // loop_body
    %s24 = ssub.s32 %s19, 1
    %s25 = ssub.s32 %s19, 2
    %s26 = sadd.s32 %s19, 1
    %s27 = ssub.s32 %s19, %s26
    %p28 = scmp.eq.s32.totalorder %s27, 0
    %s30 = sadd.s32 %s29, 1
    %s31 = scalar_select %p28, %s29, %s30
    %p34 = pneg %p28
    %p35 = scmp.eq.s32.totalorder %s19, 1
    %p36 = por %p34, %p35
    %p37 = scmp.ne.s32.totalorder %s29, %s32
    %p38 = scmp.eq.s32.totalorder %s19, 0
    %p39 = por %p37, %p38
    %p40 = scmp.ne.s32.totalorder %s29, %s32
    %p41 = scmp.eq.s32.totalorder %s24, 1
    %p42 = por %p40, %p41
    %p43 = scmp.ne.s32.totalorder %s32, %s33
    %p44 = scmp.eq.s32.totalorder %s24, 0
    %p45 = por %p43, %p44
    %p46 = scmp.ne.s32.totalorder %s32, %s33
    %p47 = scmp.eq.s32.totalorder %s25, 1
    %p48 = por %p46, %p47
    %p50 = scmp.ne.s32.totalorder %s33, %s49
    %p51 = scmp.eq.s32.totalorder %s25, 0
    %p52 = por %p50, %p51
    %s54 = sadd.s32 %s53, 1
    %p57 = scmp.eq.s32.totalorder %s19, 1
    %p58 = scmp.ne.s32.totalorder %s53, %s55
    %p59 = scmp.eq.s32.totalorder %s19, 0
    %p60 = por %p58, %p59
    %p61 = scmp.ne.s32.totalorder %s53, %s55
    %p62 = scmp.eq.s32.totalorder %s24, 1
    %p63 = por %p61, %p62
    %p64 = scmp.ne.s32.totalorder %s55, %s56
    %p65 = scmp.eq.s32.totalorder %s24, 0
    %p66 = por %p64, %p65
    %p67 = scmp.ne.s32.totalorder %s55, %s56
    %p68 = scmp.eq.s32.totalorder %s25, 1
    %p69 = por %p67, %p68
    %p71 = scmp.ne.s32.totalorder %s56, %s70
    %p72 = scmp.eq.s32.totalorder %s25, 0
    %p73 = por %p71, %p72
    %s75 = sadd.s32 %s74, 1
    %p78 = scmp.eq.s32.totalorder %s19, 1
    %p79 = scmp.ne.s32.totalorder %s74, %s76
    %p80 = scmp.eq.s32.totalorder %s19, 0
    %p81 = por %p79, %p80
    %p82 = scmp.ne.s32.totalorder %s74, %s76
    %p83 = scmp.eq.s32.totalorder %s24, 1
    %p84 = por %p82, %p83
    %p85 = scmp.ne.s32.totalorder %s76, %s77
    %p86 = scmp.eq.s32.totalorder %s24, 0
    %p87 = por %p85, %p86
    %p88 = scmp.ne.s32.totalorder %s76, %s77
    %p89 = scmp.eq.s32.totalorder %s25, 1
    %p90 = por %p88, %p89
    %p92 = scmp.ne.s32.totalorder %s77, %s91
    %p93 = scmp.eq.s32.totalorder %s25, 0
    %p94 = por %p92, %p93
    %s96 = sadd.s32 %s95, 1
    %p99 = scmp.eq.s32.totalorder %s19, 1
    %p100 = scmp.ne.s32.totalorder %s95, %s97
    %p101 = scmp.eq.s32.totalorder %s19, 0
    %p102 = por %p100, %p101
    %p103 = scmp.ne.s32.totalorder %s95, %s97
    %p104 = scmp.eq.s32.totalorder %s24, 1
    %p105 = por %p103, %p104
    %p106 = scmp.ne.s32.totalorder %s97, %s98
    %p107 = scmp.eq.s32.totalorder %s24, 0
    %p108 = por %p106, %p107
    %p109 = scmp.ne.s32.totalorder %s97, %s98
    %p110 = scmp.eq.s32.totalorder %s25, 1
    %p111 = por %p109, %p110
    %p113 = scmp.ne.s32.totalorder %s98, %s112
    %p114 = scmp.eq.s32.totalorder %s25, 0
    %p115 = por %p113, %p114
    %s117 = sadd.s32 %s116, 1
    %p120 = scmp.eq.s32.totalorder %s19, 1
    %p121 = scmp.ne.s32.totalorder %s116, %s118
    %p122 = scmp.eq.s32.totalorder %s19, 0
    %p123 = por %p121, %p122
    %p124 = scmp.ne.s32.totalorder %s116, %s118
    %p125 = scmp.eq.s32.totalorder %s24, 1
    %p126 = por %p124, %p125
    %p127 = scmp.ne.s32.totalorder %s118, %s119
    %p128 = scmp.eq.s32.totalorder %s24, 0
    %p129 = por %p127, %p128
    %p130 = scmp.ne.s32.totalorder %s118, %s119
    %p131 = scmp.eq.s32.totalorder %s25, 1
    %p132 = por %p130, %p131
    %p134 = scmp.ne.s32.totalorder %s119, %s133
    %p135 = scmp.eq.s32.totalorder %s25, 0
    %p136 = por %p134, %p135
    %s138 = sadd.s32 %s137, 1
    %p141 = scmp.eq.s32.totalorder %s19, 1
    %p142 = scmp.ne.s32.totalorder %s137, %s139
    %p143 = scmp.eq.s32.totalorder %s19, 0
    %p144 = por %p142, %p143
    %p145 = scmp.ne.s32.totalorder %s137, %s139
    %p146 = scmp.eq.s32.totalorder %s24, 1
    %p147 = por %p145, %p146
    %p148 = scmp.ne.s32.totalorder %s139, %s140
    %p149 = scmp.eq.s32.totalorder %s24, 0
    %p150 = por %p148, %p149
    %p151 = scmp.ne.s32.totalorder %s139, %s140
    %p152 = scmp.eq.s32.totalorder %s25, 1
    %p153 = por %p151, %p152
    %p155 = scmp.ne.s32.totalorder %s140, %s154
    %p156 = scmp.eq.s32.totalorder %s25, 0
    %p157 = por %p155, %p156
    %s159 = sadd.s32 %s158, 1
    %p162 = scmp.eq.s32.totalorder %s19, 1
    %p163 = scmp.ne.s32.totalorder %s158, %s160
    %p164 = scmp.eq.s32.totalorder %s19, 0
    %p165 = por %p163, %p164
    %p166 = scmp.ne.s32.totalorder %s158, %s160
    %p167 = scmp.eq.s32.totalorder %s24, 1
    %p168 = por %p166, %p167
    %p169 = scmp.ne.s32.totalorder %s160, %s161
    %p170 = scmp.eq.s32.totalorder %s24, 0
    %p171 = por %p169, %p170
    %p172 = scmp.ne.s32.totalorder %s160, %s161
    %p173 = scmp.eq.s32.totalorder %s25, 1
    %p174 = por %p172, %p173
    %p176 = scmp.ne.s32.totalorder %s161, %s175
    %p177 = scmp.eq.s32.totalorder %s25, 0
    %p178 = por %p176, %p177
    %s180 = sadd.s32 %s179, 1
    %p183 = scmp.eq.s32.totalorder %s19, 1
    %p184 = scmp.ne.s32.totalorder %s179, %s181
    %p185 = scmp.eq.s32.totalorder %s19, 0
    %p186 = por %p184, %p185
    %p187 = scmp.ne.s32.totalorder %s179, %s181
    %p188 = scmp.eq.s32.totalorder %s24, 1
    %p189 = por %p187, %p188
    %p190 = scmp.ne.s32.totalorder %s181, %s182
    %p191 = scmp.eq.s32.totalorder %s24, 0
    %p192 = por %p190, %p191
    %p193 = scmp.ne.s32.totalorder %s181, %s182
    %p194 = scmp.eq.s32.totalorder %s25, 1
    %p195 = por %p193, %p194
    %p197 = scmp.ne.s32.totalorder %s182, %s196
    %p198 = scmp.eq.s32.totalorder %s25, 0
    %p199 = por %p197, %p198
    %s201 = sadd.s32 %s200, 1
    %p204 = scmp.eq.s32.totalorder %s19, 1
    %p205 = scmp.ne.s32.totalorder %s200, %s202
    %p206 = scmp.eq.s32.totalorder %s19, 0
    %p207 = por %p205, %p206
    %p208 = scmp.ne.s32.totalorder %s200, %s202
    %p209 = scmp.eq.s32.totalorder %s24, 1
    %p210 = por %p208, %p209
    %p211 = scmp.ne.s32.totalorder %s202, %s203
    %p212 = scmp.eq.s32.totalorder %s24, 0
    %p213 = por %p211, %p212
    %p214 = scmp.ne.s32.totalorder %s202, %s203
    %p215 = scmp.eq.s32.totalorder %s25, 1
    %p216 = por %p214, %p215
    %p218 = scmp.ne.s32.totalorder %s203, %s217
    %p219 = scmp.eq.s32.totalorder %s25, 0
    %p220 = por %p218, %p219
    %s222 = sadd.s32 %s221, 1
    %p225 = scmp.eq.s32.totalorder %s19, 1
    %p226 = scmp.ne.s32.totalorder %s221, %s223
    %p227 = scmp.eq.s32.totalorder %s19, 0
    %p228 = por %p226, %p227
    %p229 = scmp.ne.s32.totalorder %s221, %s223
    %p230 = scmp.eq.s32.totalorder %s24, 1
    %p231 = por %p229, %p230
    %p232 = scmp.ne.s32.totalorder %s223, %s224
    %p233 = scmp.eq.s32.totalorder %s24, 0
    %p234 = por %p232, %p233
    %p235 = scmp.ne.s32.totalorder %s223, %s224
    %p236 = scmp.eq.s32.totalorder %s25, 1
    %p237 = por %p235, %p236
    %p239 = scmp.ne.s32.totalorder %s224, %s238
    %p240 = scmp.eq.s32.totalorder %s25, 0
    %p241 = por %p239, %p240
    %s243 = sadd.s32 %s242, 1
    %p246 = scmp.eq.s32.totalorder %s19, 1
    %p247 = scmp.ne.s32.totalorder %s242, %s244
    %p248 = scmp.eq.s32.totalorder %s19, 0
    %p249 = por %p247, %p248
    %p250 = scmp.ne.s32.totalorder %s242, %s244
    %p251 = scmp.eq.s32.totalorder %s24, 1
    %p252 = por %p250, %p251
    %p253 = scmp.ne.s32.totalorder %s244, %s245
    %p254 = scmp.eq.s32.totalorder %s24, 0
    %p255 = por %p253, %p254
    %p256 = scmp.ne.s32.totalorder %s244, %s245
    %p257 = scmp.eq.s32.totalorder %s25, 1
    %p258 = por %p256, %p257
    %p260 = scmp.ne.s32.totalorder %s245, %s259
    %p261 = scmp.eq.s32.totalorder %s25, 0
    %p262 = por %p260, %p261
    %s264 = sadd.s32 %s263, 1
    %p267 = scmp.eq.s32.totalorder %s19, 1
    %p268 = scmp.ne.s32.totalorder %s263, %s265
    %p269 = scmp.eq.s32.totalorder %s19, 0
    %p270 = por %p268, %p269
    %p271 = scmp.ne.s32.totalorder %s263, %s265
    %p272 = scmp.eq.s32.totalorder %s24, 1
    %p273 = por %p271, %p272
    %p274 = scmp.ne.s32.totalorder %s265, %s266
    %p275 = scmp.eq.s32.totalorder %s24, 0
    %p276 = por %p274, %p275
    %p277 = scmp.ne.s32.totalorder %s265, %s266
    %p278 = scmp.eq.s32.totalorder %s25, 1
    %p279 = por %p277, %p278
    %p281 = scmp.ne.s32.totalorder %s266, %s280
    %p282 = scmp.eq.s32.totalorder %s25, 0
    %p283 = por %p281, %p282
    %s285 = sadd.s32 %s284, 1
    %p288 = scmp.eq.s32.totalorder %s19, 1
    %p289 = scmp.ne.s32.totalorder %s284, %s286
    %p290 = scmp.eq.s32.totalorder %s19, 0
    %p291 = por %p289, %p290
    %p292 = scmp.ne.s32.totalorder %s284, %s286
    %p293 = scmp.eq.s32.totalorder %s24, 1
    %p294 = por %p292, %p293
    %p295 = scmp.ne.s32.totalorder %s286, %s287
    %p296 = scmp.eq.s32.totalorder %s24, 0
    %p297 = por %p295, %p296
    %p298 = scmp.ne.s32.totalorder %s286, %s287
    %p299 = scmp.eq.s32.totalorder %s25, 1
    %p300 = por %p298, %p299
    %p302 = scmp.ne.s32.totalorder %s287, %s301
    %p303 = scmp.eq.s32.totalorder %s25, 0
    %p304 = por %p302, %p303
    %s305 = ssub.s32 %s19, %s26
    %p306 = scmp.eq.s32.totalorder %s305, 0
    %s308 = sadd.s32 %s307, 1
    %s309 = scalar_select %p306, %s307, %s308
    %p312 = pneg %p306
    %p313 = scmp.eq.s32.totalorder %s19, 1
    %p314 = por %p312, %p313
    %p315 = scmp.ne.s32.totalorder %s307, %s310
    %p316 = scmp.eq.s32.totalorder %s19, 0
    %p317 = por %p315, %p316
    %p318 = scmp.ne.s32.totalorder %s307, %s310
    %p319 = scmp.eq.s32.totalorder %s24, 1
    %p320 = por %p318, %p319
    %p321 = scmp.ne.s32.totalorder %s310, %s311
    %p322 = scmp.eq.s32.totalorder %s24, 0
    %p323 = por %p321, %p322
    %p324 = scmp.ne.s32.totalorder %s310, %s311
    %p325 = scmp.eq.s32.totalorder %s25, 1
    %p326 = por %p324, %p325
    %p328 = scmp.ne.s32.totalorder %s311, %s327
    %p329 = scmp.eq.s32.totalorder %s25, 0
    %p330 = por %p328, %p329
    %p331 = scmp.le.s32.totalorder 1, %s19
    %p332 = scmp.lt.s32.totalorder %s19, 3
    %p333 = pnand %p331, %p332
    %p334 = pneg %p333
    // Predicated region
    $region9: #{mynet_forward.1} parent=5 // pred_check
      _
    $region10: #{mynet_forward.1} parent=5 // pred_check_branch
      %336 = sbr.rel (%p333) target = $region12
    $region11: #{mynet_forward.1} parent=5 // pred_region
      %s337 = ssub.s32 %s19, 1
      // Predicated region
      $region13: #{mynet_forward.1} parent=11 // pred_check
        %p338 = pneg %p66
      $region14: #{mynet_forward.1} parent=11 // pred_check_branch
        %340 = sbr.rel (%p338) target = $region16
      $region15: #{mynet_forward.1} parent=11 // pred_region
        _
      $region16: #{mynet_forward.1} parent=11 // pred_fallthru
        _
      // Predicated region
      $region17: #{mynet_forward.1} parent=11 // pred_check
        %p341 = pneg %p87
      $region18: #{mynet_forward.1} parent=11 // pred_check_branch
        %343 = sbr.rel (%p341) target = $region20
      $region19: #{mynet_forward.1} parent=11 // pred_region
        _
      $region20: #{mynet_forward.1} parent=11 // pred_fallthru
        _
      // Predicated region
      $region21: #{mynet_forward.1} parent=11 // pred_check
        %p344 = pneg %p108
      $region22: #{mynet_forward.1} parent=11 // pred_check_branch
        %346 = sbr.rel (%p344) target = $region24
      $region23: #{mynet_forward.1} parent=11 // pred_region
        _
      $region24: #{mynet_forward.1} parent=11 // pred_fallthru
        _
      // Predicated region
      $region25: #{mynet_forward.1} parent=11 // pred_check
        %p347 = pneg %p129
      $region26: #{mynet_forward.1} parent=11 // pred_check_branch
        %349 = sbr.rel (%p347) target = $region28
      $region27: #{mynet_forward.1} parent=11 // pred_region
        _
      $region28: #{mynet_forward.1} parent=11 // pred_fallthru
        _
      // Predicated region
      $region29: #{mynet_forward.1} parent=11 // pred_check
        %p350 = pneg %p150
      $region30: #{mynet_forward.1} parent=11 // pred_check_branch
        %352 = sbr.rel (%p350) target = $region32
      $region31: #{mynet_forward.1} parent=11 // pred_region
        _
      $region32: #{mynet_forward.1} parent=11 // pred_fallthru
        _
      // Predicated region
      $region33: #{mynet_forward.1} parent=11 // pred_check
        %p353 = pneg %p171
      $region34: #{mynet_forward.1} parent=11 // pred_check_branch
        %355 = sbr.rel (%p353) target = $region36
      $region35: #{mynet_forward.1} parent=11 // pred_region
        _
      $region36: #{mynet_forward.1} parent=11 // pred_fallthru
        _
      // Predicated region
      $region37: #{mynet_forward.1} parent=11 // pred_check
        %p356 = pneg %p192
      $region38: #{mynet_forward.1} parent=11 // pred_check_branch
        %358 = sbr.rel (%p356) target = $region40
      $region39: #{mynet_forward.1} parent=11 // pred_region
        _
      $region40: #{mynet_forward.1} parent=11 // pred_fallthru
        _
      // Predicated region
      $region41: #{mynet_forward.1} parent=11 // pred_check
        %p359 = pneg %p213
      $region42: #{mynet_forward.1} parent=11 // pred_check_branch
        %361 = sbr.rel (%p359) target = $region44
      $region43: #{mynet_forward.1} parent=11 // pred_region
        _
      $region44: #{mynet_forward.1} parent=11 // pred_fallthru
        _
      // Predicated region
      $region45: #{mynet_forward.1} parent=11 // pred_check
        %p362 = pneg %p234
      $region46: #{mynet_forward.1} parent=11 // pred_check_branch
        %364 = sbr.rel (%p362) target = $region48
      $region47: #{mynet_forward.1} parent=11 // pred_region
        _
      $region48: #{mynet_forward.1} parent=11 // pred_fallthru
        _
      // Predicated region
      $region49: #{mynet_forward.1} parent=11 // pred_check
        %p365 = pneg %p255
      $region50: #{mynet_forward.1} parent=11 // pred_check_branch
        %367 = sbr.rel (%p365) target = $region52
      $region51: #{mynet_forward.1} parent=11 // pred_region
        _
      $region52: #{mynet_forward.1} parent=11 // pred_fallthru
        _
      // Predicated region
      $region53: #{mynet_forward.1} parent=11 // pred_check
        %p368 = pneg %p276
      $region54: #{mynet_forward.1} parent=11 // pred_check_branch
        %370 = sbr.rel (%p368) target = $region56
      $region55: #{mynet_forward.1} parent=11 // pred_region
        _
      $region56: #{mynet_forward.1} parent=11 // pred_fallthru
        _
      // Predicated region
      $region57: #{mynet_forward.1} parent=11 // pred_check
        %p371 = pneg %p297
      $region58: #{mynet_forward.1} parent=11 // pred_check_branch
        %373 = sbr.rel (%p371) target = $region60
      $region59: #{mynet_forward.1} parent=11 // pred_region
        _
      $region60: #{mynet_forward.1} parent=11 // pred_fallthru
        _
    $region12: #{mynet_forward.1} parent=5 // pred_fallthru
      _
    %p374 = scmp.lt.s32.totalorder %s19, 2
    // Predicated region
    $region61: #{mynet_forward.1} parent=5 // pred_check
      %p375 = pneg %p374
    $region62: #{mynet_forward.1} parent=5 // pred_check_branch
      %377 = sbr.rel (%p375) target = $region64
    $region63: #{mynet_forward.1} parent=5 // pred_region
      // Predicated region
      $region65: #{mynet_forward.1} parent=63 // pred_check
        %p378 = pneg %p39
      $region66: #{mynet_forward.1} parent=63 // pred_check_branch
        %380 = sbr.rel (%p378) target = $region68
      $region67: #{mynet_forward.1} parent=63 // pred_region
        %p381 = scmp.lt.s32.totalorder %s19, 1
        %s382 = scalar_select %p381, %s19, 1
        %s383 = smul.addr %s382, 180
        %s384 = smul.addr %s383, 8
        %s385 = scalar_lea.vmem %s0, %s384
      $region68: #{mynet_forward.1} parent=63 // pred_fallthru
        _
    $region64: #{mynet_forward.1} parent=5 // pred_fallthru
      _
    %p386 = scmp.le.s32.totalorder 1, %s19
    %p387 = scmp.lt.s32.totalorder %s19, 3
    %p388 = pnand %p386, %p387
    %p389 = pneg %p388
    // Predicated region
    $region69: #{mynet_forward.1} parent=5 // pred_check
      _
    $region70: #{mynet_forward.1} parent=5 // pred_check_branch
      %391 = sbr.rel (%p388) target = $region72
    $region71: #{mynet_forward.1} parent=5 // pred_region
      %s392 = ssub.s32 %s19, 1
      %p393 = scmp.lt.s32.totalorder %s24, 1
      %s394 = scalar_select %p393, %s24, 1
      %s395 = smul.addr %s394, 180
      %s396 = smul.addr %s395, 8
      %s397 = scalar_lea.vmem %s0, %s396
      %p398 = pneg %p45
      %p399 = pneg %p42
      %p400 = pneg %p66
      %p401 = pneg %p63
      %p402 = pneg %p87
      %p403 = pneg %p84
      %p404 = pneg %p108
      %p405 = pneg %p105
      %p406 = pneg %p129
      %p407 = pneg %p126
      %p408 = pneg %p150
      %p409 = pneg %p147
      %p410 = pneg %p171
      %p411 = pneg %p168
      %p412 = pneg %p192
      %p413 = pneg %p189
      %p414 = pneg %p213
      %p415 = pneg %p210
      %p416 = pneg %p234
      %p417 = pneg %p231
      %p418 = pneg %p255
      %p419 = pneg %p252
      %p420 = pneg %p276
      %p421 = pneg %p273
      %p422 = pneg %p297
      %p423 = pneg %p294
      %p424 = pneg %p323
      %p425 = pneg %p320
      %p426 = scmp.lt.s32.totalorder %s24, 1
      %s427 = scalar_select %p426, %s24, 1
      %s428 = smul.addr %s427, 8
      %s429 = scalar_lea.vmem %s13, %s428
      %p430 = scmp.lt.s32.totalorder %s24, 1
      %s431 = scalar_select %p430, %s24, 1
      %s432 = smul.addr %s431, 180
      %s433 = smul.addr %s432, 8
      %s434 = scalar_lea.vmem %s0, %s433
      %p435 = scmp.lt.s32.totalorder %s24, 1
      %s436 = scalar_select %p435, %s24, 1
      %s437 = smul.addr %s436, 8
      %s438 = scalar_lea.vmem %s13, %s437
      %v439 = vld [vmem:[%s434] sm:$0xff]
      %v440 = vld [vmem:[%s434 + $0x8] sm:$0xff]
      %v441 = vld [vmem:[%s434 + $0x10] sm:$0xff]
      %v442 = vld [vmem:[%s434 + $0x18] sm:$0xff]
      %v443 = vld [vmem:[%s434 + $0x20] sm:$0xf]
      %v444 = vld [vmem:[%s434 + $0x28] sm:$0xff]
      %v445 = vld [vmem:[%s434 + $0x30] sm:$0xff]
      %v446 = vld [vmem:[%s434 + $0x38] sm:$0xff]
      %v447 = vld [vmem:[%s434 + $0x40] sm:$0xff]
      %v448 = vld [vmem:[%s434 + $0x48] sm:$0xf]
      %v449 = vld [vmem:[%s434 + $0x50] sm:$0xff]
      %v450 = vld [vmem:[%s434 + $0x58] sm:$0xff]
      %v451 = vld [vmem:[%s434 + $0x60] sm:$0xff]
      %v452 = vld [vmem:[%s434 + $0x68] sm:$0xff]
      %v453 = vld [vmem:[%s434 + $0x70] sm:$0xf]
      %v454 = vld [vmem:[%s434 + $0x78] sm:$0xff]
      %v455 = vld [vmem:[%s434 + $0x80] sm:$0xff]
      %v456 = vld [vmem:[%s434 + $0x88] sm:$0xff]
      %v457 = vld [vmem:[%s434 + $0x90] sm:$0xff]
      %v458 = vld [vmem:[%s434 + $0x98] sm:$0xf]
      %v459 = vld [vmem:[%s434 + $0xa0] sm:$0xff]
      %v460 = vld [vmem:[%s434 + $0xa8] sm:$0xff]
      %v461 = vld [vmem:[%s434 + $0xb0] sm:$0xff]
      %v462 = vld [vmem:[%s434 + $0xb8] sm:$0xff]
      %v463 = vld [vmem:[%s434 + $0xc0] sm:$0xf]
      %v464 = vld [vmem:[%s434 + $0xc8] sm:$0xff]
      %v465 = vld [vmem:[%s434 + $0xd0] sm:$0xff]
      %v466 = vld [vmem:[%s434 + $0xd8] sm:$0xff]
      %v467 = vld [vmem:[%s434 + $0xe0] sm:$0xff]
      %v468 = vld [vmem:[%s434 + $0xe8] sm:$0xf]
      %v469 = vld [vmem:[%s434 + $0xf0] sm:$0xff]
      %v470 = vld [vmem:[%s434 + $0xf8] sm:$0xff]
      %v471 = vld [vmem:[%s434 + $0x100] sm:$0xff]
      %v472 = vld [vmem:[%s434 + $0x108] sm:$0xff]
      %v473 = vld [vmem:[%s434 + $0x110] sm:$0xf]
      %v474 = vld [vmem:[%s434 + $0x118] sm:$0xff]
      %v475 = vld [vmem:[%s434 + $0x120] sm:$0xff]
      %v476 = vld [vmem:[%s434 + $0x128] sm:$0xff]
      %v477 = vld [vmem:[%s434 + $0x130] sm:$0xff]
      %v478 = vld [vmem:[%s434 + $0x138] sm:$0xf]
      %v479 = vld [vmem:[%s434 + $0x140] sm:$0xff]
      %v480 = vld [vmem:[%s434 + $0x148] sm:$0xff]
      %v481 = vld [vmem:[%s434 + $0x150] sm:$0xff]
      %v482 = vld [vmem:[%s434 + $0x158] sm:$0xff]
      %v483 = vld [vmem:[%s434 + $0x160] sm:$0xf]
      %v484 = vld [vmem:[%s434 + $0x168] sm:$0xff]
      %v485 = vld [vmem:[%s434 + $0x170] sm:$0xff]
      %v486 = vld [vmem:[%s434 + $0x178] sm:$0xff]
      %v487 = vld [vmem:[%s434 + $0x180] sm:$0xff]
      %v488 = vld [vmem:[%s434 + $0x188] sm:$0xf]
      %v489 = vld [vmem:[%s434 + $0x190] sm:$0xff]
      %v490 = vld [vmem:[%s434 + $0x198] sm:$0xff]
      %v491 = vld [vmem:[%s434 + $0x1a0] sm:$0xff]
      %v492 = vld [vmem:[%s434 + $0x1a8] sm:$0xff]
      %v493 = vld [vmem:[%s434 + $0x1b0] sm:$0xf]
      %v494 = vld [vmem:[%s434 + $0x1b8] sm:$0xff]
      %v495 = vld [vmem:[%s434 + $0x1c0] sm:$0xff]
      %v496 = vld [vmem:[%s434 + $0x1c8] sm:$0xff]
      %v497 = vld [vmem:[%s434 + $0x1d0] sm:$0xff]
      %v498 = vld [vmem:[%s434 + $0x1d8] sm:$0xf]
      %v499 = vld [vmem:[%s434 + $0x1e0] sm:$0xff]
      %v500 = vld [vmem:[%s434 + $0x1e8] sm:$0xff]
      %v501 = vld [vmem:[%s434 + $0x1f0] sm:$0xff]
      %v502 = vld [vmem:[%s434 + $0x1f8] sm:$0xff]
      %v503 = vld [vmem:[%s434 + $0x200] sm:$0xf]
      %v504 = vld [vmem:[%s434 + $0x208] sm:$0xff]
      %v505 = vld [vmem:[%s434 + $0x210] sm:$0xff]
      %v506 = vld [vmem:[%s434 + $0x218] sm:$0xff]
      %v507 = vld [vmem:[%s434 + $0x220] sm:$0xff]
      %v508 = vld [vmem:[%s434 + $0x228] sm:$0xf]
      %v509 = vld [vmem:[%s434 + $0x230] sm:$0xff]
      %v510 = vld [vmem:[%s434 + $0x238] sm:$0xff]
      %v511 = vld [vmem:[%s434 + $0x240] sm:$0xff]
      %v512 = vld [vmem:[%s434 + $0x248] sm:$0xff]
      %v513 = vld [vmem:[%s434 + $0x250] sm:$0xf]
      %v514 = vld [vmem:[%s434 + $0x258] sm:$0xff]
      %v515 = vld [vmem:[%s434 + $0x260] sm:$0xff]
      %v516 = vld [vmem:[%s434 + $0x268] sm:$0xff]
      %v517 = vld [vmem:[%s434 + $0x270] sm:$0xff]
      %v518 = vld [vmem:[%s434 + $0x278] sm:$0xf]
      %v519 = vld [vmem:[%s434 + $0x280] sm:$0xff]
      %v520 = vld [vmem:[%s434 + $0x288] sm:$0xff]
      %v521 = vld [vmem:[%s434 + $0x290] sm:$0xff]
      %v522 = vld [vmem:[%s434 + $0x298] sm:$0xff]
      %v523 = vld [vmem:[%s434 + $0x2a0] sm:$0xf]
      %v524 = vld [vmem:[%s434 + $0x2a8] sm:$0xff]
      %v525 = vld [vmem:[%s434 + $0x2b0] sm:$0xff]
      %v526 = vld [vmem:[%s434 + $0x2b8] sm:$0xff]
      %v527 = vld [vmem:[%s434 + $0x2c0] sm:$0xff]
      %v528 = vld [vmem:[%s434 + $0x2c8] sm:$0xf]
      %v529 = vld [vmem:[%s434 + $0x2d0] sm:$0xff]
      %v530 = vld [vmem:[%s434 + $0x2d8] sm:$0xff]
      %v531 = vld [vmem:[%s434 + $0x2e0] sm:$0xff]
      %v532 = vld [vmem:[%s434 + $0x2e8] sm:$0xff]
      %v533 = vld [vmem:[%s434 + $0x2f0] sm:$0xf]
      %v534 = vld [vmem:[%s434 + $0x2f8] sm:$0xff]
      %v535 = vld [vmem:[%s434 + $0x300] sm:$0xff]
      %v536 = vld [vmem:[%s434 + $0x308] sm:$0xff]
      %v537 = vld [vmem:[%s434 + $0x310] sm:$0xff]
      %v538 = vld [vmem:[%s434 + $0x318] sm:$0xf]
      %v539 = vld [vmem:[%s434 + $0x320] sm:$0xff]
      %v540 = vld [vmem:[%s434 + $0x328] sm:$0xff]
      %v541 = vld [vmem:[%s434 + $0x330] sm:$0xff]
      %v542 = vld [vmem:[%s434 + $0x338] sm:$0xff]
      %v543 = vld [vmem:[%s434 + $0x340] sm:$0xf]
      %v544 = vld [vmem:[%s434 + $0x348] sm:$0xff]
      %v545 = vld [vmem:[%s434 + $0x350] sm:$0xff]
      %v546 = vld [vmem:[%s434 + $0x358] sm:$0xff]
      %v547 = vld [vmem:[%s434 + $0x360] sm:$0xff]
      %v548 = vld [vmem:[%s434 + $0x368] sm:$0xf]
      %v549 = vld [vmem:[%s434 + $0x370] sm:$0xff]
      %v550 = vld [vmem:[%s434 + $0x378] sm:$0xff]
      %v551 = vld [vmem:[%s434 + $0x380] sm:$0xff]
      %v552 = vld [vmem:[%s434 + $0x388] sm:$0xff]
      %v553 = vld [vmem:[%s434 + $0x390] sm:$0xf]
      %v554 = vld [vmem:[%s434 + $0x398] sm:$0xff]
      %v555 = vld [vmem:[%s434 + $0x3a0] sm:$0xff]
      %v556 = vld [vmem:[%s434 + $0x3a8] sm:$0xff]
      %v557 = vld [vmem:[%s434 + $0x3b0] sm:$0xff]
      %v558 = vld [vmem:[%s434 + $0x3b8] sm:$0xf]
      %v559 = vld [vmem:[%s434 + $0x3c0] sm:$0xff]
      %v560 = vld [vmem:[%s434 + $0x3c8] sm:$0xff]
      %v561 = vld [vmem:[%s434 + $0x3d0] sm:$0xff]
      %v562 = vld [vmem:[%s434 + $0x3d8] sm:$0xff]
      %v563 = vld [vmem:[%s434 + $0x3e0] sm:$0xf]
      %v564 = vld [vmem:[%s434 + $0x3e8] sm:$0xff]
      %v565 = vld [vmem:[%s434 + $0x3f0] sm:$0xff]
      %v566 = vld [vmem:[%s434 + $0x3f8] sm:$0xff]
      %v567 = vld [vmem:[%s434 + $0x400] sm:$0xff]
      %v568 = vld [vmem:[%s434 + $0x408] sm:$0xf]
      %v569 = vld [vmem:[%s434 + $0x410] sm:$0xff]
      %v570 = vld [vmem:[%s434 + $0x418] sm:$0xff]
      %v571 = vld [vmem:[%s434 + $0x420] sm:$0xff]
      %v572 = vld [vmem:[%s434 + $0x428] sm:$0xff]
      %v573 = vld [vmem:[%s434 + $0x430] sm:$0xf]
      %v574 = vld [vmem:[%s434 + $0x438] sm:$0xff]
      %v575 = vld [vmem:[%s434 + $0x440] sm:$0xff]
      %v576 = vld [vmem:[%s434 + $0x448] sm:$0xff]
      %v577 = vld [vmem:[%s434 + $0x450] sm:$0xff]
      %v578 = vld [vmem:[%s434 + $0x458] sm:$0xf]
      %v579 = vld [vmem:[%s434 + $0x460] sm:$0xff]
      %v580 = vld [vmem:[%s434 + $0x468] sm:$0xff]
      %v581 = vld [vmem:[%s434 + $0x470] sm:$0xff]
      %v582 = vld [vmem:[%s434 + $0x478] sm:$0xff]
      %v583 = vld [vmem:[%s434 + $0x480] sm:$0xf]
      %v584 = vld [vmem:[%s434 + $0x488] sm:$0xff]
      %v585 = vld [vmem:[%s434 + $0x490] sm:$0xff]
      %v586 = vld [vmem:[%s434 + $0x498] sm:$0xff]
      %v587 = vld [vmem:[%s434 + $0x4a0] sm:$0xff]
      %v588 = vld [vmem:[%s434 + $0x4a8] sm:$0xf]
      %v589 = vld [vmem:[%s434 + $0x4b0] sm:$0xff]
      %v590 = vld [vmem:[%s434 + $0x4b8] sm:$0xff]
      %v591 = vld [vmem:[%s434 + $0x4c0] sm:$0xff]
      %v592 = vld [vmem:[%s434 + $0x4c8] sm:$0xff]
      %v593 = vld [vmem:[%s434 + $0x4d0] sm:$0xf]
      %v594 = vld [vmem:[%s434 + $0x4d8] sm:$0xff]
      %v595 = vld [vmem:[%s434 + $0x4e0] sm:$0xff]
      %v596 = vld [vmem:[%s434 + $0x4e8] sm:$0xff]
      %v597 = vld [vmem:[%s434 + $0x4f0] sm:$0xff]
      %v598 = vld [vmem:[%s434 + $0x4f8] sm:$0xf]
      %v599 = vld [vmem:[%s434 + $0x500] sm:$0xff]
      %v600 = vld [vmem:[%s434 + $0x508] sm:$0xff]
      %v601 = vld [vmem:[%s434 + $0x510] sm:$0xff]
      %v602 = vld [vmem:[%s434 + $0x518] sm:$0xff]
      %v603 = vld [vmem:[%s434 + $0x520] sm:$0xf]
      %v604 = vld [vmem:[%s434 + $0x528] sm:$0xff]
      %v605 = vld [vmem:[%s434 + $0x530] sm:$0xff]
      %v606 = vld [vmem:[%s434 + $0x538] sm:$0xff]
      %v607 = vld [vmem:[%s434 + $0x540] sm:$0xff]
      %v608 = vld [vmem:[%s434 + $0x548] sm:$0xf]
      %v609 = vld [vmem:[%s434 + $0x550] sm:$0xff]
      %v610 = vld [vmem:[%s434 + $0x558] sm:$0xff]
      %v611 = vld [vmem:[%s434 + $0x560] sm:$0xff]
      %v612 = vld [vmem:[%s434 + $0x568] sm:$0xff]
      %v613 = vld [vmem:[%s434 + $0x570] sm:$0xf]
      %v614 = vld [vmem:[%s434 + $0x578] sm:$0xff]
      %v615 = vld [vmem:[%s434 + $0x580] sm:$0xff]
      %v616 = vld [vmem:[%s434 + $0x588] sm:$0xff]
      %v617 = vld [vmem:[%s434 + $0x590] sm:$0xff]
      %v618 = vld [vmem:[%s434 + $0x598] sm:$0xf]
      %v799 = vcombine.high %v439, %v439
      %v800 = vcombine.high %v440, %v440
      %v801 = vcombine.high %v441, %v441
      %v802 = vcombine.high %v442, %v442
      %v803 = vcombine.high %v444, %v444
      %v804 = vcombine.high %v445, %v445
      %v805 = vcombine.high %v446, %v446
      %v806 = vcombine.high %v447, %v447
      %v807 = vcombine.high %v449, %v449
      %v808 = vcombine.high %v450, %v450
      %v809 = vcombine.high %v451, %v451
      %v810 = vcombine.high %v452, %v452
      %v811 = vcombine.high %v454, %v454
      %v812 = vcombine.high %v455, %v455
      %v813 = vcombine.high %v456, %v456
      %v814 = vcombine.high %v457, %v457
      %v815 = vcombine.high %v459, %v459
      %v816 = vcombine.high %v460, %v460
      %v817 = vcombine.high %v461, %v461
      %v818 = vcombine.high %v462, %v462
      %v819 = vcombine.high %v464, %v464
      %v820 = vcombine.high %v465, %v465
      %v821 = vcombine.high %v466, %v466
      %v822 = vcombine.high %v467, %v467
      %v823 = vcombine.high %v469, %v469
      %v824 = vcombine.high %v470, %v470
      %v825 = vcombine.high %v471, %v471
      %v826 = vcombine.high %v472, %v472
      %v827 = vcombine.high %v474, %v474
      %v828 = vcombine.high %v475, %v475
      %v829 = vcombine.high %v476, %v476
      %v830 = vcombine.high %v477, %v477
      %v831 = vcombine.high %v479, %v479
      %v832 = vcombine.high %v480, %v480
      %v833 = vcombine.high %v481, %v481
      %v834 = vcombine.high %v482, %v482
      %v835 = vcombine.high %v484, %v484
      %v836 = vcombine.high %v485, %v485
      %v837 = vcombine.high %v486, %v486
      %v838 = vcombine.high %v487, %v487
      %v839 = vcombine.high %v489, %v489
      %v840 = vcombine.high %v490, %v490
      %v841 = vcombine.high %v491, %v491
      %v842 = vcombine.high %v492, %v492
      %v843 = vcombine.high %v494, %v494
      %v844 = vcombine.high %v495, %v495
      %v845 = vcombine.high %v496, %v496
      %v846 = vcombine.high %v497, %v497
      %v847 = vcombine.high %v499, %v499
      %v848 = vcombine.high %v500, %v500
      %v849 = vcombine.high %v501, %v501
      %v850 = vcombine.high %v502, %v502
      %v851 = vcombine.high %v504, %v504
      %v852 = vcombine.high %v505, %v505
      %v853 = vcombine.high %v506, %v506
      %v854 = vcombine.high %v507, %v507
      %v855 = vcombine.high %v509, %v509
      %v856 = vcombine.high %v510, %v510
      %v857 = vcombine.high %v511, %v511
      %v858 = vcombine.high %v512, %v512
      %v859 = vcombine.high %v514, %v514
      %v860 = vcombine.high %v515, %v515
      %v861 = vcombine.high %v516, %v516
      %v862 = vcombine.high %v517, %v517
      %v863 = vcombine.high %v519, %v519
      %v864 = vcombine.high %v520, %v520
      %v865 = vcombine.high %v521, %v521
      %v866 = vcombine.high %v522, %v522
      %v867 = vcombine.high %v524, %v524
      %v868 = vcombine.high %v525, %v525
      %v869 = vcombine.high %v526, %v526
      %v870 = vcombine.high %v527, %v527
      %v871 = vcombine.high %v529, %v529
      %v872 = vcombine.high %v530, %v530
      %v873 = vcombine.high %v531, %v531
      %v874 = vcombine.high %v532, %v532
      %v875 = vcombine.high %v534, %v534
      %v876 = vcombine.high %v535, %v535
      %v877 = vcombine.high %v536, %v536
      %v878 = vcombine.high %v537, %v537
      %v879 = vcombine.high %v539, %v539
      %v880 = vcombine.high %v540, %v540
      %v881 = vcombine.high %v541, %v541
      %v882 = vcombine.high %v542, %v542
      %v883 = vcombine.high %v544, %v544
      %v884 = vcombine.high %v545, %v545
      %v885 = vcombine.high %v546, %v546
      %v886 = vcombine.high %v547, %v547
      %v887 = vcombine.high %v549, %v549
      %v888 = vcombine.high %v550, %v550
      %v889 = vcombine.high %v551, %v551
      %v890 = vcombine.high %v552, %v552
      %v891 = vcombine.high %v554, %v554
      %v892 = vcombine.high %v555, %v555
      %v893 = vcombine.high %v556, %v556
      %v894 = vcombine.high %v557, %v557
      %v895 = vcombine.high %v559, %v559
      %v896 = vcombine.high %v560, %v560
      %v897 = vcombine.high %v561, %v561
      %v898 = vcombine.high %v562, %v562
      %v899 = vcombine.high %v564, %v564
      %v900 = vcombine.high %v565, %v565
      %v901 = vcombine.high %v566, %v566
      %v902 = vcombine.high %v567, %v567
      %v903 = vcombine.high %v569, %v569
      %v904 = vcombine.high %v570, %v570
      %v905 = vcombine.high %v571, %v571
      %v906 = vcombine.high %v572, %v572
      %v907 = vcombine.high %v574, %v574
      %v908 = vcombine.high %v575, %v575
      %v909 = vcombine.high %v576, %v576
      %v910 = vcombine.high %v577, %v577
      %v911 = vcombine.high %v579, %v579
      %v912 = vcombine.high %v580, %v580
      %v913 = vcombine.high %v581, %v581
      %v914 = vcombine.high %v582, %v582
      %v915 = vcombine.high %v584, %v584
      %v916 = vcombine.high %v585, %v585
      %v917 = vcombine.high %v586, %v586
      %v918 = vcombine.high %v587, %v587
      %v919 = vcombine.high %v589, %v589
      %v920 = vcombine.high %v590, %v590
      %v921 = vcombine.high %v591, %v591
      %v922 = vcombine.high %v592, %v592
      %v923 = vcombine.high %v594, %v594
      %v924 = vcombine.high %v595, %v595
      %v925 = vcombine.high %v596, %v596
      %v926 = vcombine.high %v597, %v597
      %v927 = vcombine.high %v599, %v599
      %v928 = vcombine.high %v600, %v600
      %v929 = vcombine.high %v601, %v601
      %v930 = vcombine.high %v602, %v602
      %v931 = vcombine.high %v604, %v604
      %v932 = vcombine.high %v605, %v605
      %v933 = vcombine.high %v606, %v606
      %v934 = vcombine.high %v607, %v607
      %v935 = vcombine.high %v609, %v609
      %v936 = vcombine.high %v610, %v610
      %v937 = vcombine.high %v611, %v611
      %v938 = vcombine.high %v612, %v612
      %v939 = vcombine.high %v614, %v614
      %v940 = vcombine.high %v615, %v615
      %v941 = vcombine.high %v616, %v616
      %v942 = vcombine.high %v617, %v617
      %v943 = vld [vmem:[%s1] sm:$0xff]
      %v944 = vld [vmem:[%s1 + $0x8] sm:$0xff]
      %v945 = vld [vmem:[%s1 + $0x10] sm:$0xff]
      %v946 = vld [vmem:[%s1 + $0x18] sm:$0xff]
      %v947 = vld [vmem:[%s1 + $0x20] sm:$0xff]
      %v948 = vld [vmem:[%s1 + $0x28] sm:$0xff]
      %v949 = vld [vmem:[%s1 + $0x30] sm:$0xff]
      %v950 = vld [vmem:[%s1 + $0x38] sm:$0xff]
      %v951 = vld [vmem:[%s1 + $0x40] sm:$0xff]
      %v952 = vld [vmem:[%s1 + $0x48] sm:$0xff]
      %v953 = vld [vmem:[%s1 + $0x50] sm:$0xff]
      %v954 = vld [vmem:[%s1 + $0x58] sm:$0xff]
      %v955 = vld [vmem:[%s1 + $0x60] sm:$0xff]
      %v956 = vld [vmem:[%s1 + $0x68] sm:$0xff]
      %v957 = vld [vmem:[%s1 + $0x70] sm:$0xff]
      %v958 = vld [vmem:[%s1 + $0x78] sm:$0xff]
      %v959 = vcombine.low %v439, %v799
      %v960 = vcombine.low %v440, %v800
      %v961 = vcombine.low %v441, %v801
      %v962 = vcombine.low %v442, %v802
      %v963 = vcombine.low %v443, %v444
      %v964 = vcombine.low %v803, %v445
      %v965 = vcombine.low %v804, %v446
      %v966 = vcombine.low %v805, %v447
      %v967 = vcombine.low %v806, %v448
      %v968 = vcombine.low %v449, %v807
      %v969 = vcombine.low %v450, %v808
      %v970 = vcombine.low %v451, %v809
      %v971 = vcombine.low %v452, %v810
      %v972 = vcombine.low %v453, %v454
      %v973 = vcombine.low %v811, %v455
      %v974 = vcombine.low %v812, %v456
      %v975 = vcombine.low %v813, %v457
      %v976 = vcombine.low %v814, %v458
      %v977 = vcombine.low %v459, %v815
      %v978 = vcombine.low %v460, %v816
      %v979 = vcombine.low %v461, %v817
      %v980 = vcombine.low %v462, %v818
      %v981 = vcombine.low %v463, %v464
      %v982 = vcombine.low %v819, %v465
      %v983 = vcombine.low %v820, %v466
      %v984 = vcombine.low %v821, %v467
      %v985 = vcombine.low %v822, %v468
      %v986 = vcombine.low %v469, %v823
      %v987 = vcombine.low %v470, %v824
      %v988 = vcombine.low %v471, %v825
      %v989 = vcombine.low %v472, %v826
      %v990 = vcombine.low %v473, %v474
      %v991 = vcombine.low %v827, %v475
      %v992 = vcombine.low %v828, %v476
      %v993 = vcombine.low %v829, %v477
      %v994 = vcombine.low %v830, %v478
      %v995 = vcombine.low %v479, %v831
      %v996 = vcombine.low %v480, %v832
      %v997 = vcombine.low %v481, %v833
      %v998 = vcombine.low %v482, %v834
      %v999 = vcombine.low %v483, %v484
      %v1000 = vcombine.low %v835, %v485
      %v1001 = vcombine.low %v836, %v486
      %v1002 = vcombine.low %v837, %v487
      %v1003 = vcombine.low %v838, %v488
      %v1004 = vcombine.low %v489, %v839
      %v1005 = vcombine.low %v490, %v840
      %v1006 = vcombine.low %v491, %v841
      %v1007 = vcombine.low %v492, %v842
      %v1008 = vcombine.low %v493, %v494
      %v1009 = vcombine.low %v843, %v495
      %v1010 = vcombine.low %v844, %v496
      %v1011 = vcombine.low %v845, %v497
      %v1012 = vcombine.low %v846, %v498
      %v1013 = vcombine.low %v499, %v847
      %v1014 = vcombine.low %v500, %v848
      %v1015 = vcombine.low %v501, %v849
      %v1016 = vcombine.low %v502, %v850
      %v1017 = vcombine.low %v503, %v504
      %v1018 = vcombine.low %v851, %v505
      %v1019 = vcombine.low %v852, %v506
      %v1020 = vcombine.low %v853, %v507
      %v1021 = vcombine.low %v854, %v508
      %v1022 = vcombine.low %v509, %v855
      %v1023 = vcombine.low %v510, %v856
      %v1024 = vcombine.low %v511, %v857
      %v1025 = vcombine.low %v512, %v858
      %v1026 = vcombine.low %v513, %v514
      %v1027 = vcombine.low %v859, %v515
      %v1028 = vcombine.low %v860, %v516
      %v1029 = vcombine.low %v861, %v517
      %v1030 = vcombine.low %v862, %v518
      %v1031 = vcombine.low %v519, %v863
      %v1032 = vcombine.low %v520, %v864
      %v1033 = vcombine.low %v521, %v865
      %v1034 = vcombine.low %v522, %v866
      %v1035 = vcombine.low %v523, %v524
      %v1036 = vcombine.low %v867, %v525
      %v1037 = vcombine.low %v868, %v526
      %v1038 = vcombine.low %v869, %v527
      %v1039 = vcombine.low %v870, %v528
      %v1040 = vcombine.low %v529, %v871
      %v1041 = vcombine.low %v530, %v872
      %v1042 = vcombine.low %v531, %v873
      %v1043 = vcombine.low %v532, %v874
      %v1044 = vcombine.low %v533, %v534
      %v1045 = vcombine.low %v875, %v535
      %v1046 = vcombine.low %v876, %v536
      %v1047 = vcombine.low %v877, %v537
      %v1048 = vcombine.low %v878, %v538
      %v1049 = vcombine.low %v539, %v879
      %v1050 = vcombine.low %v540, %v880
      %v1051 = vcombine.low %v541, %v881
      %v1052 = vcombine.low %v542, %v882
      %v1053 = vcombine.low %v543, %v544
      %v1054 = vcombine.low %v883, %v545
      %v1055 = vcombine.low %v884, %v546
      %v1056 = vcombine.low %v885, %v547
      %v1057 = vcombine.low %v886, %v548
      %v1058 = vcombine.low %v549, %v887
      %v1059 = vcombine.low %v550, %v888
      %v1060 = vcombine.low %v551, %v889
      %v1061 = vcombine.low %v552, %v890
      %v1062 = vcombine.low %v553, %v554
      %v1063 = vcombine.low %v891, %v555
      %v1064 = vcombine.low %v892, %v556
      %v1065 = vcombine.low %v893, %v557
      %v1066 = vcombine.low %v894, %v558
      %v1067 = vcombine.low %v559, %v895
      %v1068 = vcombine.low %v560, %v896
      %v1069 = vcombine.low %v561, %v897
      %v1070 = vcombine.low %v562, %v898
      %v1071 = vcombine.low %v563, %v564
      %v1072 = vcombine.low %v899, %v565
      %v1073 = vcombine.low %v900, %v566
      %v1074 = vcombine.low %v901, %v567
      %v1075 = vcombine.low %v902, %v568
      %v1076 = vcombine.low %v569, %v903
      %v1077 = vcombine.low %v570, %v904
      %v1078 = vcombine.low %v571, %v905
      %v1079 = vcombine.low %v572, %v906
      %v1080 = vcombine.low %v573, %v574
      %v1081 = vcombine.low %v907, %v575
      %v1082 = vcombine.low %v908, %v576
      %v1083 = vcombine.low %v909, %v577
      %v1084 = vcombine.low %v910, %v578
      %v1085 = vcombine.low %v579, %v911
      %v1086 = vcombine.low %v580, %v912
      %v1087 = vcombine.low %v581, %v913
      %v1088 = vcombine.low %v582, %v914
      %v1089 = vcombine.low %v583, %v584
      %v1090 = vcombine.low %v915, %v585
      %v1091 = vcombine.low %v916, %v586
      %v1092 = vcombine.low %v917, %v587
      %v1093 = vcombine.low %v918, %v588
      %v1094 = vcombine.low %v589, %v919
      %v1095 = vcombine.low %v590, %v920
      %v1096 = vcombine.low %v591, %v921
      %v1097 = vcombine.low %v592, %v922
      %v1098 = vcombine.low %v593, %v594
      %v1099 = vcombine.low %v923, %v595
      %v1100 = vcombine.low %v924, %v596
      %v1101 = vcombine.low %v925, %v597
      %v1102 = vcombine.low %v926, %v598
      %v1103 = vcombine.low %v599, %v927
      %v1104 = vcombine.low %v600, %v928
      %v1105 = vcombine.low %v601, %v929
      %v1106 = vcombine.low %v602, %v930
      %v1107 = vcombine.low %v603, %v604
      %v1108 = vcombine.low %v931, %v605
      %v1109 = vcombine.low %v932, %v606
      %v1110 = vcombine.low %v933, %v607
      %v1111 = vcombine.low %v934, %v608
      %v1112 = vcombine.low %v609, %v935
      %v1113 = vcombine.low %v610, %v936
      %v1114 = vcombine.low %v611, %v937
      %v1115 = vcombine.low %v612, %v938
      %v1116 = vcombine.low %v613, %v614
      %v1117 = vcombine.low %v939, %v615
      %v1118 = vcombine.low %v940, %v616
      %v1119 = vcombine.low %v941, %v617
      %v1120 = vcombine.low %v942, %v618
      %1283 = vmatprep.subr.mxu0 0.0
      %1284 = vmatpush1.msra.mxu0 %v943
      %1285 = vmatprep.subr.mxu0 0.0
      %1286 = vmatpush1.msra.mxu0 %v944
      %1287 = vmatprep.subr.mxu0 0.0
      %1288 = vmatpush1.msra.mxu0 %v945
      %1289 = vmatprep.subr.mxu0 0.0
      %1290 = vmatpush1.msra.mxu0 %v946
      %1291 = vmatprep.subr.mxu0 0.0
      %1292 = vmatpush1.msra.mxu0 %v947
      %1293 = vmatprep.subr.mxu0 0.0
      %1294 = vmatpush1.msra.mxu0 %v948
      %1295 = vmatprep.subr.mxu0 0.0
      %1296 = vmatpush1.msra.mxu0 %v949
      %1297 = vmatprep.subr.mxu0 0.0
      %1298 = vmatpush1.msra.mxu0 %v950
      %1299 = vmatprep.subr.mxu0 0.0
      %1300 = vmatpush1.msra.mxu0 %v951
      %1301 = vmatprep.subr.mxu0 0.0
      %1302 = vmatpush1.msra.mxu0 %v952
      %1303 = vmatprep.subr.mxu0 0.0
      %1304 = vmatpush1.msra.mxu0 %v953
      %1305 = vmatprep.subr.mxu0 0.0
      %1306 = vmatpush1.msra.mxu0 %v954
      %1307 = vmatprep.subr.mxu0 0.0
      %1308 = vmatpush1.msra.mxu0 %v955
      %1309 = vmatprep.subr.mxu0 0.0
      %1310 = vmatpush1.msra.mxu0 %v956
      %1311 = vmatprep.subr.mxu0 0.0
      %1312 = vmatpush1.msra.mxu0 %v957
      %1313 = vmatprep.subr.mxu0 0.0
      %1314 = vmatpush1.msra.mxu0 %v958
      %1315 = vmatprep.subr.mxu0 0.0
      %1316 = vmatpush1.msra.mxu0 0.0
      %1317 = vmatprep.subr.mxu0 0.0
      %1318 = vmatpush1.msra.mxu0 0.0
      %1319 = vmatprep.subr.mxu0 0.0
      %1320 = vmatpush1.msra.mxu0 0.0
      %1321 = vmatprep.subr.mxu0 0.0
      %1322 = vmatpush1.msra.mxu0 0.0
      %1323 = vmatprep.subr.mxu0 0.0
      %1324 = vmatpush1.msra.mxu0 0.0
      %1325 = vmatprep.subr.mxu0 0.0
      %1326 = vmatpush1.msra.mxu0 0.0
      %1327 = vmatprep.subr.mxu0 0.0
      %1328 = vmatpush1.msra.mxu0 0.0
      %1329 = vmatprep.subr.mxu0 0.0
      %1330 = vmatpush1.msra.mxu0 0.0
      %1331 = vmatprep.subr.mxu0 0.0
      %1332 = vmatpush1.msra.mxu0 0.0
      %1333 = vmatprep.subr.mxu0 0.0
      %1334 = vmatpush1.msra.mxu0 0.0
      %1335 = vmatprep.subr.mxu0 0.0
      %1336 = vmatpush1.msra.mxu0 0.0
      %1337 = vmatprep.subr.mxu0 0.0
      %1338 = vmatpush1.msra.mxu0 0.0
      %1339 = vmatprep.subr.mxu0 0.0
      %1340 = vmatpush1.msra.mxu0 0.0
      %1341 = vmatprep.subr.mxu0 0.0
      %1342 = vmatpush1.msra.mxu0 0.0
      %1343 = vmatprep.subr.mxu0 0.0
      %1344 = vmatpush1.msra.mxu0 0.0
      %1345 = vmatprep.subr.mxu0 0.0
      %1346 = vmatpush1.msra.mxu0 0.0
      %1347 = vmatprep.mubr.f32.mxu0 0.0
      %1348 = vmatmul.mubr.f32.gmra.mrb[0].mxu0 %v959
      %v1349 = vpop.f32.mrb[0].mxu0
      %v1350 = vadd.f32 0.0, %v1349
      %v1351 = vpop.f32.mrb[0].mxu0
      %1352 = vmatprep.mubr.f32.mxu0 0.0
      %1353 = vmatmul.mubr.f32.gmra.mrb[0].mxu0 %v960
      %v1354 = vpop.f32.mrb[0].mxu0
      %v1355 = vadd.f32 0.0, %v1354
      %v1356 = vpop.f32.mrb[0].mxu0
      %1357 = vmatprep.mubr.f32.mxu0 0.0
      %1358 = vmatmul.mubr.f32.gmra.mrb[0].mxu0 %v961
      %v1359 = vpop.f32.mrb[0].mxu0
      %v1360 = vadd.f32 0.0, %v1359
      %v1361 = vpop.f32.mrb[0].mxu0
      %1362 = vmatprep.mubr.f32.mxu0 0.0
      %1363 = vmatmul.mubr.f32.gmra.mrb[0].mxu0 %v962
      %v1364 = vpop.f32.mrb[0].mxu0
      %v1365 = vadd.f32 0.0, %v1364
      %v1366 = vpop.f32.mrb[0].mxu0
      %1367 = vmatprep.mubr.f32.mxu0 0.0
      %1368 = vmatmul.mubr.f32.gmra.mrb[0].mxu0 %v963
      %v1369 = vpop.f32.mrb[0].mxu0
      %v1370 = vadd.f32 0.0, %v1369
      %v1371 = vpop.f32.mrb[0].mxu0
      %1372 = vmatprep.mubr.f32.mxu0 0.0
      %1373 = vmatmul.mubr.f32.gmra.mrb[0].mxu0 %v964
      %v1374 = vpop.f32.mrb[0].mxu0
      %v1375 = vadd.f32 0.0, %v1374
      %v1376 = vpop.f32.mrb[0].mxu0
      %1377 = vmatprep.mubr.f32.mxu0 0.0
      %1378 = vmatmul.mubr.f32.gmra.mrb[0].mxu0 %v965
      %v1379 = vpop.f32.mrb[0].mxu0
      %v1380 = vadd.f32 0.0, %v1379
      %v1381 = vpop.f32.mrb[0].mxu0
      %1382 = vmatprep.mubr.f32.mxu0 0.0
      %1383 = vmatmul.mubr.f32.gmra.mrb[0].mxu0 %v966
      %v1384 = vpop.f32.mrb[0].mxu0
      %v1385 = vadd.f32 0.0, %v1384
      %v1386 = vpop.f32.mrb[0].mxu0
      %1387 = vmatprep.mubr.f32.mxu0 0.0
      %1388 = vmatmul.mubr.f32.gmra.mrb[0].mxu0 %v967
      %v1389 = vpop.f32.mrb[0].mxu0
      %v1390 = vadd.f32 0.0, %v1389
      %v1391 = vpop.f32.mrb[0].mxu0
      %1392 = vmatprep.mubr.f32.mxu0 0.0
      %1393 = vmatmul.mubr.f32.gmra.mrb[0].mxu0 %v968
      %v1394 = vpop.f32.mrb[0].mxu0
      %v1395 = vadd.f32 0.0, %v1394
      %v1396 = vpop.f32.mrb[0].mxu0
      %1397 = vmatprep.mubr.f32.mxu0 0.0
      %1398 = vmatmul.mubr.f32.gmra.mrb[0].mxu0 %v969
      %v1399 = vpop.f32.mrb[0].mxu0
      %v1400 = vadd.f32 0.0, %v1399
      %v1401 = vpop.f32.mrb[0].mxu0
      %1402 = vmatprep.mubr.f32.mxu0 0.0
      %1403 = vmatmul.mubr.f32.gmra.mrb[0].mxu0 %v970
      %v1404 = vpop.f32.mrb[0].mxu0
      %v1405 = vadd.f32 0.0, %v1404
      %v1406 = vpop.f32.mrb[0].mxu0
      %1407 = vmatprep.mubr.f32.mxu0 0.0
      %1408 = vmatmul.mubr.f32.gmra.mrb[0].mxu0 %v971
      %v1409 = vpop.f32.mrb[0].mxu0
      %v1410 = vadd.f32 0.0, %v1409
      %v1411 = vpop.f32.mrb[0].mxu0
      %1412 = vmatprep.mubr.f32.mxu0 0.0
      %1413 = vmatmul.mubr.f32.gmra.mrb[0].mxu0 %v972
      %v1414 = vpop.f32.mrb[0].mxu0
      %v1415 = vadd.f32 0.0, %v1414
      %v1416 = vpop.f32.mrb[0].mxu0
      %1417 = vmatprep.mubr.f32.mxu0 0.0
      %1418 = vmatmul.mubr.f32.gmra.mrb[0].mxu0 %v973
      %v1419 = vpop.f32.mrb[0].mxu0
      %v1420 = vadd.f32 0.0, %v1419
      %v1421 = vpop.f32.mrb[0].mxu0
      %1422 = vmatprep.mubr.f32.mxu0 0.0
      %1423 = vmatmul.mubr.f32.gmra.mrb[0].mxu0 %v974
      %v1424 = vpop.f32.mrb[0].mxu0
      %v1425 = vadd.f32 0.0, %v1424
      %v1426 = vpop.f32.mrb[0].mxu0
      %1427 = vmatprep.mubr.f32.mxu0 0.0
      %1428 = vmatmul.mubr.f32.gmra.mrb[0].mxu0 %v975
      %v1429 = vpop.f32.mrb[0].mxu0
      %v1430 = vadd.f32 0.0, %v1429
      %v1431 = vpop.f32.mrb[0].mxu0
      %1432 = vmatprep.mubr.f32.mxu0 0.0
      %1433 = vmatmul.mubr.f32.gmra.mrb[0].mxu0 %v976
      %v1434 = vpop.f32.mrb[0].mxu0
      %v1435 = vadd.f32 0.0, %v1434
      %v1436 = vpop.f32.mrb[0].mxu0
      %1437 = vmatprep.mubr.f32.mxu0 0.0
      %1438 = vmatmul.mubr.f32.gmra.mrb[0].mxu0 %v977
      %v1439 = vpop.f32.mrb[0].mxu0
      %v1440 = vadd.f32 0.0, %v1439
      %v1441 = vpop.f32.mrb[0].mxu0
      %1442 = vmatprep.mubr.f32.mxu0 0.0
      %1443 = vmatmul.mubr.f32.gmra.mrb[0].mxu0 %v978
      %v1444 = vpop.f32.mrb[0].mxu0
      %v1445 = vadd.f32 0.0, %v1444
      %v1446 = vpop.f32.mrb[0].mxu0
      %1447 = vmatprep.mubr.f32.mxu0 0.0
      %1448 = vmatmul.mubr.f32.gmra.mrb[0].mxu0 %v979
      %v1449 = vpop.f32.mrb[0].mxu0
      %v1450 = vadd.f32 0.0, %v1449
      %v1451 = vpop.f32.mrb[0].mxu0
      %1452 = vmatprep.mubr.f32.mxu0 0.0
      %1453 = vmatmul.mubr.f32.gmra.mrb[0].mxu0 %v980
      %v1454 = vpop.f32.mrb[0].mxu0
      %v1455 = vadd.f32 0.0, %v1454
      %v1456 = vpop.f32.mrb[0].mxu0
      %1457 = vmatprep.mubr.f32.mxu0 0.0
      %1458 = vmatmul.mubr.f32.gmra.mrb[0].mxu0 %v981
      %v1459 = vpop.f32.mrb[0].mxu0
      %v1460 = vadd.f32 0.0, %v1459
      %v1461 = vpop.f32.mrb[0].mxu0
      %1462 = vmatprep.mubr.f32.mxu0 0.0
      %1463 = vmatmul.mubr.f32.gmra.mrb[0].mxu0 %v982
      %v1464 = vpop.f32.mrb[0].mxu0
      %v1465 = vadd.f32 0.0, %v1464
      %v1466 = vpop.f32.mrb[0].mxu0
      %1467 = vmatprep.mubr.f32.mxu0 0.0
      %1468 = vmatmul.mubr.f32.gmra.mrb[0].mxu0 %v983
      %v1469 = vpop.f32.mrb[0].mxu0
      %v1470 = vadd.f32 0.0, %v1469
      %v1471 = vpop.f32.mrb[0].mxu0
      %1472 = vmatprep.mubr.f32.mxu0 0.0
      %1473 = vmatmul.mubr.f32.gmra.mrb[0].mxu0 %v984
      %v1474 = vpop.f32.mrb[0].mxu0
      %v1475 = vadd.f32 0.0, %v1474
      %v1476 = vpop.f32.mrb[0].mxu0
      %1477 = vmatprep.mubr.f32.mxu0 0.0
      %1478 = vmatmul.mubr.f32.gmra.mrb[0].mxu0 %v985
      %v1479 = vpop.f32.mrb[0].mxu0
      %v1480 = vadd.f32 0.0, %v1479
      %v1481 = vpop.f32.mrb[0].mxu0
      %1482 = vmatprep.mubr.f32.mxu0 0.0
      %1483 = vmatmul.mubr.f32.gmra.mrb[0].mxu0 %v986
      %v1484 = vpop.f32.mrb[0].mxu0
      %v1485 = vadd.f32 0.0, %v1484
      %v1486 = vpop.f32.mrb[0].mxu0
      %1487 = vmatprep.mubr.f32.mxu0 0.0
      %1488 = vmatmul.mubr.f32.gmra.mrb[0].mxu0 %v987
      %v1489 = vpop.f32.mrb[0].mxu0
      %v1490 = vadd.f32 0.0, %v1489
      %v1491 = vpop.f32.mrb[0].mxu0
      %1492 = vmatprep.mubr.f32.mxu0 0.0
      %1493 = vmatmul.mubr.f32.gmra.mrb[0].mxu0 %v988
      %v1494 = vpop.f32.mrb[0].mxu0
      %v1495 = vadd.f32 0.0, %v1494
      %v1496 = vpop.f32.mrb[0].mxu0
      %1497 = vmatprep.mubr.f32.mxu0 0.0
      %1498 = vmatmul.mubr.f32.gmra.mrb[0].mxu0 %v989
      %v1499 = vpop.f32.mrb[0].mxu0
      %v1500 = vadd.f32 0.0, %v1499
      %v1501 = vpop.f32.mrb[0].mxu0
      %1502 = vmatprep.mubr.f32.mxu0 0.0
      %1503 = vmatmul.mubr.f32.gmra.mrb[0].mxu0 %v990
      %v1504 = vpop.f32.mrb[0].mxu0
      %v1505 = vadd.f32 0.0, %v1504
      %v1506 = vpop.f32.mrb[0].mxu0
      %1507 = vmatprep.mubr.f32.mxu0 0.0
      %1508 = vmatmul.mubr.f32.gmra.mrb[0].mxu0 %v991
      %v1509 = vpop.f32.mrb[0].mxu0
      %v1510 = vadd.f32 0.0, %v1509
      %v1511 = vpop.f32.mrb[0].mxu0
      %1512 = vmatprep.mubr.f32.mxu0 0.0
      %1513 = vmatmul.mubr.f32.gmra.mrb[0].mxu0 %v992
      %v1514 = vpop.f32.mrb[0].mxu0
      %v1515 = vadd.f32 0.0, %v1514
      %v1516 = vpop.f32.mrb[0].mxu0
      %1517 = vmatprep.mubr.f32.mxu0 0.0
      %1518 = vmatmul.mubr.f32.gmra.mrb[0].mxu0 %v993
      %v1519 = vpop.f32.mrb[0].mxu0
      %v1520 = vadd.f32 0.0, %v1519
      %v1521 = vpop.f32.mrb[0].mxu0
      %1522 = vmatprep.mubr.f32.mxu0 0.0
      %1523 = vmatmul.mubr.f32.gmra.mrb[0].mxu0 %v994
      %v1524 = vpop.f32.mrb[0].mxu0
      %v1525 = vadd.f32 0.0, %v1524
      %v1526 = vpop.f32.mrb[0].mxu0
      %1527 = vmatprep.mubr.f32.mxu0 0.0
      %1528 = vmatmul.mubr.f32.gmra.mrb[0].mxu0 %v995
      %v1529 = vpop.f32.mrb[0].mxu0
      %v1530 = vadd.f32 0.0, %v1529
      %v1531 = vpop.f32.mrb[0].mxu0
      %1532 = vmatprep.mubr.f32.mxu0 0.0
      %1533 = vmatmul.mubr.f32.gmra.mrb[0].mxu0 %v996
      %v1534 = vpop.f32.mrb[0].mxu0
      %v1535 = vadd.f32 0.0, %v1534
      %v1536 = vpop.f32.mrb[0].mxu0
      %1537 = vmatprep.mubr.f32.mxu0 0.0
      %1538 = vmatmul.mubr.f32.gmra.mrb[0].mxu0 %v997
      %v1539 = vpop.f32.mrb[0].mxu0
      %v1540 = vadd.f32 0.0, %v1539
      %v1541 = vpop.f32.mrb[0].mxu0
      %1542 = vmatprep.mubr.f32.mxu0 0.0
      %1543 = vmatmul.mubr.f32.gmra.mrb[0].mxu0 %v998
      %v1544 = vpop.f32.mrb[0].mxu0
      %v1545 = vadd.f32 0.0, %v1544
      %v1546 = vpop.f32.mrb[0].mxu0
      %1547 = vmatprep.mubr.f32.mxu0 0.0
      %1548 = vmatmul.mubr.f32.gmra.mrb[0].mxu0 %v999
      %v1549 = vpop.f32.mrb[0].mxu0
      %v1550 = vadd.f32 0.0, %v1549
      %v1551 = vpop.f32.mrb[0].mxu0
      %1552 = vmatprep.mubr.f32.mxu0 0.0
      %1553 = vmatmul.mubr.f32.gmra.mrb[0].mxu0 %v1000
      %v1554 = vpop.f32.mrb[0].mxu0
      %v1555 = vadd.f32 0.0, %v1554
      %v1556 = vpop.f32.mrb[0].mxu0
      %1557 = vmatprep.mubr.f32.mxu0 0.0
      %1558 = vmatmul.mubr.f32.gmra.mrb[0].mxu0 %v1001
      %v1559 = vpop.f32.mrb[0].mxu0
      %v1560 = vadd.f32 0.0, %v1559
      %v1561 = vpop.f32.mrb[0].mxu0
      %1562 = vmatprep.mubr.f32.mxu0 0.0
      %1563 = vmatmul.mubr.f32.gmra.mrb[0].mxu0 %v1002
      %v1564 = vpop.f32.mrb[0].mxu0
      %v1565 = vadd.f32 0.0, %v1564
      %v1566 = vpop.f32.mrb[0].mxu0
      %1567 = vmatprep.mubr.f32.mxu0 0.0
      %1568 = vmatmul.mubr.f32.gmra.mrb[0].mxu0 %v1003
      %v1569 = vpop.f32.mrb[0].mxu0
      %v1570 = vadd.f32 0.0, %v1569
      %v1571 = vpop.f32.mrb[0].mxu0
      %1572 = vmatprep.mubr.f32.mxu0 0.0
      %1573 = vmatmul.mubr.f32.gmra.mrb[0].mxu0 %v1004
      %v1574 = vpop.f32.mrb[0].mxu0
      %v1575 = vadd.f32 0.0, %v1574
      %v1576 = vpop.f32.mrb[0].mxu0
      %1577 = vmatprep.mubr.f32.mxu0 0.0
      %1578 = vmatmul.mubr.f32.gmra.mrb[0].mxu0 %v1005
      %v1579 = vpop.f32.mrb[0].mxu0
      %v1580 = vadd.f32 0.0, %v1579
      %v1581 = vpop.f32.mrb[0].mxu0
      %1582 = vmatprep.mubr.f32.mxu0 0.0
      %1583 = vmatmul.mubr.f32.gmra.mrb[0].mxu0 %v1006
      %v1584 = vpop.f32.mrb[0].mxu0
      %v1585 = vadd.f32 0.0, %v1584
      %v1586 = vpop.f32.mrb[0].mxu0
      %1587 = vmatprep.mubr.f32.mxu0 0.0
      %1588 = vmatmul.mubr.f32.gmra.mrb[0].mxu0 %v1007
      %v1589 = vpop.f32.mrb[0].mxu0
      %v1590 = vadd.f32 0.0, %v1589
      %v1591 = vpop.f32.mrb[0].mxu0
      %1592 = vmatprep.mubr.f32.mxu0 0.0
      %1593 = vmatmul.mubr.f32.gmra.mrb[0].mxu0 %v1008
      %v1594 = vpop.f32.mrb[0].mxu0
      %v1595 = vadd.f32 0.0, %v1594
      %v1596 = vpop.f32.mrb[0].mxu0
      %1597 = vmatprep.mubr.f32.mxu0 0.0
      %1598 = vmatmul.mubr.f32.gmra.mrb[0].mxu0 %v1009
      %v1599 = vpop.f32.mrb[0].mxu0
      %v1600 = vadd.f32 0.0, %v1599
      %v1601 = vpop.f32.mrb[0].mxu0
      %1602 = vmatprep.mubr.f32.mxu0 0.0
      %1603 = vmatmul.mubr.f32.gmra.mrb[0].mxu0 %v1010
      %v1604 = vpop.f32.mrb[0].mxu0
      %v1605 = vadd.f32 0.0, %v1604
      %v1606 = vpop.f32.mrb[0].mxu0
      %1607 = vmatprep.mubr.f32.mxu0 0.0
      %1608 = vmatmul.mubr.f32.gmra.mrb[0].mxu0 %v1011
      %v1609 = vpop.f32.mrb[0].mxu0
      %v1610 = vadd.f32 0.0, %v1609
      %v1611 = vpop.f32.mrb[0].mxu0
      %1612 = vmatprep.mubr.f32.mxu0 0.0
      %1613 = vmatmul.mubr.f32.gmra.mrb[0].mxu0 %v1012
      %v1614 = vpop.f32.mrb[0].mxu0
      %v1615 = vadd.f32 0.0, %v1614
      %v1616 = vpop.f32.mrb[0].mxu0
      %1617 = vmatprep.mubr.f32.mxu0 0.0
      %1618 = vmatmul.mubr.f32.gmra.mrb[0].mxu0 %v1013
      %v1619 = vpop.f32.mrb[0].mxu0
      %v1620 = vadd.f32 0.0, %v1619
      %v1621 = vpop.f32.mrb[0].mxu0
      %1622 = vmatprep.mubr.f32.mxu0 0.0
      %1623 = vmatmul.mubr.f32.gmra.mrb[0].mxu0 %v1014
      %v1624 = vpop.f32.mrb[0].mxu0
      %v1625 = vadd.f32 0.0, %v1624
      %v1626 = vpop.f32.mrb[0].mxu0
      %1627 = vmatprep.mubr.f32.mxu0 0.0
      %1628 = vmatmul.mubr.f32.gmra.mrb[0].mxu0 %v1015
      %v1629 = vpop.f32.mrb[0].mxu0
      %v1630 = vadd.f32 0.0, %v1629
      %v1631 = vpop.f32.mrb[0].mxu0
      %1632 = vmatprep.mubr.f32.mxu0 0.0
      %1633 = vmatmul.mubr.f32.gmra.mrb[0].mxu0 %v1016
      %v1634 = vpop.f32.mrb[0].mxu0
      %v1635 = vadd.f32 0.0, %v1634
      %v1636 = vpop.f32.mrb[0].mxu0
      %1637 = vmatprep.mubr.f32.mxu0 0.0
      %1638 = vmatmul.mubr.f32.gmra.mrb[0].mxu0 %v1017
      %v1639 = vpop.f32.mrb[0].mxu0
      %v1640 = vadd.f32 0.0, %v1639
      %v1641 = vpop.f32.mrb[0].mxu0
      %1642 = vmatprep.mubr.f32.mxu0 0.0
      %1643 = vmatmul.mubr.f32.gmra.mrb[0].mxu0 %v1018
      %v1644 = vpop.f32.mrb[0].mxu0
      %v1645 = vadd.f32 0.0, %v1644
      %v1646 = vpop.f32.mrb[0].mxu0
      %1647 = vmatprep.mubr.f32.mxu0 0.0
      %1648 = vmatmul.mubr.f32.gmra.mrb[0].mxu0 %v1019
      %v1649 = vpop.f32.mrb[0].mxu0
      %v1650 = vadd.f32 0.0, %v1649
      %v1651 = vpop.f32.mrb[0].mxu0
      %1652 = vmatprep.mubr.f32.mxu0 0.0
      %1653 = vmatmul.mubr.f32.gmra.mrb[0].mxu0 %v1020
      %v1654 = vpop.f32.mrb[0].mxu0
      %v1655 = vadd.f32 0.0, %v1654
      %v1656 = vpop.f32.mrb[0].mxu0
      %1657 = vmatprep.mubr.f32.mxu0 0.0
      %1658 = vmatmul.mubr.f32.gmra.mrb[0].mxu0 %v1021
      %v1659 = vpop.f32.mrb[0].mxu0
      %v1660 = vadd.f32 0.0, %v1659
      %v1661 = vpop.f32.mrb[0].mxu0
      %1662 = vmatprep.mubr.f32.mxu0 0.0
      %1663 = vmatmul.mubr.f32.gmra.mrb[0].mxu0 %v1022
      %v1664 = vpop.f32.mrb[0].mxu0
      %v1665 = vadd.f32 0.0, %v1664
      %v1666 = vpop.f32.mrb[0].mxu0
      %1667 = vmatprep.mubr.f32.mxu0 0.0
      %1668 = vmatmul.mubr.f32.gmra.mrb[0].mxu0 %v1023
      %v1669 = vpop.f32.mrb[0].mxu0
      %v1670 = vadd.f32 0.0, %v1669
      %v1671 = vpop.f32.mrb[0].mxu0
      %1672 = vmatprep.mubr.f32.mxu0 0.0
      %1673 = vmatmul.mubr.f32.gmra.mrb[0].mxu0 %v1024
      %v1674 = vpop.f32.mrb[0].mxu0
      %v1675 = vadd.f32 0.0, %v1674
      %v1676 = vpop.f32.mrb[0].mxu0
      %1677 = vmatprep.mubr.f32.mxu0 0.0
      %1678 = vmatmul.mubr.f32.gmra.mrb[0].mxu0 %v1025
      %v1679 = vpop.f32.mrb[0].mxu0
      %v1680 = vadd.f32 0.0, %v1679
      %v1681 = vpop.f32.mrb[0].mxu0
      %1682 = vmatprep.mubr.f32.mxu0 0.0
      %1683 = vmatmul.mubr.f32.gmra.mrb[0].mxu0 %v1026
      %v1684 = vpop.f32.mrb[0].mxu0
      %v1685 = vadd.f32 0.0, %v1684
      %v1686 = vpop.f32.mrb[0].mxu0
      %1687 = vmatprep.mubr.f32.mxu0 0.0
      %1688 = vmatmul.mubr.f32.gmra.mrb[0].mxu0 %v1027
      %v1689 = vpop.f32.mrb[0].mxu0
      %v1690 = vadd.f32 0.0, %v1689
      %v1691 = vpop.f32.mrb[0].mxu0
      %1692 = vmatprep.mubr.f32.mxu0 0.0
      %1693 = vmatmul.mubr.f32.gmra.mrb[0].mxu0 %v1028
      %v1694 = vpop.f32.mrb[0].mxu0
      %v1695 = vadd.f32 0.0, %v1694
      %v1696 = vpop.f32.mrb[0].mxu0
      %1697 = vmatprep.mubr.f32.mxu0 0.0
      %1698 = vmatmul.mubr.f32.gmra.mrb[0].mxu0 %v1029
      %v1699 = vpop.f32.mrb[0].mxu0
      %v1700 = vadd.f32 0.0, %v1699
      %v1701 = vpop.f32.mrb[0].mxu0
      %1702 = vmatprep.mubr.f32.mxu0 0.0
      %1703 = vmatmul.mubr.f32.gmra.mrb[0].mxu0 %v1030
      %v1704 = vpop.f32.mrb[0].mxu0
      %v1705 = vadd.f32 0.0, %v1704
      %v1706 = vpop.f32.mrb[0].mxu0
      %1707 = vmatprep.mubr.f32.mxu0 0.0
      %1708 = vmatmul.mubr.f32.gmra.mrb[0].mxu0 %v1031
      %v1709 = vpop.f32.mrb[0].mxu0
      %v1710 = vadd.f32 0.0, %v1709
      %v1711 = vpop.f32.mrb[0].mxu0
      %1712 = vmatprep.mubr.f32.mxu0 0.0
      %1713 = vmatmul.mubr.f32.gmra.mrb[0].mxu0 %v1032
      %v1714 = vpop.f32.mrb[0].mxu0
      %v1715 = vadd.f32 0.0, %v1714
      %v1716 = vpop.f32.mrb[0].mxu0
      %1717 = vmatprep.mubr.f32.mxu0 0.0
      %1718 = vmatmul.mubr.f32.gmra.mrb[0].mxu0 %v1033
      %v1719 = vpop.f32.mrb[0].mxu0
      %v1720 = vadd.f32 0.0, %v1719
      %v1721 = vpop.f32.mrb[0].mxu0
      %1722 = vmatprep.mubr.f32.mxu0 0.0
      %1723 = vmatmul.mubr.f32.gmra.mrb[0].mxu0 %v1034
      %v1724 = vpop.f32.mrb[0].mxu0
      %v1725 = vadd.f32 0.0, %v1724
      %v1726 = vpop.f32.mrb[0].mxu0
      %1727 = vmatprep.mubr.f32.mxu0 0.0
      %1728 = vmatmul.mubr.f32.gmra.mrb[0].mxu0 %v1035
      %v1729 = vpop.f32.mrb[0].mxu0
      %v1730 = vadd.f32 0.0, %v1729
      %v1731 = vpop.f32.mrb[0].mxu0
      %1732 = vmatprep.mubr.f32.mxu0 0.0
      %1733 = vmatmul.mubr.f32.gmra.mrb[0].mxu0 %v1036
      %v1734 = vpop.f32.mrb[0].mxu0
      %v1735 = vadd.f32 0.0, %v1734
      %v1736 = vpop.f32.mrb[0].mxu0
      %1737 = vmatprep.mubr.f32.mxu0 0.0
      %1738 = vmatmul.mubr.f32.gmra.mrb[0].mxu0 %v1037
      %v1739 = vpop.f32.mrb[0].mxu0
      %v1740 = vadd.f32 0.0, %v1739
      %v1741 = vpop.f32.mrb[0].mxu0
      %1742 = vmatprep.mubr.f32.mxu0 0.0
      %1743 = vmatmul.mubr.f32.gmra.mrb[0].mxu0 %v1038
      %v1744 = vpop.f32.mrb[0].mxu0
      %v1745 = vadd.f32 0.0, %v1744
      %v1746 = vpop.f32.mrb[0].mxu0
      %1747 = vmatprep.mubr.f32.mxu0 0.0
      %1748 = vmatmul.mubr.f32.gmra.mrb[0].mxu0 %v1039
      %v1749 = vpop.f32.mrb[0].mxu0
      %v1750 = vadd.f32 0.0, %v1749
      %v1751 = vpop.f32.mrb[0].mxu0
      %1752 = vmatprep.mubr.f32.mxu0 0.0
      %1753 = vmatmul.mubr.f32.gmra.mrb[0].mxu0 %v1040
      %v1754 = vpop.f32.mrb[0].mxu0
      %v1755 = vadd.f32 0.0, %v1754
      %v1756 = vpop.f32.mrb[0].mxu0
      %1757 = vmatprep.mubr.f32.mxu0 0.0
      %1758 = vmatmul.mubr.f32.gmra.mrb[0].mxu0 %v1041
      %v1759 = vpop.f32.mrb[0].mxu0
      %v1760 = vadd.f32 0.0, %v1759
      %v1761 = vpop.f32.mrb[0].mxu0
      %1762 = vmatprep.mubr.f32.mxu0 0.0
      %1763 = vmatmul.mubr.f32.gmra.mrb[0].mxu0 %v1042
      %v1764 = vpop.f32.mrb[0].mxu0
      %v1765 = vadd.f32 0.0, %v1764
      %v1766 = vpop.f32.mrb[0].mxu0
      %1767 = vmatprep.mubr.f32.mxu0 0.0
      %1768 = vmatmul.mubr.f32.gmra.mrb[0].mxu0 %v1043
      %v1769 = vpop.f32.mrb[0].mxu0
      %v1770 = vadd.f32 0.0, %v1769
      %v1771 = vpop.f32.mrb[0].mxu0
      %1772 = vmatprep.mubr.f32.mxu0 0.0
      %1773 = vmatmul.mubr.f32.gmra.mrb[0].mxu0 %v1044
      %v1774 = vpop.f32.mrb[0].mxu0
      %v1775 = vadd.f32 0.0, %v1774
      %v1776 = vpop.f32.mrb[0].mxu0
      %1777 = vmatprep.mubr.f32.mxu0 0.0
      %1778 = vmatmul.mubr.f32.gmra.mrb[0].mxu0 %v1045
      %v1779 = vpop.f32.mrb[0].mxu0
      %v1780 = vadd.f32 0.0, %v1779
      %v1781 = vpop.f32.mrb[0].mxu0
      %1782 = vmatprep.mubr.f32.mxu0 0.0
      %1783 = vmatmul.mubr.f32.gmra.mrb[0].mxu0 %v1046
      %v1784 = vpop.f32.mrb[0].mxu0
      %v1785 = vadd.f32 0.0, %v1784
      %v1786 = vpop.f32.mrb[0].mxu0
      %1787 = vmatprep.mubr.f32.mxu0 0.0
      %1788 = vmatmul.mubr.f32.gmra.mrb[0].mxu0 %v1047
      %v1789 = vpop.f32.mrb[0].mxu0
      %v1790 = vadd.f32 0.0, %v1789
      %v1791 = vpop.f32.mrb[0].mxu0
      %1792 = vmatprep.mubr.f32.mxu0 0.0
      %1793 = vmatmul.mubr.f32.gmra.mrb[0].mxu0 %v1048
      %v1794 = vpop.f32.mrb[0].mxu0
      %v1795 = vadd.f32 0.0, %v1794
      %v1796 = vpop.f32.mrb[0].mxu0
      %1797 = vmatprep.mubr.f32.mxu0 0.0
      %1798 = vmatmul.mubr.f32.gmra.mrb[0].mxu0 %v1049
      %v1799 = vpop.f32.mrb[0].mxu0
      %v1800 = vadd.f32 0.0, %v1799
      %v1801 = vpop.f32.mrb[0].mxu0
      %1802 = vmatprep.mubr.f32.mxu0 0.0
      %1803 = vmatmul.mubr.f32.gmra.mrb[0].mxu0 %v1050
      %v1804 = vpop.f32.mrb[0].mxu0
      %v1805 = vadd.f32 0.0, %v1804
      %v1806 = vpop.f32.mrb[0].mxu0
      %1807 = vmatprep.mubr.f32.mxu0 0.0
      %1808 = vmatmul.mubr.f32.gmra.mrb[0].mxu0 %v1051
      %v1809 = vpop.f32.mrb[0].mxu0
      %v1810 = vadd.f32 0.0, %v1809
      %v1811 = vpop.f32.mrb[0].mxu0
      %1812 = vmatprep.mubr.f32.mxu0 0.0
      %1813 = vmatmul.mubr.f32.gmra.mrb[0].mxu0 %v1052
      %v1814 = vpop.f32.mrb[0].mxu0
      %v1815 = vadd.f32 0.0, %v1814
      %v1816 = vpop.f32.mrb[0].mxu0
      %1817 = vmatprep.mubr.f32.mxu0 0.0
      %1818 = vmatmul.mubr.f32.gmra.mrb[0].mxu0 %v1053
      %v1819 = vpop.f32.mrb[0].mxu0
      %v1820 = vadd.f32 0.0, %v1819
      %v1821 = vpop.f32.mrb[0].mxu0
      %1822 = vmatprep.mubr.f32.mxu0 0.0
      %1823 = vmatmul.mubr.f32.gmra.mrb[0].mxu0 %v1054
      %v1824 = vpop.f32.mrb[0].mxu0
      %v1825 = vadd.f32 0.0, %v1824
      %v1826 = vpop.f32.mrb[0].mxu0
      %1827 = vmatprep.mubr.f32.mxu0 0.0
      %1828 = vmatmul.mubr.f32.gmra.mrb[0].mxu0 %v1055
      %v1829 = vpop.f32.mrb[0].mxu0
      %v1830 = vadd.f32 0.0, %v1829
      %v1831 = vpop.f32.mrb[0].mxu0
      %1832 = vmatprep.mubr.f32.mxu0 0.0
      %1833 = vmatmul.mubr.f32.gmra.mrb[0].mxu0 %v1056
      %v1834 = vpop.f32.mrb[0].mxu0
      %v1835 = vadd.f32 0.0, %v1834
      %v1836 = vpop.f32.mrb[0].mxu0
      %1837 = vmatprep.mubr.f32.mxu0 0.0
      %1838 = vmatmul.mubr.f32.gmra.mrb[0].mxu0 %v1057
      %v1839 = vpop.f32.mrb[0].mxu0
      %v1840 = vadd.f32 0.0, %v1839
      %v1841 = vpop.f32.mrb[0].mxu0
      %1842 = vmatprep.mubr.f32.mxu0 0.0
      %1843 = vmatmul.mubr.f32.gmra.mrb[0].mxu0 %v1058
      %v1844 = vpop.f32.mrb[0].mxu0
      %v1845 = vadd.f32 0.0, %v1844
      %v1846 = vpop.f32.mrb[0].mxu0
      %1847 = vmatprep.mubr.f32.mxu0 0.0
      %1848 = vmatmul.mubr.f32.gmra.mrb[0].mxu0 %v1059
      %v1849 = vpop.f32.mrb[0].mxu0
      %v1850 = vadd.f32 0.0, %v1849
      %v1851 = vpop.f32.mrb[0].mxu0
      %1852 = vmatprep.mubr.f32.mxu0 0.0
      %1853 = vmatmul.mubr.f32.gmra.mrb[0].mxu0 %v1060
      %v1854 = vpop.f32.mrb[0].mxu0
      %v1855 = vadd.f32 0.0, %v1854
      %v1856 = vpop.f32.mrb[0].mxu0
      %1857 = vmatprep.mubr.f32.mxu0 0.0
      %1858 = vmatmul.mubr.f32.gmra.mrb[0].mxu0 %v1061
      %v1859 = vpop.f32.mrb[0].mxu0
      %v1860 = vadd.f32 0.0, %v1859
      %v1861 = vpop.f32.mrb[0].mxu0
      %1862 = vmatprep.mubr.f32.mxu0 0.0
      %1863 = vmatmul.mubr.f32.gmra.mrb[0].mxu0 %v1062
      %v1864 = vpop.f32.mrb[0].mxu0
      %v1865 = vadd.f32 0.0, %v1864
      %v1866 = vpop.f32.mrb[0].mxu0
      %1867 = vmatprep.mubr.f32.mxu0 0.0
      %1868 = vmatmul.mubr.f32.gmra.mrb[0].mxu0 %v1063
      %v1869 = vpop.f32.mrb[0].mxu0
      %v1870 = vadd.f32 0.0, %v1869
      %v1871 = vpop.f32.mrb[0].mxu0
      %1872 = vmatprep.mubr.f32.mxu0 0.0
      %1873 = vmatmul.mubr.f32.gmra.mrb[0].mxu0 %v1064
      %v1874 = vpop.f32.mrb[0].mxu0
      %v1875 = vadd.f32 0.0, %v1874
      %v1876 = vpop.f32.mrb[0].mxu0
      %1877 = vmatprep.mubr.f32.mxu0 0.0
      %1878 = vmatmul.mubr.f32.gmra.mrb[0].mxu0 %v1065
      %v1879 = vpop.f32.mrb[0].mxu0
      %v1880 = vadd.f32 0.0, %v1879
      %v1881 = vpop.f32.mrb[0].mxu0
      %1882 = vmatprep.mubr.f32.mxu0 0.0
      %1883 = vmatmul.mubr.f32.gmra.mrb[0].mxu0 %v1066
      %v1884 = vpop.f32.mrb[0].mxu0
      %v1885 = vadd.f32 0.0, %v1884
      %v1886 = vpop.f32.mrb[0].mxu0
      %1887 = vmatprep.mubr.f32.mxu0 0.0
      %1888 = vmatmul.mubr.f32.gmra.mrb[0].mxu0 %v1067
      %v1889 = vpop.f32.mrb[0].mxu0
      %v1890 = vadd.f32 0.0, %v1889
      %v1891 = vpop.f32.mrb[0].mxu0
      %1892 = vmatprep.mubr.f32.mxu0 0.0
      %1893 = vmatmul.mubr.f32.gmra.mrb[0].mxu0 %v1068
      %v1894 = vpop.f32.mrb[0].mxu0
      %v1895 = vadd.f32 0.0, %v1894
      %v1896 = vpop.f32.mrb[0].mxu0
      %1897 = vmatprep.mubr.f32.mxu0 0.0
      %1898 = vmatmul.mubr.f32.gmra.mrb[0].mxu0 %v1069
      %v1899 = vpop.f32.mrb[0].mxu0
      %v1900 = vadd.f32 0.0, %v1899
      %v1901 = vpop.f32.mrb[0].mxu0
      %1902 = vmatprep.mubr.f32.mxu0 0.0
      %1903 = vmatmul.mubr.f32.gmra.mrb[0].mxu0 %v1070
      %v1904 = vpop.f32.mrb[0].mxu0
      %v1905 = vadd.f32 0.0, %v1904
      %v1906 = vpop.f32.mrb[0].mxu0
      %1907 = vmatprep.mubr.f32.mxu0 0.0
      %1908 = vmatmul.mubr.f32.gmra.mrb[0].mxu0 %v1071
      %v1909 = vpop.f32.mrb[0].mxu0
      %v1910 = vadd.f32 0.0, %v1909
      %v1911 = vpop.f32.mrb[0].mxu0
      %1912 = vmatprep.mubr.f32.mxu0 0.0
      %1913 = vmatmul.mubr.f32.gmra.mrb[0].mxu0 %v1072
      %v1914 = vpop.f32.mrb[0].mxu0
      %v1915 = vadd.f32 0.0, %v1914
      %v1916 = vpop.f32.mrb[0].mxu0
      %1917 = vmatprep.mubr.f32.mxu0 0.0
      %1918 = vmatmul.mubr.f32.gmra.mrb[0].mxu0 %v1073
      %v1919 = vpop.f32.mrb[0].mxu0
      %v1920 = vadd.f32 0.0, %v1919
      %v1921 = vpop.f32.mrb[0].mxu0
      %1922 = vmatprep.mubr.f32.mxu0 0.0
      %1923 = vmatmul.mubr.f32.gmra.mrb[0].mxu0 %v1074
      %v1924 = vpop.f32.mrb[0].mxu0
      %v1925 = vadd.f32 0.0, %v1924
      %v1926 = vpop.f32.mrb[0].mxu0
      %1927 = vmatprep.mubr.f32.mxu0 0.0
      %1928 = vmatmul.mubr.f32.gmra.mrb[0].mxu0 %v1075
      %v1929 = vpop.f32.mrb[0].mxu0
      %v1930 = vadd.f32 0.0, %v1929
      %v1931 = vpop.f32.mrb[0].mxu0
      %1932 = vmatprep.mubr.f32.mxu0 0.0
      %1933 = vmatmul.mubr.f32.gmra.mrb[0].mxu0 %v1076
      %v1934 = vpop.f32.mrb[0].mxu0
      %v1935 = vadd.f32 0.0, %v1934
      %v1936 = vpop.f32.mrb[0].mxu0
      %1937 = vmatprep.mubr.f32.mxu0 0.0
      %1938 = vmatmul.mubr.f32.gmra.mrb[0].mxu0 %v1077
      %v1939 = vpop.f32.mrb[0].mxu0
      %v1940 = vadd.f32 0.0, %v1939
      %v1941 = vpop.f32.mrb[0].mxu0
      %1942 = vmatprep.mubr.f32.mxu0 0.0
      %1943 = vmatmul.mubr.f32.gmra.mrb[0].mxu0 %v1078
      %v1944 = vpop.f32.mrb[0].mxu0
      %v1945 = vadd.f32 0.0, %v1944
      %v1946 = vpop.f32.mrb[0].mxu0
      %1947 = vmatprep.mubr.f32.mxu0 0.0
      %1948 = vmatmul.mubr.f32.gmra.mrb[0].mxu0 %v1079
      %v1949 = vpop.f32.mrb[0].mxu0
      %v1950 = vadd.f32 0.0, %v1949
      %v1951 = vpop.f32.mrb[0].mxu0
      %1952 = vmatprep.mubr.f32.mxu0 0.0
      %1953 = vmatmul.mubr.f32.gmra.mrb[0].mxu0 %v1080
      %v1954 = vpop.f32.mrb[0].mxu0
      %v1955 = vadd.f32 0.0, %v1954
      %v1956 = vpop.f32.mrb[0].mxu0
      %1957 = vmatprep.mubr.f32.mxu0 0.0
      %1958 = vmatmul.mubr.f32.gmra.mrb[0].mxu0 %v1081
      %v1959 = vpop.f32.mrb[0].mxu0
      %v1960 = vadd.f32 0.0, %v1959
      %v1961 = vpop.f32.mrb[0].mxu0
      %1962 = vmatprep.mubr.f32.mxu0 0.0
      %1963 = vmatmul.mubr.f32.gmra.mrb[0].mxu0 %v1082
      %v1964 = vpop.f32.mrb[0].mxu0
      %v1965 = vadd.f32 0.0, %v1964
      %v1966 = vpop.f32.mrb[0].mxu0
      %1967 = vmatprep.mubr.f32.mxu0 0.0
      %1968 = vmatmul.mubr.f32.gmra.mrb[0].mxu0 %v1083
      %v1969 = vpop.f32.mrb[0].mxu0
      %v1970 = vadd.f32 0.0, %v1969
      %v1971 = vpop.f32.mrb[0].mxu0
      %1972 = vmatprep.mubr.f32.mxu0 0.0
      %1973 = vmatmul.mubr.f32.gmra.mrb[0].mxu0 %v1084
      %v1974 = vpop.f32.mrb[0].mxu0
      %v1975 = vadd.f32 0.0, %v1974
      %v1976 = vpop.f32.mrb[0].mxu0
      %1977 = vmatprep.mubr.f32.mxu0 0.0
      %1978 = vmatmul.mubr.f32.gmra.mrb[0].mxu0 %v1085
      %v1979 = vpop.f32.mrb[0].mxu0
      %v1980 = vadd.f32 0.0, %v1979
      %v1981 = vpop.f32.mrb[0].mxu0
      %1982 = vmatprep.mubr.f32.mxu0 0.0
      %1983 = vmatmul.mubr.f32.gmra.mrb[0].mxu0 %v1086
      %v1984 = vpop.f32.mrb[0].mxu0
      %v1985 = vadd.f32 0.0, %v1984
      %v1986 = vpop.f32.mrb[0].mxu0
      %1987 = vmatprep.mubr.f32.mxu0 0.0
      %1988 = vmatmul.mubr.f32.gmra.mrb[0].mxu0 %v1087
      %v1989 = vpop.f32.mrb[0].mxu0
      %v1990 = vadd.f32 0.0, %v1989
      %v1991 = vpop.f32.mrb[0].mxu0
      %1992 = vmatprep.mubr.f32.mxu0 0.0
      %1993 = vmatmul.mubr.f32.gmra.mrb[0].mxu0 %v1088
      %v1994 = vpop.f32.mrb[0].mxu0
      %v1995 = vadd.f32 0.0, %v1994
      %v1996 = vpop.f32.mrb[0].mxu0
      %1997 = vmatprep.mubr.f32.mxu0 0.0
      %1998 = vmatmul.mubr.f32.gmra.mrb[0].mxu0 %v1089
      %v1999 = vpop.f32.mrb[0].mxu0
      %v2000 = vadd.f32 0.0, %v1999
      %v2001 = vpop.f32.mrb[0].mxu0
      %2002 = vmatprep.mubr.f32.mxu0 0.0
      %2003 = vmatmul.mubr.f32.gmra.mrb[0].mxu0 %v1090
      %v2004 = vpop.f32.mrb[0].mxu0
      %v2005 = vadd.f32 0.0, %v2004
      %v2006 = vpop.f32.mrb[0].mxu0
      %2007 = vmatprep.mubr.f32.mxu0 0.0
      %2008 = vmatmul.mubr.f32.gmra.mrb[0].mxu0 %v1091
      %v2009 = vpop.f32.mrb[0].mxu0
      %v2010 = vadd.f32 0.0, %v2009
      %v2011 = vpop.f32.mrb[0].mxu0
      %2012 = vmatprep.mubr.f32.mxu0 0.0
      %2013 = vmatmul.mubr.f32.gmra.mrb[0].mxu0 %v1092
      %v2014 = vpop.f32.mrb[0].mxu0
      %v2015 = vadd.f32 0.0, %v2014
      %v2016 = vpop.f32.mrb[0].mxu0
      %2017 = vmatprep.mubr.f32.mxu0 0.0
      %2018 = vmatmul.mubr.f32.gmra.mrb[0].mxu0 %v1093
      %v2019 = vpop.f32.mrb[0].mxu0
      %v2020 = vadd.f32 0.0, %v2019
      %v2021 = vpop.f32.mrb[0].mxu0
      %2022 = vmatprep.mubr.f32.mxu0 0.0
      %2023 = vmatmul.mubr.f32.gmra.mrb[0].mxu0 %v1094
      %v2024 = vpop.f32.mrb[0].mxu0
      %v2025 = vadd.f32 0.0, %v2024
      %v2026 = vpop.f32.mrb[0].mxu0
      %2027 = vmatprep.mubr.f32.mxu0 0.0
      %2028 = vmatmul.mubr.f32.gmra.mrb[0].mxu0 %v1095
      %v2029 = vpop.f32.mrb[0].mxu0
      %v2030 = vadd.f32 0.0, %v2029
      %v2031 = vpop.f32.mrb[0].mxu0
      %2032 = vmatprep.mubr.f32.mxu0 0.0
      %2033 = vmatmul.mubr.f32.gmra.mrb[0].mxu0 %v1096
      %v2034 = vpop.f32.mrb[0].mxu0
      %v2035 = vadd.f32 0.0, %v2034
      %v2036 = vpop.f32.mrb[0].mxu0
      %2037 = vmatprep.mubr.f32.mxu0 0.0
      %2038 = vmatmul.mubr.f32.gmra.mrb[0].mxu0 %v1097
      %v2039 = vpop.f32.mrb[0].mxu0
      %v2040 = vadd.f32 0.0, %v2039
      %v2041 = vpop.f32.mrb[0].mxu0
      %2042 = vmatprep.mubr.f32.mxu0 0.0
      %2043 = vmatmul.mubr.f32.gmra.mrb[0].mxu0 %v1098
      %v2044 = vpop.f32.mrb[0].mxu0
      %v2045 = vadd.f32 0.0, %v2044
      %v2046 = vpop.f32.mrb[0].mxu0
      %2047 = vmatprep.mubr.f32.mxu0 0.0
      %2048 = vmatmul.mubr.f32.gmra.mrb[0].mxu0 %v1099
      %v2049 = vpop.f32.mrb[0].mxu0
      %v2050 = vadd.f32 0.0, %v2049
      %v2051 = vpop.f32.mrb[0].mxu0
      %2052 = vmatprep.mubr.f32.mxu0 0.0
      %2053 = vmatmul.mubr.f32.gmra.mrb[0].mxu0 %v1100
      %v2054 = vpop.f32.mrb[0].mxu0
      %v2055 = vadd.f32 0.0, %v2054
      %v2056 = vpop.f32.mrb[0].mxu0
      %2057 = vmatprep.mubr.f32.mxu0 0.0
      %2058 = vmatmul.mubr.f32.gmra.mrb[0].mxu0 %v1101
      %v2059 = vpop.f32.mrb[0].mxu0
      %v2060 = vadd.f32 0.0, %v2059
      %v2061 = vpop.f32.mrb[0].mxu0
      %2062 = vmatprep.mubr.f32.mxu0 0.0
      %2063 = vmatmul.mubr.f32.gmra.mrb[0].mxu0 %v1102
      %v2064 = vpop.f32.mrb[0].mxu0
      %v2065 = vadd.f32 0.0, %v2064
      %v2066 = vpop.f32.mrb[0].mxu0
      %2067 = vmatprep.mubr.f32.mxu0 0.0
      %2068 = vmatmul.mubr.f32.gmra.mrb[0].mxu0 %v1103
      %v2069 = vpop.f32.mrb[0].mxu0
      %v2070 = vadd.f32 0.0, %v2069
      %v2071 = vpop.f32.mrb[0].mxu0
      %2072 = vmatprep.mubr.f32.mxu0 0.0
      %2073 = vmatmul.mubr.f32.gmra.mrb[0].mxu0 %v1104
      %v2074 = vpop.f32.mrb[0].mxu0
      %v2075 = vadd.f32 0.0, %v2074
      %v2076 = vpop.f32.mrb[0].mxu0
      %2077 = vmatprep.mubr.f32.mxu0 0.0
      %2078 = vmatmul.mubr.f32.gmra.mrb[0].mxu0 %v1105
      %v2079 = vpop.f32.mrb[0].mxu0
      %v2080 = vadd.f32 0.0, %v2079
      %v2081 = vpop.f32.mrb[0].mxu0
      %2082 = vmatprep.mubr.f32.mxu0 0.0
      %2083 = vmatmul.mubr.f32.gmra.mrb[0].mxu0 %v1106
      %v2084 = vpop.f32.mrb[0].mxu0
      %v2085 = vadd.f32 0.0, %v2084
      %v2086 = vpop.f32.mrb[0].mxu0
      %2087 = vmatprep.mubr.f32.mxu0 0.0
      %2088 = vmatmul.mubr.f32.gmra.mrb[0].mxu0 %v1107
      %v2089 = vpop.f32.mrb[0].mxu0
      %v2090 = vadd.f32 0.0, %v2089
      %v2091 = vpop.f32.mrb[0].mxu0
      %2092 = vmatprep.mubr.f32.mxu0 0.0
      %2093 = vmatmul.mubr.f32.gmra.mrb[0].mxu0 %v1108
      %v2094 = vpop.f32.mrb[0].mxu0
      %v2095 = vadd.f32 0.0, %v2094
      %v2096 = vpop.f32.mrb[0].mxu0
      %2097 = vmatprep.mubr.f32.mxu0 0.0
      %2098 = vmatmul.mubr.f32.gmra.mrb[0].mxu0 %v1109
      %v2099 = vpop.f32.mrb[0].mxu0
      %v2100 = vadd.f32 0.0, %v2099
      %v2101 = vpop.f32.mrb[0].mxu0
      %2102 = vmatprep.mubr.f32.mxu0 0.0
      %2103 = vmatmul.mubr.f32.gmra.mrb[0].mxu0 %v1110
      %v2104 = vpop.f32.mrb[0].mxu0
      %v2105 = vadd.f32 0.0, %v2104
      %v2106 = vpop.f32.mrb[0].mxu0
      %2107 = vmatprep.mubr.f32.mxu0 0.0
      %2108 = vmatmul.mubr.f32.gmra.mrb[0].mxu0 %v1111
      %v2109 = vpop.f32.mrb[0].mxu0
      %v2110 = vadd.f32 0.0, %v2109
      %v2111 = vpop.f32.mrb[0].mxu0
      %2112 = vmatprep.mubr.f32.mxu0 0.0
      %2113 = vmatmul.mubr.f32.gmra.mrb[0].mxu0 %v1112
      %v2114 = vpop.f32.mrb[0].mxu0
      %v2115 = vadd.f32 0.0, %v2114
      %v2116 = vpop.f32.mrb[0].mxu0
      %2117 = vmatprep.mubr.f32.mxu0 0.0
      %2118 = vmatmul.mubr.f32.gmra.mrb[0].mxu0 %v1113
      %v2119 = vpop.f32.mrb[0].mxu0
      %v2120 = vadd.f32 0.0, %v2119
      %v2121 = vpop.f32.mrb[0].mxu0
      %2122 = vmatprep.mubr.f32.mxu0 0.0
      %2123 = vmatmul.mubr.f32.gmra.mrb[0].mxu0 %v1114
      %v2124 = vpop.f32.mrb[0].mxu0
      %v2125 = vadd.f32 0.0, %v2124
      %v2126 = vpop.f32.mrb[0].mxu0
      %2127 = vmatprep.mubr.f32.mxu0 0.0
      %2128 = vmatmul.mubr.f32.gmra.mrb[0].mxu0 %v1115
      %v2129 = vpop.f32.mrb[0].mxu0
      %v2130 = vadd.f32 0.0, %v2129
      %v2131 = vpop.f32.mrb[0].mxu0
      %2132 = vmatprep.mubr.f32.mxu0 0.0
      %2133 = vmatmul.mubr.f32.gmra.mrb[0].mxu0 %v1116
      %v2134 = vpop.f32.mrb[0].mxu0
      %v2135 = vadd.f32 0.0, %v2134
      %v2136 = vpop.f32.mrb[0].mxu0
      %2137 = vmatprep.mubr.f32.mxu0 0.0
      %2138 = vmatmul.mubr.f32.gmra.mrb[0].mxu0 %v1117
      %v2139 = vpop.f32.mrb[0].mxu0
      %v2140 = vadd.f32 0.0, %v2139
      %v2141 = vpop.f32.mrb[0].mxu0
      %2142 = vmatprep.mubr.f32.mxu0 0.0
      %2143 = vmatmul.mubr.f32.gmra.mrb[0].mxu0 %v1118
      %v2144 = vpop.f32.mrb[0].mxu0
      %v2145 = vadd.f32 0.0, %v2144
      %v2146 = vpop.f32.mrb[0].mxu0
      %2147 = vmatprep.mubr.f32.mxu0 0.0
      %2148 = vmatmul.mubr.f32.gmra.mrb[0].mxu0 %v1119
      %v2149 = vpop.f32.mrb[0].mxu0
      %v2150 = vadd.f32 0.0, %v2149
      %v2151 = vpop.f32.mrb[0].mxu0
      %2152 = vmatprep.mubr.f32.mxu0 0.0
      %2153 = vmatmul.mubr.f32.gmra.mrb[0].mxu0 %v1120
      %v2154 = vpop.f32.mrb[0].mxu0
      %v2155 = vadd.f32 0.0, %v2154
      %v2156 = vpop.f32.mrb[0].mxu0
      %2157 = vdwg.mxu0
      %v2320 = vcombine.high %v1350, %v1350
      %v2321 = vcombine.high %v1355, %v1355
      %v2322 = vcombine.high %v1360, %v1360
      %v2323 = vcombine.high %v1365, %v1365
      %v2324 = vcombine.high %v1370, %v1370
      %v2325 = vcombine.high %v1375, %v1375
      %v2326 = vcombine.high %v1380, %v1380
      %v2327 = vcombine.high %v1385, %v1385
      %v2328 = vcombine.high %v1390, %v1390
      %v2329 = vcombine.high %v1395, %v1395
      %v2330 = vcombine.high %v1400, %v1400
      %v2331 = vcombine.high %v1405, %v1405
      %v2332 = vcombine.high %v1410, %v1410
      %v2333 = vcombine.high %v1415, %v1415
      %v2334 = vcombine.high %v1420, %v1420
      %v2335 = vcombine.high %v1425, %v1425
      %v2336 = vcombine.high %v1430, %v1430
      %v2337 = vcombine.high %v1435, %v1435
      %v2338 = vcombine.high %v1440, %v1440
      %v2339 = vcombine.high %v1445, %v1445
      %v2340 = vcombine.high %v1450, %v1450
      %v2341 = vcombine.high %v1455, %v1455
      %v2342 = vcombine.high %v1460, %v1460
      %v2343 = vcombine.high %v1465, %v1465
      %v2344 = vcombine.high %v1470, %v1470
      %v2345 = vcombine.high %v1475, %v1475
      %v2346 = vcombine.high %v1480, %v1480
      %v2347 = vcombine.high %v1485, %v1485
      %v2348 = vcombine.high %v1490, %v1490
      %v2349 = vcombine.high %v1495, %v1495
      %v2350 = vcombine.high %v1500, %v1500
      %v2351 = vcombine.high %v1505, %v1505
      %v2352 = vcombine.high %v1510, %v1510
      %v2353 = vcombine.high %v1515, %v1515
      %v2354 = vcombine.high %v1520, %v1520
      %v2355 = vcombine.high %v1525, %v1525
      %v2356 = vcombine.high %v1530, %v1530
      %v2357 = vcombine.high %v1535, %v1535
      %v2358 = vcombine.high %v1540, %v1540
      %v2359 = vcombine.high %v1545, %v1545
      %v2360 = vcombine.high %v1550, %v1550
      %v2361 = vcombine.high %v1555, %v1555
      %v2362 = vcombine.high %v1560, %v1560
      %v2363 = vcombine.high %v1565, %v1565
      %v2364 = vcombine.high %v1570, %v1570
      %v2365 = vcombine.high %v1575, %v1575
      %v2366 = vcombine.high %v1580, %v1580
      %v2367 = vcombine.high %v1585, %v1585
      %v2368 = vcombine.high %v1590, %v1590
      %v2369 = vcombine.high %v1595, %v1595
      %v2370 = vcombine.high %v1600, %v1600
      %v2371 = vcombine.high %v1605, %v1605
      %v2372 = vcombine.high %v1610, %v1610
      %v2373 = vcombine.high %v1615, %v1615
      %v2374 = vcombine.high %v1620, %v1620
      %v2375 = vcombine.high %v1625, %v1625
      %v2376 = vcombine.high %v1630, %v1630
      %v2377 = vcombine.high %v1635, %v1635
      %v2378 = vcombine.high %v1640, %v1640
      %v2379 = vcombine.high %v1645, %v1645
      %v2380 = vcombine.high %v1650, %v1650
      %v2381 = vcombine.high %v1655, %v1655
      %v2382 = vcombine.high %v1660, %v1660
      %v2383 = vcombine.high %v1665, %v1665
      %v2384 = vcombine.high %v1670, %v1670
      %v2385 = vcombine.high %v1675, %v1675
      %v2386 = vcombine.high %v1680, %v1680
      %v2387 = vcombine.high %v1685, %v1685
      %v2388 = vcombine.high %v1690, %v1690
      %v2389 = vcombine.high %v1695, %v1695
      %v2390 = vcombine.high %v1700, %v1700
      %v2391 = vcombine.high %v1705, %v1705
      %v2392 = vcombine.high %v1710, %v1710
      %v2393 = vcombine.high %v1715, %v1715
      %v2394 = vcombine.high %v1720, %v1720
      %v2395 = vcombine.high %v1725, %v1725
      %v2396 = vcombine.high %v1730, %v1730
      %v2397 = vcombine.high %v1735, %v1735
      %v2398 = vcombine.high %v1740, %v1740
      %v2399 = vcombine.high %v1745, %v1745
      %v2400 = vcombine.high %v1750, %v1750
      %v2401 = vcombine.high %v1755, %v1755
      %v2402 = vcombine.high %v1760, %v1760
      %v2403 = vcombine.high %v1765, %v1765
      %v2404 = vcombine.high %v1770, %v1770
      %v2405 = vcombine.high %v1775, %v1775
      %v2406 = vcombine.high %v1780, %v1780
      %v2407 = vcombine.high %v1785, %v1785
      %v2408 = vcombine.high %v1790, %v1790
      %v2409 = vcombine.high %v1795, %v1795
      %v2410 = vcombine.high %v1800, %v1800
      %v2411 = vcombine.high %v1805, %v1805
      %v2412 = vcombine.high %v1810, %v1810
      %v2413 = vcombine.high %v1815, %v1815
      %v2414 = vcombine.high %v1820, %v1820
      %v2415 = vcombine.high %v1825, %v1825
      %v2416 = vcombine.high %v1830, %v1830
      %v2417 = vcombine.high %v1835, %v1835
      %v2418 = vcombine.high %v1840, %v1840
      %v2419 = vcombine.high %v1845, %v1845
      %v2420 = vcombine.high %v1850, %v1850
      %v2421 = vcombine.high %v1855, %v1855
      %v2422 = vcombine.high %v1860, %v1860
      %v2423 = vcombine.high %v1865, %v1865
      %v2424 = vcombine.high %v1870, %v1870
      %v2425 = vcombine.high %v1875, %v1875
      %v2426 = vcombine.high %v1880, %v1880
      %v2427 = vcombine.high %v1885, %v1885
      %v2428 = vcombine.high %v1890, %v1890
      %v2429 = vcombine.high %v1895, %v1895
      %v2430 = vcombine.high %v1900, %v1900
      %v2431 = vcombine.high %v1905, %v1905
      %v2432 = vcombine.high %v1910, %v1910
      %v2433 = vcombine.high %v1915, %v1915
      %v2434 = vcombine.high %v1920, %v1920
      %v2435 = vcombine.high %v1925, %v1925
      %v2436 = vcombine.high %v1930, %v1930
      %v2437 = vcombine.high %v1935, %v1935
      %v2438 = vcombine.high %v1940, %v1940
      %v2439 = vcombine.high %v1945, %v1945
      %v2440 = vcombine.high %v1950, %v1950
      %v2441 = vcombine.high %v1955, %v1955
      %v2442 = vcombine.high %v1960, %v1960
      %v2443 = vcombine.high %v1965, %v1965
      %v2444 = vcombine.high %v1970, %v1970
      %v2445 = vcombine.high %v1975, %v1975
      %v2446 = vcombine.high %v1980, %v1980
      %v2447 = vcombine.high %v1985, %v1985
      %v2448 = vcombine.high %v1990, %v1990
      %v2449 = vcombine.high %v1995, %v1995
      %v2450 = vcombine.high %v2000, %v2000
      %v2451 = vcombine.high %v2005, %v2005
      %v2452 = vcombine.high %v2010, %v2010
      %v2453 = vcombine.high %v2015, %v2015
      %v2454 = vcombine.high %v2020, %v2020
      %v2455 = vcombine.high %v2025, %v2025
      %v2456 = vcombine.high %v2030, %v2030
      %v2457 = vcombine.high %v2035, %v2035
      %v2458 = vcombine.high %v2040, %v2040
      %v2459 = vcombine.high %v2045, %v2045
      %v2460 = vcombine.high %v2050, %v2050
      %v2461 = vcombine.high %v2055, %v2055
      %v2462 = vcombine.high %v2060, %v2060
      %v2463 = vcombine.high %v2065, %v2065
      %v2464 = vcombine.high %v2070, %v2070
      %v2465 = vcombine.high %v2075, %v2075
      %v2466 = vcombine.high %v2080, %v2080
      %v2467 = vcombine.high %v2085, %v2085
      %v2468 = vcombine.high %v2090, %v2090
      %v2469 = vcombine.high %v2095, %v2095
      %v2470 = vcombine.high %v2100, %v2100
      %v2471 = vcombine.high %v2105, %v2105
      %v2472 = vcombine.high %v2110, %v2110
      %v2473 = vcombine.high %v2115, %v2115
      %v2474 = vcombine.high %v2120, %v2120
      %v2475 = vcombine.high %v2125, %v2125
      %v2476 = vcombine.high %v2130, %v2130
      %v2477 = vcombine.high %v2135, %v2135
      %v2478 = vcombine.high %v2140, %v2140
      %v2479 = vcombine.high %v2145, %v2145
      %v2480 = vcombine.high %v2150, %v2150
      %v2481 = vcombine.high %v2155, %v2155
      %v2644 = vmax.f32 %v1350, %v2324
      %v2645 = vmax.f32 %v2320, %v1375
      %v2646 = vmax.f32 %v1355, %v2325
      %v2647 = vmax.f32 %v2321, %v1380
      %v2648 = vmax.f32 %v1360, %v2326
      %v2649 = vmax.f32 %v2322, %v1385
      %v2650 = vmax.f32 %v1365, %v2327
      %v2651 = vmax.f32 %v2323, %v1390
      %v2652 = vmax.f32 %v1370, %v2328
      %v2653 = vmax.f32 %v1395, %v2333
      %v2654 = vmax.f32 %v2329, %v1420
      %v2655 = vmax.f32 %v1400, %v2334
      %v2656 = vmax.f32 %v2330, %v1425
      %v2657 = vmax.f32 %v1405, %v2335
      %v2658 = vmax.f32 %v2331, %v1430
      %v2659 = vmax.f32 %v1410, %v2336
      %v2660 = vmax.f32 %v2332, %v1435
      %v2661 = vmax.f32 %v1415, %v2337
      %v2662 = vmax.f32 %v1440, %v2342
      %v2663 = vmax.f32 %v2338, %v1465
      %v2664 = vmax.f32 %v1445, %v2343
      %v2665 = vmax.f32 %v2339, %v1470
      %v2666 = vmax.f32 %v1450, %v2344
      %v2667 = vmax.f32 %v2340, %v1475
      %v2668 = vmax.f32 %v1455, %v2345
      %v2669 = vmax.f32 %v2341, %v1480
      %v2670 = vmax.f32 %v1460, %v2346
      %v2671 = vmax.f32 %v1485, %v2351
      %v2672 = vmax.f32 %v2347, %v1510
      %v2673 = vmax.f32 %v1490, %v2352
      %v2674 = vmax.f32 %v2348, %v1515
      %v2675 = vmax.f32 %v1495, %v2353
      %v2676 = vmax.f32 %v2349, %v1520
      %v2677 = vmax.f32 %v1500, %v2354
      %v2678 = vmax.f32 %v2350, %v1525
      %v2679 = vmax.f32 %v1505, %v2355
      %v2680 = vmax.f32 %v1530, %v2360
      %v2681 = vmax.f32 %v2356, %v1555
      %v2682 = vmax.f32 %v1535, %v2361
      %v2683 = vmax.f32 %v2357, %v1560
      %v2684 = vmax.f32 %v1540, %v2362
      %v2685 = vmax.f32 %v2358, %v1565
      %v2686 = vmax.f32 %v1545, %v2363
      %v2687 = vmax.f32 %v2359, %v1570
      %v2688 = vmax.f32 %v1550, %v2364
      %v2689 = vmax.f32 %v1575, %v2369
      %v2690 = vmax.f32 %v2365, %v1600
      %v2691 = vmax.f32 %v1580, %v2370
      %v2692 = vmax.f32 %v2366, %v1605
      %v2693 = vmax.f32 %v1585, %v2371
      %v2694 = vmax.f32 %v2367, %v1610
      %v2695 = vmax.f32 %v1590, %v2372
      %v2696 = vmax.f32 %v2368, %v1615
      %v2697 = vmax.f32 %v1595, %v2373
      %v2698 = vmax.f32 %v1620, %v2378
      %v2699 = vmax.f32 %v2374, %v1645
      %v2700 = vmax.f32 %v1625, %v2379
      %v2701 = vmax.f32 %v2375, %v1650
      %v2702 = vmax.f32 %v1630, %v2380
      %v2703 = vmax.f32 %v2376, %v1655
      %v2704 = vmax.f32 %v1635, %v2381
      %v2705 = vmax.f32 %v2377, %v1660
      %v2706 = vmax.f32 %v1640, %v2382
      %v2707 = vmax.f32 %v1665, %v2387
      %v2708 = vmax.f32 %v2383, %v1690
      %v2709 = vmax.f32 %v1670, %v2388
      %v2710 = vmax.f32 %v2384, %v1695
      %v2711 = vmax.f32 %v1675, %v2389
      %v2712 = vmax.f32 %v2385, %v1700
      %v2713 = vmax.f32 %v1680, %v2390
      %v2714 = vmax.f32 %v2386, %v1705
      %v2715 = vmax.f32 %v1685, %v2391
      %v2716 = vmax.f32 %v1710, %v2396
      %v2717 = vmax.f32 %v2392, %v1735
      %v2718 = vmax.f32 %v1715, %v2397
      %v2719 = vmax.f32 %v2393, %v1740
      %v2720 = vmax.f32 %v1720, %v2398
      %v2721 = vmax.f32 %v2394, %v1745
      %v2722 = vmax.f32 %v1725, %v2399
      %v2723 = vmax.f32 %v2395, %v1750
      %v2724 = vmax.f32 %v1730, %v2400
      %v2725 = vmax.f32 %v1755, %v2405
      %v2726 = vmax.f32 %v2401, %v1780
      %v2727 = vmax.f32 %v1760, %v2406
      %v2728 = vmax.f32 %v2402, %v1785
      %v2729 = vmax.f32 %v1765, %v2407
      %v2730 = vmax.f32 %v2403, %v1790
      %v2731 = vmax.f32 %v1770, %v2408
      %v2732 = vmax.f32 %v2404, %v1795
      %v2733 = vmax.f32 %v1775, %v2409
      %v2734 = vmax.f32 %v1800, %v2414
      %v2735 = vmax.f32 %v2410, %v1825
      %v2736 = vmax.f32 %v1805, %v2415
      %v2737 = vmax.f32 %v2411, %v1830
      %v2738 = vmax.f32 %v1810, %v2416
      %v2739 = vmax.f32 %v2412, %v1835
      %v2740 = vmax.f32 %v1815, %v2417
      %v2741 = vmax.f32 %v2413, %v1840
      %v2742 = vmax.f32 %v1820, %v2418
      %v2743 = vmax.f32 %v1845, %v2423
      %v2744 = vmax.f32 %v2419, %v1870
      %v2745 = vmax.f32 %v1850, %v2424
      %v2746 = vmax.f32 %v2420, %v1875
      %v2747 = vmax.f32 %v1855, %v2425
      %v2748 = vmax.f32 %v2421, %v1880
      %v2749 = vmax.f32 %v1860, %v2426
      %v2750 = vmax.f32 %v2422, %v1885
      %v2751 = vmax.f32 %v1865, %v2427
      %v2752 = vmax.f32 %v1890, %v2432
      %v2753 = vmax.f32 %v2428, %v1915
      %v2754 = vmax.f32 %v1895, %v2433
      %v2755 = vmax.f32 %v2429, %v1920
      %v2756 = vmax.f32 %v1900, %v2434
      %v2757 = vmax.f32 %v2430, %v1925
      %v2758 = vmax.f32 %v1905, %v2435
      %v2759 = vmax.f32 %v2431, %v1930
      %v2760 = vmax.f32 %v1910, %v2436
      %v2761 = vmax.f32 %v1935, %v2441
      %v2762 = vmax.f32 %v2437, %v1960
      %v2763 = vmax.f32 %v1940, %v2442
      %v2764 = vmax.f32 %v2438, %v1965
      %v2765 = vmax.f32 %v1945, %v2443
      %v2766 = vmax.f32 %v2439, %v1970
      %v2767 = vmax.f32 %v1950, %v2444
      %v2768 = vmax.f32 %v2440, %v1975
      %v2769 = vmax.f32 %v1955, %v2445
      %v2770 = vmax.f32 %v1980, %v2450
      %v2771 = vmax.f32 %v2446, %v2005
      %v2772 = vmax.f32 %v1985, %v2451
      %v2773 = vmax.f32 %v2447, %v2010
      %v2774 = vmax.f32 %v1990, %v2452
      %v2775 = vmax.f32 %v2448, %v2015
      %v2776 = vmax.f32 %v1995, %v2453
      %v2777 = vmax.f32 %v2449, %v2020
      %v2778 = vmax.f32 %v2000, %v2454
      %v2779 = vmax.f32 %v2025, %v2459
      %v2780 = vmax.f32 %v2455, %v2050
      %v2781 = vmax.f32 %v2030, %v2460
      %v2782 = vmax.f32 %v2456, %v2055
      %v2783 = vmax.f32 %v2035, %v2461
      %v2784 = vmax.f32 %v2457, %v2060
      %v2785 = vmax.f32 %v2040, %v2462
      %v2786 = vmax.f32 %v2458, %v2065
      %v2787 = vmax.f32 %v2045, %v2463
      %v2788 = vmax.f32 %v2070, %v2468
      %v2789 = vmax.f32 %v2464, %v2095
      %v2790 = vmax.f32 %v2075, %v2469
      %v2791 = vmax.f32 %v2465, %v2100
      %v2792 = vmax.f32 %v2080, %v2470
      %v2793 = vmax.f32 %v2466, %v2105
      %v2794 = vmax.f32 %v2085, %v2471
      %v2795 = vmax.f32 %v2467, %v2110
      %v2796 = vmax.f32 %v2090, %v2472
      %v2797 = vmax.f32 %v2115, %v2477
      %v2798 = vmax.f32 %v2473, %v2140
      %v2799 = vmax.f32 %v2120, %v2478
      %v2800 = vmax.f32 %v2474, %v2145
      %v2801 = vmax.f32 %v2125, %v2479
      %v2802 = vmax.f32 %v2475, %v2150
      %v2803 = vmax.f32 %v2130, %v2480
      %v2804 = vmax.f32 %v2476, %v2155
      %v2805 = vmax.f32 %v2135, %v2481
      %v2950 = vcombine.low %v2644, %v2645
      %v2951 = vcombine.low %v2646, %v2647
      %v2952 = vcombine.low %v2648, %v2649
      %v2953 = vcombine.low %v2650, %v2651
      %v2954 = vcombine.low %v2653, %v2654
      %v2955 = vcombine.low %v2655, %v2656
      %v2956 = vcombine.low %v2657, %v2658
      %v2957 = vcombine.low %v2659, %v2660
      %v2958 = vcombine.low %v2662, %v2663
      %v2959 = vcombine.low %v2664, %v2665
      %v2960 = vcombine.low %v2666, %v2667
      %v2961 = vcombine.low %v2668, %v2669
      %v2962 = vcombine.low %v2671, %v2672
      %v2963 = vcombine.low %v2673, %v2674
      %v2964 = vcombine.low %v2675, %v2676
      %v2965 = vcombine.low %v2677, %v2678
      %v2966 = vcombine.low %v2680, %v2681
      %v2967 = vcombine.low %v2682, %v2683
      %v2968 = vcombine.low %v2684, %v2685
      %v2969 = vcombine.low %v2686, %v2687
      %v2970 = vcombine.low %v2689, %v2690
      %v2971 = vcombine.low %v2691, %v2692
      %v2972 = vcombine.low %v2693, %v2694
      %v2973 = vcombine.low %v2695, %v2696
      %v2974 = vcombine.low %v2698, %v2699
      %v2975 = vcombine.low %v2700, %v2701
      %v2976 = vcombine.low %v2702, %v2703
      %v2977 = vcombine.low %v2704, %v2705
      %v2978 = vcombine.low %v2707, %v2708
      %v2979 = vcombine.low %v2709, %v2710
      %v2980 = vcombine.low %v2711, %v2712
      %v2981 = vcombine.low %v2713, %v2714
      %v2982 = vcombine.low %v2716, %v2717
      %v2983 = vcombine.low %v2718, %v2719
      %v2984 = vcombine.low %v2720, %v2721
      %v2985 = vcombine.low %v2722, %v2723
      %v2986 = vcombine.low %v2725, %v2726
      %v2987 = vcombine.low %v2727, %v2728
      %v2988 = vcombine.low %v2729, %v2730
      %v2989 = vcombine.low %v2731, %v2732
      %v2990 = vcombine.low %v2734, %v2735
      %v2991 = vcombine.low %v2736, %v2737
      %v2992 = vcombine.low %v2738, %v2739
      %v2993 = vcombine.low %v2740, %v2741
      %v2994 = vcombine.low %v2743, %v2744
      %v2995 = vcombine.low %v2745, %v2746
      %v2996 = vcombine.low %v2747, %v2748
      %v2997 = vcombine.low %v2749, %v2750
      %v2998 = vcombine.low %v2752, %v2753
      %v2999 = vcombine.low %v2754, %v2755
      %v3000 = vcombine.low %v2756, %v2757
      %v3001 = vcombine.low %v2758, %v2759
      %v3002 = vcombine.low %v2761, %v2762
      %v3003 = vcombine.low %v2763, %v2764
      %v3004 = vcombine.low %v2765, %v2766
      %v3005 = vcombine.low %v2767, %v2768
      %v3006 = vcombine.low %v2770, %v2771
      %v3007 = vcombine.low %v2772, %v2773
      %v3008 = vcombine.low %v2774, %v2775
      %v3009 = vcombine.low %v2776, %v2777
      %v3010 = vcombine.low %v2779, %v2780
      %v3011 = vcombine.low %v2781, %v2782
      %v3012 = vcombine.low %v2783, %v2784
      %v3013 = vcombine.low %v2785, %v2786
      %v3014 = vcombine.low %v2788, %v2789
      %v3015 = vcombine.low %v2790, %v2791
      %v3016 = vcombine.low %v2792, %v2793
      %v3017 = vcombine.low %v2794, %v2795
      %v3018 = vcombine.low %v2797, %v2798
      %v3019 = vcombine.low %v2799, %v2800
      %v3020 = vcombine.low %v2801, %v2802
      %v3021 = vcombine.low %v2803, %v2804
      %3094 = vst [vmem:[#allocation2] sm:$0xff] %v2950
      %3095 = vst [vmem:[#allocation2 + $0x8] sm:$0xff] %v2951
      %3096 = vst [vmem:[#allocation2 + $0x10] sm:$0xff] %v2952
      %3097 = vst [vmem:[#allocation2 + $0x18] sm:$0xff] %v2953
      %3098 = vst [vmem:[#allocation2 + $0x20] sm:$0xf] %v2652
      %3099 = vst [vmem:[#allocation2 + $0x28] sm:$0xff] %v2954
      %3100 = vst [vmem:[#allocation2 + $0x30] sm:$0xff] %v2955
      %3101 = vst [vmem:[#allocation2 + $0x38] sm:$0xff] %v2956
      %3102 = vst [vmem:[#allocation2 + $0x40] sm:$0xff] %v2957
      %3103 = vst [vmem:[#allocation2 + $0x48] sm:$0xf] %v2661
      %3104 = vst [vmem:[#allocation2 + $0x50] sm:$0xff] %v2958
      %3105 = vst [vmem:[#allocation2 + $0x58] sm:$0xff] %v2959
      %3106 = vst [vmem:[#allocation2 + $0x60] sm:$0xff] %v2960
      %3107 = vst [vmem:[#allocation2 + $0x68] sm:$0xff] %v2961
      %3108 = vst [vmem:[#allocation2 + $0x70] sm:$0xf] %v2670
      %3109 = vst [vmem:[#allocation2 + $0x78] sm:$0xff] %v2962
      %3110 = vst [vmem:[#allocation2 + $0x80] sm:$0xff] %v2963
      %3111 = vst [vmem:[#allocation2 + $0x88] sm:$0xff] %v2964
      %3112 = vst [vmem:[#allocation2 + $0x90] sm:$0xff] %v2965
      %3113 = vst [vmem:[#allocation2 + $0x98] sm:$0xf] %v2679
      %3114 = vst [vmem:[#allocation2 + $0xa0] sm:$0xff] %v2966
      %3115 = vst [vmem:[#allocation2 + $0xa8] sm:$0xff] %v2967
      %3116 = vst [vmem:[#allocation2 + $0xb0] sm:$0xff] %v2968
      %3117 = vst [vmem:[#allocation2 + $0xb8] sm:$0xff] %v2969
      %3118 = vst [vmem:[#allocation2 + $0xc0] sm:$0xf] %v2688
      %3119 = vst [vmem:[#allocation2 + $0xc8] sm:$0xff] %v2970
      %3120 = vst [vmem:[#allocation2 + $0xd0] sm:$0xff] %v2971
      %3121 = vst [vmem:[#allocation2 + $0xd8] sm:$0xff] %v2972
      %3122 = vst [vmem:[#allocation2 + $0xe0] sm:$0xff] %v2973
      %3123 = vst [vmem:[#allocation2 + $0xe8] sm:$0xf] %v2697
      %3124 = vst [vmem:[#allocation2 + $0xf0] sm:$0xff] %v2974
      %3125 = vst [vmem:[#allocation2 + $0xf8] sm:$0xff] %v2975
      %3126 = vst [vmem:[#allocation2 + $0x100] sm:$0xff] %v2976
      %3127 = vst [vmem:[#allocation2 + $0x108] sm:$0xff] %v2977
      %3128 = vst [vmem:[#allocation2 + $0x110] sm:$0xf] %v2706
      %3129 = vst [vmem:[#allocation2 + $0x118] sm:$0xff] %v2978
      %3130 = vst [vmem:[#allocation2 + $0x120] sm:$0xff] %v2979
      %3131 = vst [vmem:[#allocation2 + $0x128] sm:$0xff] %v2980
      %3132 = vst [vmem:[#allocation2 + $0x130] sm:$0xff] %v2981
      %3133 = vst [vmem:[#allocation2 + $0x138] sm:$0xf] %v2715
      %3134 = vst [vmem:[#allocation2 + $0x140] sm:$0xff] %v2982
      %3135 = vst [vmem:[#allocation2 + $0x148] sm:$0xff] %v2983
      %3136 = vst [vmem:[#allocation2 + $0x150] sm:$0xff] %v2984
      %3137 = vst [vmem:[#allocation2 + $0x158] sm:$0xff] %v2985
      %3138 = vst [vmem:[#allocation2 + $0x160] sm:$0xf] %v2724
      %3139 = vst [vmem:[#allocation2 + $0x168] sm:$0xff] %v2986
      %3140 = vst [vmem:[#allocation2 + $0x170] sm:$0xff] %v2987
      %3141 = vst [vmem:[#allocation2 + $0x178] sm:$0xff] %v2988
      %3142 = vst [vmem:[#allocation2 + $0x180] sm:$0xff] %v2989
      %3143 = vst [vmem:[#allocation2 + $0x188] sm:$0xf] %v2733
      %3144 = vst [vmem:[#allocation2 + $0x190] sm:$0xff] %v2990
      %3145 = vst [vmem:[#allocation2 + $0x198] sm:$0xff] %v2991
      %3146 = vst [vmem:[#allocation2 + $0x1a0] sm:$0xff] %v2992
      %3147 = vst [vmem:[#allocation2 + $0x1a8] sm:$0xff] %v2993
      %3148 = vst [vmem:[#allocation2 + $0x1b0] sm:$0xf] %v2742
      %3149 = vst [vmem:[#allocation2 + $0x1b8] sm:$0xff] %v2994
      %3150 = vst [vmem:[#allocation2 + $0x1c0] sm:$0xff] %v2995
      %3151 = vst [vmem:[#allocation2 + $0x1c8] sm:$0xff] %v2996
      %3152 = vst [vmem:[#allocation2 + $0x1d0] sm:$0xff] %v2997
      %3153 = vst [vmem:[#allocation2 + $0x1d8] sm:$0xf] %v2751
      %3154 = vst [vmem:[#allocation2 + $0x1e0] sm:$0xff] %v2998
      %3155 = vst [vmem:[#allocation2 + $0x1e8] sm:$0xff] %v2999
      %3156 = vst [vmem:[#allocation2 + $0x1f0] sm:$0xff] %v3000
      %3157 = vst [vmem:[#allocation2 + $0x1f8] sm:$0xff] %v3001
      %3158 = vst [vmem:[#allocation2 + $0x200] sm:$0xf] %v2760
      %3159 = vst [vmem:[#allocation2 + $0x208] sm:$0xff] %v3002
      %3160 = vst [vmem:[#allocation2 + $0x210] sm:$0xff] %v3003
      %3161 = vst [vmem:[#allocation2 + $0x218] sm:$0xff] %v3004
      %3162 = vst [vmem:[#allocation2 + $0x220] sm:$0xff] %v3005
      %3163 = vst [vmem:[#allocation2 + $0x228] sm:$0xf] %v2769
      %3164 = vst [vmem:[#allocation2 + $0x230] sm:$0xff] %v3006
      %3165 = vst [vmem:[#allocation2 + $0x238] sm:$0xff] %v3007
      %3166 = vst [vmem:[#allocation2 + $0x240] sm:$0xff] %v3008
      %3167 = vst [vmem:[#allocation2 + $0x248] sm:$0xff] %v3009
      %3168 = vst [vmem:[#allocation2 + $0x250] sm:$0xf] %v2778
      %3169 = vst [vmem:[#allocation2 + $0x258] sm:$0xff] %v3010
      %3170 = vst [vmem:[#allocation2 + $0x260] sm:$0xff] %v3011
      %3171 = vst [vmem:[#allocation2 + $0x268] sm:$0xff] %v3012
      %3172 = vst [vmem:[#allocation2 + $0x270] sm:$0xff] %v3013
      %3173 = vst [vmem:[#allocation2 + $0x278] sm:$0xf] %v2787
      %3174 = vst [vmem:[#allocation2 + $0x280] sm:$0xff] %v3014
      %3175 = vst [vmem:[#allocation2 + $0x288] sm:$0xff] %v3015
      %3176 = vst [vmem:[#allocation2 + $0x290] sm:$0xff] %v3016
      %3177 = vst [vmem:[#allocation2 + $0x298] sm:$0xff] %v3017
      %3178 = vst [vmem:[#allocation2 + $0x2a0] sm:$0xf] %v2796
      %3179 = vst [vmem:[#allocation2 + $0x2a8] sm:$0xff] %v3018
      %3180 = vst [vmem:[#allocation2 + $0x2b0] sm:$0xff] %v3019
      %3181 = vst [vmem:[#allocation2 + $0x2b8] sm:$0xff] %v3020
      %3182 = vst [vmem:[#allocation2 + $0x2c0] sm:$0xff] %v3021
      %3183 = vst [vmem:[#allocation2 + $0x2c8] sm:$0xf] %v2805
      %v3184 = vld [vmem:[#allocation2] ss:$2 sm:$0xff]
      %s3185 = scalar_lea.vmem [#allocation2], 16
      %v3186 = vld [vmem:[%s3185] ss:$2 sm:$0xff]
      %s3187 = scalar_lea.vmem [#allocation2], 32
      %v3188 = vld [vmem:[%s3187] ss:$2 sm:$0x3]
      %s3189 = scalar_lea.vmem [#allocation2], 40
      %v3190 = vld [vmem:[%s3189] ss:$2 sm:$0xff]
      %s3191 = scalar_lea.vmem [#allocation2], 56
      %v3192 = vld [vmem:[%s3191] ss:$2 sm:$0xff]
      %s3193 = scalar_lea.vmem [#allocation2], 72
      %v3194 = vld [vmem:[%s3193] ss:$2 sm:$0x3]
      %s3195 = scalar_lea.vmem [#allocation2], 80
      %v3196 = vld [vmem:[%s3195] ss:$2 sm:$0xff]
      %s3197 = scalar_lea.vmem [#allocation2], 96
      %v3198 = vld [vmem:[%s3197] ss:$2 sm:$0xff]
      %s3199 = scalar_lea.vmem [#allocation2], 112
      %v3200 = vld [vmem:[%s3199] ss:$2 sm:$0x3]
      %s3201 = scalar_lea.vmem [#allocation2], 120
      %v3202 = vld [vmem:[%s3201] ss:$2 sm:$0xff]
      %s3203 = scalar_lea.vmem [#allocation2], 136
      %v3204 = vld [vmem:[%s3203] ss:$2 sm:$0xff]
      %s3205 = scalar_lea.vmem [#allocation2], 152
      %v3206 = vld [vmem:[%s3205] ss:$2 sm:$0x3]
      %s3207 = scalar_lea.vmem [#allocation2], 160
      %v3208 = vld [vmem:[%s3207] ss:$2 sm:$0xff]
      %s3209 = scalar_lea.vmem [#allocation2], 176
      %v3210 = vld [vmem:[%s3209] ss:$2 sm:$0xff]
      %s3211 = scalar_lea.vmem [#allocation2], 192
      %v3212 = vld [vmem:[%s3211] ss:$2 sm:$0x3]
      %s3213 = scalar_lea.vmem [#allocation2], 200
      %v3214 = vld [vmem:[%s3213] ss:$2 sm:$0xff]
      %s3215 = scalar_lea.vmem [#allocation2], 216
      %v3216 = vld [vmem:[%s3215] ss:$2 sm:$0xff]
      %s3217 = scalar_lea.vmem [#allocation2], 232
      %v3218 = vld [vmem:[%s3217] ss:$2 sm:$0x3]
      %s3219 = scalar_lea.vmem [#allocation2], 240
      %v3220 = vld [vmem:[%s3219] ss:$2 sm:$0xff]
      %s3221 = scalar_lea.vmem [#allocation2], 256
      %v3222 = vld [vmem:[%s3221] ss:$2 sm:$0xff]
      %s3223 = scalar_lea.vmem [#allocation2], 272
      %v3224 = vld [vmem:[%s3223] ss:$2 sm:$0x3]
      %s3225 = scalar_lea.vmem [#allocation2], 280
      %v3226 = vld [vmem:[%s3225] ss:$2 sm:$0xff]
      %s3227 = scalar_lea.vmem [#allocation2], 296
      %v3228 = vld [vmem:[%s3227] ss:$2 sm:$0xff]
      %s3229 = scalar_lea.vmem [#allocation2], 312
      %v3230 = vld [vmem:[%s3229] ss:$2 sm:$0x3]
      %s3231 = scalar_lea.vmem [#allocation2], 320
      %v3232 = vld [vmem:[%s3231] ss:$2 sm:$0xff]
      %s3233 = scalar_lea.vmem [#allocation2], 336
      %v3234 = vld [vmem:[%s3233] ss:$2 sm:$0xff]
      %s3235 = scalar_lea.vmem [#allocation2], 352
      %v3236 = vld [vmem:[%s3235] ss:$2 sm:$0x3]
      %s3237 = scalar_lea.vmem [#allocation2], 360
      %v3238 = vld [vmem:[%s3237] ss:$2 sm:$0xff]
      %s3239 = scalar_lea.vmem [#allocation2], 376
      %v3240 = vld [vmem:[%s3239] ss:$2 sm:$0xff]
      %s3241 = scalar_lea.vmem [#allocation2], 392
      %v3242 = vld [vmem:[%s3241] ss:$2 sm:$0x3]
      %s3243 = scalar_lea.vmem [#allocation2], 400
      %v3244 = vld [vmem:[%s3243] ss:$2 sm:$0xff]
      %s3245 = scalar_lea.vmem [#allocation2], 416
      %v3246 = vld [vmem:[%s3245] ss:$2 sm:$0xff]
      %s3247 = scalar_lea.vmem [#allocation2], 432
      %v3248 = vld [vmem:[%s3247] ss:$2 sm:$0x3]
      %s3249 = scalar_lea.vmem [#allocation2], 440
      %v3250 = vld [vmem:[%s3249] ss:$2 sm:$0xff]
      %s3251 = scalar_lea.vmem [#allocation2], 456
      %v3252 = vld [vmem:[%s3251] ss:$2 sm:$0xff]
      %s3253 = scalar_lea.vmem [#allocation2], 472
      %v3254 = vld [vmem:[%s3253] ss:$2 sm:$0x3]
      %s3255 = scalar_lea.vmem [#allocation2], 480
      %v3256 = vld [vmem:[%s3255] ss:$2 sm:$0xff]
      %s3257 = scalar_lea.vmem [#allocation2], 496
      %v3258 = vld [vmem:[%s3257] ss:$2 sm:$0xff]
      %s3259 = scalar_lea.vmem [#allocation2], 512
      %v3260 = vld [vmem:[%s3259] ss:$2 sm:$0x3]
      %s3261 = scalar_lea.vmem [#allocation2], 520
      %v3262 = vld [vmem:[%s3261] ss:$2 sm:$0xff]
      %s3263 = scalar_lea.vmem [#allocation2], 536
      %v3264 = vld [vmem:[%s3263] ss:$2 sm:$0xff]
      %s3265 = scalar_lea.vmem [#allocation2], 552
      %v3266 = vld [vmem:[%s3265] ss:$2 sm:$0x3]
      %s3267 = scalar_lea.vmem [#allocation2], 560
      %v3268 = vld [vmem:[%s3267] ss:$2 sm:$0xff]
      %s3269 = scalar_lea.vmem [#allocation2], 576
      %v3270 = vld [vmem:[%s3269] ss:$2 sm:$0xff]
      %s3271 = scalar_lea.vmem [#allocation2], 592
      %v3272 = vld [vmem:[%s3271] ss:$2 sm:$0x3]
      %s3273 = scalar_lea.vmem [#allocation2], 600
      %v3274 = vld [vmem:[%s3273] ss:$2 sm:$0xff]
      %s3275 = scalar_lea.vmem [#allocation2], 616
      %v3276 = vld [vmem:[%s3275] ss:$2 sm:$0xff]
      %s3277 = scalar_lea.vmem [#allocation2], 632
      %v3278 = vld [vmem:[%s3277] ss:$2 sm:$0x3]
      %s3279 = scalar_lea.vmem [#allocation2], 640
      %v3280 = vld [vmem:[%s3279] ss:$2 sm:$0xff]
      %s3281 = scalar_lea.vmem [#allocation2], 656
      %v3282 = vld [vmem:[%s3281] ss:$2 sm:$0xff]
      %s3283 = scalar_lea.vmem [#allocation2], 672
      %v3284 = vld [vmem:[%s3283] ss:$2 sm:$0x3]
      %s3285 = scalar_lea.vmem [#allocation2], 680
      %v3286 = vld [vmem:[%s3285] ss:$2 sm:$0xff]
      %s3287 = scalar_lea.vmem [#allocation2], 696
      %v3288 = vld [vmem:[%s3287] ss:$2 sm:$0xff]
      %s3289 = scalar_lea.vmem [#allocation2], 712
      %v3290 = vld [vmem:[%s3289] ss:$2 sm:$0x3]
      %s3291 = scalar_lea.vmem [#allocation2], 1
      %v3292 = vld [vmem:[%s3291] ss:$2 sm:$0xff]
      %s3293 = scalar_lea.vmem [#allocation2], 17
      %v3294 = vld [vmem:[%s3293] ss:$2 sm:$0xff]
      %s3295 = scalar_lea.vmem [#allocation2], 33
      %v3296 = vld [vmem:[%s3295] ss:$2 sm:$0x3]
      %s3297 = scalar_lea.vmem [#allocation2], 41
      %v3298 = vld [vmem:[%s3297] ss:$2 sm:$0xff]
      %s3299 = scalar_lea.vmem [#allocation2], 57
      %v3300 = vld [vmem:[%s3299] ss:$2 sm:$0xff]
      %s3301 = scalar_lea.vmem [#allocation2], 73
      %v3302 = vld [vmem:[%s3301] ss:$2 sm:$0x3]
      %s3303 = scalar_lea.vmem [#allocation2], 81
      %v3304 = vld [vmem:[%s3303] ss:$2 sm:$0xff]
      %s3305 = scalar_lea.vmem [#allocation2], 97
      %v3306 = vld [vmem:[%s3305] ss:$2 sm:$0xff]
      %s3307 = scalar_lea.vmem [#allocation2], 113
      %v3308 = vld [vmem:[%s3307] ss:$2 sm:$0x3]
      %s3309 = scalar_lea.vmem [#allocation2], 121
      %v3310 = vld [vmem:[%s3309] ss:$2 sm:$0xff]
      %s3311 = scalar_lea.vmem [#allocation2], 137
      %v3312 = vld [vmem:[%s3311] ss:$2 sm:$0xff]
      %s3313 = scalar_lea.vmem [#allocation2], 153
      %v3314 = vld [vmem:[%s3313] ss:$2 sm:$0x3]
      %s3315 = scalar_lea.vmem [#allocation2], 161
      %v3316 = vld [vmem:[%s3315] ss:$2 sm:$0xff]
      %s3317 = scalar_lea.vmem [#allocation2], 177
      %v3318 = vld [vmem:[%s3317] ss:$2 sm:$0xff]
      %s3319 = scalar_lea.vmem [#allocation2], 193
      %v3320 = vld [vmem:[%s3319] ss:$2 sm:$0x3]
      %s3321 = scalar_lea.vmem [#allocation2], 201
      %v3322 = vld [vmem:[%s3321] ss:$2 sm:$0xff]
      %s3323 = scalar_lea.vmem [#allocation2], 217
      %v3324 = vld [vmem:[%s3323] ss:$2 sm:$0xff]
      %s3325 = scalar_lea.vmem [#allocation2], 233
      %v3326 = vld [vmem:[%s3325] ss:$2 sm:$0x3]
      %s3327 = scalar_lea.vmem [#allocation2], 241
      %v3328 = vld [vmem:[%s3327] ss:$2 sm:$0xff]
      %s3329 = scalar_lea.vmem [#allocation2], 257
      %v3330 = vld [vmem:[%s3329] ss:$2 sm:$0xff]
      %s3331 = scalar_lea.vmem [#allocation2], 273
      %v3332 = vld [vmem:[%s3331] ss:$2 sm:$0x3]
      %s3333 = scalar_lea.vmem [#allocation2], 281
      %v3334 = vld [vmem:[%s3333] ss:$2 sm:$0xff]
      %s3335 = scalar_lea.vmem [#allocation2], 297
      %v3336 = vld [vmem:[%s3335] ss:$2 sm:$0xff]
      %s3337 = scalar_lea.vmem [#allocation2], 313
      %v3338 = vld [vmem:[%s3337] ss:$2 sm:$0x3]
      %s3339 = scalar_lea.vmem [#allocation2], 321
      %v3340 = vld [vmem:[%s3339] ss:$2 sm:$0xff]
      %s3341 = scalar_lea.vmem [#allocation2], 337
      %v3342 = vld [vmem:[%s3341] ss:$2 sm:$0xff]
      %s3343 = scalar_lea.vmem [#allocation2], 353
      %v3344 = vld [vmem:[%s3343] ss:$2 sm:$0x3]
      %s3345 = scalar_lea.vmem [#allocation2], 361
      %v3346 = vld [vmem:[%s3345] ss:$2 sm:$0xff]
      %s3347 = scalar_lea.vmem [#allocation2], 377
      %v3348 = vld [vmem:[%s3347] ss:$2 sm:$0xff]
      %s3349 = scalar_lea.vmem [#allocation2], 393
      %v3350 = vld [vmem:[%s3349] ss:$2 sm:$0x3]
      %s3351 = scalar_lea.vmem [#allocation2], 401
      %v3352 = vld [vmem:[%s3351] ss:$2 sm:$0xff]
      %s3353 = scalar_lea.vmem [#allocation2], 417
      %v3354 = vld [vmem:[%s3353] ss:$2 sm:$0xff]
      %s3355 = scalar_lea.vmem [#allocation2], 433
      %v3356 = vld [vmem:[%s3355] ss:$2 sm:$0x3]
      %s3357 = scalar_lea.vmem [#allocation2], 441
      %v3358 = vld [vmem:[%s3357] ss:$2 sm:$0xff]
      %s3359 = scalar_lea.vmem [#allocation2], 457
      %v3360 = vld [vmem:[%s3359] ss:$2 sm:$0xff]
      %s3361 = scalar_lea.vmem [#allocation2], 473
      %v3362 = vld [vmem:[%s3361] ss:$2 sm:$0x3]
      %s3363 = scalar_lea.vmem [#allocation2], 481
      %v3364 = vld [vmem:[%s3363] ss:$2 sm:$0xff]
      %s3365 = scalar_lea.vmem [#allocation2], 497
      %v3366 = vld [vmem:[%s3365] ss:$2 sm:$0xff]
      %s3367 = scalar_lea.vmem [#allocation2], 513
      %v3368 = vld [vmem:[%s3367] ss:$2 sm:$0x3]
      %s3369 = scalar_lea.vmem [#allocation2], 521
      %v3370 = vld [vmem:[%s3369] ss:$2 sm:$0xff]
      %s3371 = scalar_lea.vmem [#allocation2], 537
      %v3372 = vld [vmem:[%s3371] ss:$2 sm:$0xff]
      %s3373 = scalar_lea.vmem [#allocation2], 553
      %v3374 = vld [vmem:[%s3373] ss:$2 sm:$0x3]
      %s3375 = scalar_lea.vmem [#allocation2], 561
      %v3376 = vld [vmem:[%s3375] ss:$2 sm:$0xff]
      %s3377 = scalar_lea.vmem [#allocation2], 577
      %v3378 = vld [vmem:[%s3377] ss:$2 sm:$0xff]
      %s3379 = scalar_lea.vmem [#allocation2], 593
      %v3380 = vld [vmem:[%s3379] ss:$2 sm:$0x3]
      %s3381 = scalar_lea.vmem [#allocation2], 601
      %v3382 = vld [vmem:[%s3381] ss:$2 sm:$0xff]
      %s3383 = scalar_lea.vmem [#allocation2], 617
      %v3384 = vld [vmem:[%s3383] ss:$2 sm:$0xff]
      %s3385 = scalar_lea.vmem [#allocation2], 633
      %v3386 = vld [vmem:[%s3385] ss:$2 sm:$0x3]
      %s3387 = scalar_lea.vmem [#allocation2], 641
      %v3388 = vld [vmem:[%s3387] ss:$2 sm:$0xff]
      %s3389 = scalar_lea.vmem [#allocation2], 657
      %v3390 = vld [vmem:[%s3389] ss:$2 sm:$0xff]
      %s3391 = scalar_lea.vmem [#allocation2], 673
      %v3392 = vld [vmem:[%s3391] ss:$2 sm:$0x3]
      %s3393 = scalar_lea.vmem [#allocation2], 681
      %v3394 = vld [vmem:[%s3393] ss:$2 sm:$0xff]
      %s3395 = scalar_lea.vmem [#allocation2], 697
      %v3396 = vld [vmem:[%s3395] ss:$2 sm:$0xff]
      %s3397 = scalar_lea.vmem [#allocation2], 713
      %v3398 = vld [vmem:[%s3397] ss:$2 sm:$0x3]
      %v3399 = vmax.f32 %v3184, %v3292
      %v3400 = vmax.f32 %v3186, %v3294
      %v3401 = vmax.f32 %v3188, %v3296
      %v3402 = vmax.f32 %v3190, %v3298
      %v3403 = vmax.f32 %v3192, %v3300
      %v3404 = vmax.f32 %v3194, %v3302
      %v3405 = vmax.f32 %v3196, %v3304
      %v3406 = vmax.f32 %v3198, %v3306
      %v3407 = vmax.f32 %v3200, %v3308
      %v3408 = vmax.f32 %v3202, %v3310
      %v3409 = vmax.f32 %v3204, %v3312
      %v3410 = vmax.f32 %v3206, %v3314
      %v3411 = vmax.f32 %v3208, %v3316
      %v3412 = vmax.f32 %v3210, %v3318
      %v3413 = vmax.f32 %v3212, %v3320
      %v3414 = vmax.f32 %v3214, %v3322
      %v3415 = vmax.f32 %v3216, %v3324
      %v3416 = vmax.f32 %v3218, %v3326
      %v3417 = vmax.f32 %v3220, %v3328
      %v3418 = vmax.f32 %v3222, %v3330
      %v3419 = vmax.f32 %v3224, %v3332
      %v3420 = vmax.f32 %v3226, %v3334
      %v3421 = vmax.f32 %v3228, %v3336
      %v3422 = vmax.f32 %v3230, %v3338
      %v3423 = vmax.f32 %v3232, %v3340
      %v3424 = vmax.f32 %v3234, %v3342
      %v3425 = vmax.f32 %v3236, %v3344
      %v3426 = vmax.f32 %v3238, %v3346
      %v3427 = vmax.f32 %v3240, %v3348
      %v3428 = vmax.f32 %v3242, %v3350
      %v3429 = vmax.f32 %v3244, %v3352
      %v3430 = vmax.f32 %v3246, %v3354
      %v3431 = vmax.f32 %v3248, %v3356
      %v3432 = vmax.f32 %v3250, %v3358
      %v3433 = vmax.f32 %v3252, %v3360
      %v3434 = vmax.f32 %v3254, %v3362
      %v3435 = vmax.f32 %v3256, %v3364
      %v3436 = vmax.f32 %v3258, %v3366
      %v3437 = vmax.f32 %v3260, %v3368
      %v3438 = vmax.f32 %v3262, %v3370
      %v3439 = vmax.f32 %v3264, %v3372
      %v3440 = vmax.f32 %v3266, %v3374
      %v3441 = vmax.f32 %v3268, %v3376
      %v3442 = vmax.f32 %v3270, %v3378
      %v3443 = vmax.f32 %v3272, %v3380
      %v3444 = vmax.f32 %v3274, %v3382
      %v3445 = vmax.f32 %v3276, %v3384
      %v3446 = vmax.f32 %v3278, %v3386
      %v3447 = vmax.f32 %v3280, %v3388
      %v3448 = vmax.f32 %v3282, %v3390
      %v3449 = vmax.f32 %v3284, %v3392
      %v3450 = vmax.f32 %v3286, %v3394
      %v3451 = vmax.f32 %v3288, %v3396
      %v3452 = vmax.f32 %v3290, %v3398
      %v3453 = vld [vmem:[%s2] sm:$0x1]
      %v3455 = vlaneseq
      %v3456 = vshrl.u32 %v3455, 7
      %v3457 = vsub.s32 0, %v3456
      %v3458 = vrot.slane %v3453, %v3457
      %v3460 = vadd.f32 %v3399, %v3458
      %v3461 = vadd.f32 %v3400, %v3458
      %v3462 = vadd.f32 %v3401, %v3458
      %v3463 = vadd.f32 %v3402, %v3458
      %v3464 = vadd.f32 %v3403, %v3458
      %v3465 = vadd.f32 %v3404, %v3458
      %v3466 = vadd.f32 %v3405, %v3458
      %v3467 = vadd.f32 %v3406, %v3458
      %v3468 = vadd.f32 %v3407, %v3458
      %v3469 = vadd.f32 %v3408, %v3458
      %v3470 = vadd.f32 %v3409, %v3458
      %v3471 = vadd.f32 %v3410, %v3458
      %v3472 = vadd.f32 %v3411, %v3458
      %v3473 = vadd.f32 %v3412, %v3458
      %v3474 = vadd.f32 %v3413, %v3458
      %v3475 = vadd.f32 %v3414, %v3458
      %v3476 = vadd.f32 %v3415, %v3458
      %v3477 = vadd.f32 %v3416, %v3458
      %v3478 = vadd.f32 %v3417, %v3458
      %v3479 = vadd.f32 %v3418, %v3458
      %v3480 = vadd.f32 %v3419, %v3458
      %v3481 = vadd.f32 %v3420, %v3458
      %v3482 = vadd.f32 %v3421, %v3458
      %v3483 = vadd.f32 %v3422, %v3458
      %v3484 = vadd.f32 %v3423, %v3458
      %v3485 = vadd.f32 %v3424, %v3458
      %v3486 = vadd.f32 %v3425, %v3458
      %v3487 = vadd.f32 %v3426, %v3458
      %v3488 = vadd.f32 %v3427, %v3458
      %v3489 = vadd.f32 %v3428, %v3458
      %v3490 = vadd.f32 %v3429, %v3458
      %v3491 = vadd.f32 %v3430, %v3458
      %v3492 = vadd.f32 %v3431, %v3458
      %v3493 = vadd.f32 %v3432, %v3458
      %v3494 = vadd.f32 %v3433, %v3458
      %v3495 = vadd.f32 %v3434, %v3458
      %v3496 = vadd.f32 %v3435, %v3458
      %v3497 = vadd.f32 %v3436, %v3458
      %v3498 = vadd.f32 %v3437, %v3458
      %v3499 = vadd.f32 %v3438, %v3458
      %v3500 = vadd.f32 %v3439, %v3458
      %v3501 = vadd.f32 %v3440, %v3458
      %v3502 = vadd.f32 %v3441, %v3458
      %v3503 = vadd.f32 %v3442, %v3458
      %v3504 = vadd.f32 %v3443, %v3458
      %v3505 = vadd.f32 %v3444, %v3458
      %v3506 = vadd.f32 %v3445, %v3458
      %v3507 = vadd.f32 %v3446, %v3458
      %v3508 = vadd.f32 %v3447, %v3458
      %v3509 = vadd.f32 %v3448, %v3458
      %v3510 = vadd.f32 %v3449, %v3458
      %v3511 = vadd.f32 %v3450, %v3458
      %v3512 = vadd.f32 %v3451, %v3458
      %v3513 = vadd.f32 %v3452, %v3458
      %v3514 = vtanh.pop %v3460
      %v3515 = vtanh.pop %v3461
      %v3516 = vtanh.pop %v3462
      %v3517 = vtanh.pop %v3463
      %v3518 = vtanh.pop %v3464
      %v3519 = vtanh.pop %v3465
      %v3520 = vtanh.pop %v3466
      %v3521 = vtanh.pop %v3467
      %v3522 = vtanh.pop %v3468
      %v3523 = vtanh.pop %v3469
      %v3524 = vtanh.pop %v3470
      %v3525 = vtanh.pop %v3471
      %v3526 = vtanh.pop %v3472
      %v3527 = vtanh.pop %v3473
      %v3528 = vtanh.pop %v3474
      %v3529 = vtanh.pop %v3475
      %v3530 = vtanh.pop %v3476
      %v3531 = vtanh.pop %v3477
      %v3532 = vtanh.pop %v3478
      %v3533 = vtanh.pop %v3479
      %v3534 = vtanh.pop %v3480
      %v3535 = vtanh.pop %v3481
      %v3536 = vtanh.pop %v3482
      %v3537 = vtanh.pop %v3483
      %v3538 = vtanh.pop %v3484
      %v3539 = vtanh.pop %v3485
      %v3540 = vtanh.pop %v3486
      %v3541 = vtanh.pop %v3487
      %v3542 = vtanh.pop %v3488
      %v3543 = vtanh.pop %v3489
      %v3544 = vtanh.pop %v3490
      %v3545 = vtanh.pop %v3491
      %v3546 = vtanh.pop %v3492
      %v3547 = vtanh.pop %v3493
      %v3548 = vtanh.pop %v3494
      %v3549 = vtanh.pop %v3495
      %v3550 = vtanh.pop %v3496
      %v3551 = vtanh.pop %v3497
      %v3552 = vtanh.pop %v3498
      %v3553 = vtanh.pop %v3499
      %v3554 = vtanh.pop %v3500
      %v3555 = vtanh.pop %v3501
      %v3556 = vtanh.pop %v3502
      %v3557 = vtanh.pop %v3503
      %v3558 = vtanh.pop %v3504
      %v3559 = vtanh.pop %v3505
      %v3560 = vtanh.pop %v3506
      %v3561 = vtanh.pop %v3507
      %v3562 = vtanh.pop %v3508
      %v3563 = vtanh.pop %v3509
      %v3564 = vtanh.pop %v3510
      %v3565 = vtanh.pop %v3511
      %v3566 = vtanh.pop %v3512
      %v3567 = vtanh.pop %v3513
      %vm3622 = vcmask 1046528
      %v3623 = vrot.slane %v3514, 1
      %v3624 = vrot.slane %v3515, 1
      %v3625 = vsel %vm3622, %v3623, %v3624
      %v3626 = vrot.slane %v3516, 1
      %v3627 = vsel %vm3622, %v3624, %v3626
      %v3628 = vrot.slane %v3517, 1
      %v3629 = vrot.slane %v3518, 1
      %v3630 = vsel %vm3622, %v3628, %v3629
      %v3631 = vrot.slane %v3519, 1
      %v3632 = vsel %vm3622, %v3629, %v3631
      %v3633 = vrot.slane %v3520, 1
      %v3634 = vrot.slane %v3521, 1
      %v3635 = vsel %vm3622, %v3633, %v3634
      %v3636 = vrot.slane %v3522, 1
      %v3637 = vsel %vm3622, %v3634, %v3636
      %v3638 = vrot.slane %v3523, 1
      %v3639 = vrot.slane %v3524, 1
      %v3640 = vsel %vm3622, %v3638, %v3639
      %v3641 = vrot.slane %v3525, 1
      %v3642 = vsel %vm3622, %v3639, %v3641
      %v3643 = vrot.slane %v3526, 1
      %v3644 = vrot.slane %v3527, 1
      %v3645 = vsel %vm3622, %v3643, %v3644
      %v3646 = vrot.slane %v3528, 1
      %v3647 = vsel %vm3622, %v3644, %v3646
      %v3648 = vrot.slane %v3529, 1
      %v3649 = vrot.slane %v3530, 1
      %v3650 = vsel %vm3622, %v3648, %v3649
      %v3651 = vrot.slane %v3531, 1
      %v3652 = vsel %vm3622, %v3649, %v3651
      %v3653 = vrot.slane %v3532, 1
      %v3654 = vrot.slane %v3533, 1
      %v3655 = vsel %vm3622, %v3653, %v3654
      %v3656 = vrot.slane %v3534, 1
      %v3657 = vsel %vm3622, %v3654, %v3656
      %v3658 = vrot.slane %v3535, 1
      %v3659 = vrot.slane %v3536, 1
      %v3660 = vsel %vm3622, %v3658, %v3659
      %v3661 = vrot.slane %v3537, 1
      %v3662 = vsel %vm3622, %v3659, %v3661
      %v3663 = vrot.slane %v3538, 1
      %v3664 = vrot.slane %v3539, 1
      %v3665 = vsel %vm3622, %v3663, %v3664
      %v3666 = vrot.slane %v3540, 1
      %v3667 = vsel %vm3622, %v3664, %v3666
      %v3668 = vrot.slane %v3541, 1
      %v3669 = vrot.slane %v3542, 1
      %v3670 = vsel %vm3622, %v3668, %v3669
      %v3671 = vrot.slane %v3543, 1
      %v3672 = vsel %vm3622, %v3669, %v3671
      %v3673 = vrot.slane %v3544, 1
      %v3674 = vrot.slane %v3545, 1
      %v3675 = vsel %vm3622, %v3673, %v3674
      %v3676 = vrot.slane %v3546, 1
      %v3677 = vsel %vm3622, %v3674, %v3676
      %v3678 = vrot.slane %v3547, 1
      %v3679 = vrot.slane %v3548, 1
      %v3680 = vsel %vm3622, %v3678, %v3679
      %v3681 = vrot.slane %v3549, 1
      %v3682 = vsel %vm3622, %v3679, %v3681
      %v3683 = vrot.slane %v3550, 1
      %v3684 = vrot.slane %v3551, 1
      %v3685 = vsel %vm3622, %v3683, %v3684
      %v3686 = vrot.slane %v3552, 1
      %v3687 = vsel %vm3622, %v3684, %v3686
      %v3688 = vrot.slane %v3553, 1
      %v3689 = vrot.slane %v3554, 1
      %v3690 = vsel %vm3622, %v3688, %v3689
      %v3691 = vrot.slane %v3555, 1
      %v3692 = vsel %vm3622, %v3689, %v3691
      %v3693 = vrot.slane %v3556, 1
      %v3694 = vrot.slane %v3557, 1
      %v3695 = vsel %vm3622, %v3693, %v3694
      %v3696 = vrot.slane %v3558, 1
      %v3697 = vsel %vm3622, %v3694, %v3696
      %v3698 = vrot.slane %v3559, 1
      %v3699 = vrot.slane %v3560, 1
      %v3700 = vsel %vm3622, %v3698, %v3699
      %v3701 = vrot.slane %v3561, 1
      %v3702 = vsel %vm3622, %v3699, %v3701
      %v3703 = vrot.slane %v3562, 1
      %v3704 = vrot.slane %v3563, 1
      %v3705 = vsel %vm3622, %v3703, %v3704
      %v3706 = vrot.slane %v3564, 1
      %v3707 = vsel %vm3622, %v3704, %v3706
      %v3708 = vrot.slane %v3565, 1
      %v3709 = vrot.slane %v3566, 1
      %v3710 = vsel %vm3622, %v3708, %v3709
      %v3711 = vrot.slane %v3567, 1
      %v3712 = vsel %vm3622, %v3709, %v3711
      %3713 = vrot.lane.b32.xlu0 %v3625, 16
      %v3714 = vpop.permute.xlu0 %3713
      %3715 = vrot.lane.b32.xlu0 %v3627, 16
      %v3716 = vpop.permute.xlu0 %3715
      %3717 = vrot.lane.b32.xlu0 %v3630, 16
      %v3718 = vpop.permute.xlu0 %3717
      %3719 = vrot.lane.b32.xlu0 %v3632, 16
      %v3720 = vpop.permute.xlu0 %3719
      %3721 = vrot.lane.b32.xlu0 %v3635, 16
      %v3722 = vpop.permute.xlu0 %3721
      %3723 = vrot.lane.b32.xlu0 %v3637, 16
      %v3724 = vpop.permute.xlu0 %3723
      %3725 = vrot.lane.b32.xlu0 %v3640, 16
      %v3726 = vpop.permute.xlu0 %3725
      %3727 = vrot.lane.b32.xlu0 %v3642, 16
      %v3728 = vpop.permute.xlu0 %3727
      %3729 = vrot.lane.b32.xlu0 %v3645, 16
      %v3730 = vpop.permute.xlu0 %3729
      %3731 = vrot.lane.b32.xlu0 %v3647, 16
      %v3732 = vpop.permute.xlu0 %3731
      %3733 = vrot.lane.b32.xlu0 %v3650, 16
      %v3734 = vpop.permute.xlu0 %3733
      %3735 = vrot.lane.b32.xlu0 %v3652, 16
      %v3736 = vpop.permute.xlu0 %3735
      %3737 = vrot.lane.b32.xlu0 %v3655, 16
      %v3738 = vpop.permute.xlu0 %3737
      %3739 = vrot.lane.b32.xlu0 %v3657, 16
      %v3740 = vpop.permute.xlu0 %3739
      %3741 = vrot.lane.b32.xlu0 %v3660, 16
      %v3742 = vpop.permute.xlu0 %3741
      %3743 = vrot.lane.b32.xlu0 %v3662, 16
      %v3744 = vpop.permute.xlu0 %3743
      %3745 = vrot.lane.b32.xlu0 %v3665, 16
      %v3746 = vpop.permute.xlu0 %3745
      %3747 = vrot.lane.b32.xlu0 %v3667, 16
      %v3748 = vpop.permute.xlu0 %3747
      %3749 = vrot.lane.b32.xlu0 %v3670, 16
      %v3750 = vpop.permute.xlu0 %3749
      %3751 = vrot.lane.b32.xlu0 %v3672, 16
      %v3752 = vpop.permute.xlu0 %3751
      %3753 = vrot.lane.b32.xlu0 %v3675, 16
      %v3754 = vpop.permute.xlu0 %3753
      %3755 = vrot.lane.b32.xlu0 %v3677, 16
      %v3756 = vpop.permute.xlu0 %3755
      %3757 = vrot.lane.b32.xlu0 %v3680, 16
      %v3758 = vpop.permute.xlu0 %3757
      %3759 = vrot.lane.b32.xlu0 %v3682, 16
      %v3760 = vpop.permute.xlu0 %3759
      %3761 = vrot.lane.b32.xlu0 %v3685, 16
      %v3762 = vpop.permute.xlu0 %3761
      %3763 = vrot.lane.b32.xlu0 %v3687, 16
      %v3764 = vpop.permute.xlu0 %3763
      %3765 = vrot.lane.b32.xlu0 %v3690, 16
      %v3766 = vpop.permute.xlu0 %3765
      %3767 = vrot.lane.b32.xlu0 %v3692, 16
      %v3768 = vpop.permute.xlu0 %3767
      %3769 = vrot.lane.b32.xlu0 %v3695, 16
      %v3770 = vpop.permute.xlu0 %3769
      %3771 = vrot.lane.b32.xlu0 %v3697, 16
      %v3772 = vpop.permute.xlu0 %3771
      %3773 = vrot.lane.b32.xlu0 %v3700, 16
      %v3774 = vpop.permute.xlu0 %3773
      %3775 = vrot.lane.b32.xlu0 %v3702, 16
      %v3776 = vpop.permute.xlu0 %3775
      %3777 = vrot.lane.b32.xlu0 %v3705, 16
      %v3778 = vpop.permute.xlu0 %3777
      %3779 = vrot.lane.b32.xlu0 %v3707, 16
      %v3780 = vpop.permute.xlu0 %3779
      %3781 = vrot.lane.b32.xlu0 %v3710, 16
      %v3782 = vpop.permute.xlu0 %3781
      %3783 = vrot.lane.b32.xlu0 %v3712, 16
      %v3784 = vpop.permute.xlu0 %3783
      %vm3821 = vcmask 1045504
      %v3822 = vrot.slane %v3514, 2
      %v3823 = vrot.slane %v3515, 2
      %v3824 = vsel %vm3821, %v3822, %v3823
      %v3825 = vrot.slane %v3516, 2
      %v3826 = vsel %vm3821, %v3823, %v3825
      %v3827 = vrot.slane %v3517, 2
      %v3828 = vrot.slane %v3518, 2
      %v3829 = vsel %vm3821, %v3827, %v3828
      %v3830 = vrot.slane %v3519, 2
      %v3831 = vsel %vm3821, %v3828, %v3830
      %v3832 = vrot.slane %v3520, 2
      %v3833 = vrot.slane %v3521, 2
      %v3834 = vsel %vm3821, %v3832, %v3833
      %v3835 = vrot.slane %v3522, 2
      %v3836 = vsel %vm3821, %v3833, %v3835
      %v3837 = vrot.slane %v3523, 2
      %v3838 = vrot.slane %v3524, 2
      %v3839 = vsel %vm3821, %v3837, %v3838
      %v3840 = vrot.slane %v3525, 2
      %v3841 = vsel %vm3821, %v3838, %v3840
      %v3842 = vrot.slane %v3526, 2
      %v3843 = vrot.slane %v3527, 2
      %v3844 = vsel %vm3821, %v3842, %v3843
      %v3845 = vrot.slane %v3528, 2
      %v3846 = vsel %vm3821, %v3843, %v3845
      %v3847 = vrot.slane %v3529, 2
      %v3848 = vrot.slane %v3530, 2
      %v3849 = vsel %vm3821, %v3847, %v3848
      %v3850 = vrot.slane %v3531, 2
      %v3851 = vsel %vm3821, %v3848, %v3850
      %v3852 = vrot.slane %v3532, 2
      %v3853 = vrot.slane %v3533, 2
      %v3854 = vsel %vm3821, %v3852, %v3853
      %v3855 = vrot.slane %v3534, 2
      %v3856 = vsel %vm3821, %v3853, %v3855
      %v3857 = vrot.slane %v3535, 2
      %v3858 = vrot.slane %v3536, 2
      %v3859 = vsel %vm3821, %v3857, %v3858
      %v3860 = vrot.slane %v3537, 2
      %v3861 = vsel %vm3821, %v3858, %v3860
      %v3862 = vrot.slane %v3538, 2
      %v3863 = vrot.slane %v3539, 2
      %v3864 = vsel %vm3821, %v3862, %v3863
      %v3865 = vrot.slane %v3540, 2
      %v3866 = vsel %vm3821, %v3863, %v3865
      %v3867 = vrot.slane %v3541, 2
      %v3868 = vrot.slane %v3542, 2
      %v3869 = vsel %vm3821, %v3867, %v3868
      %v3870 = vrot.slane %v3543, 2
      %v3871 = vsel %vm3821, %v3868, %v3870
      %v3872 = vrot.slane %v3544, 2
      %v3873 = vrot.slane %v3545, 2
      %v3874 = vsel %vm3821, %v3872, %v3873
      %v3875 = vrot.slane %v3546, 2
      %v3876 = vsel %vm3821, %v3873, %v3875
      %v3877 = vrot.slane %v3547, 2
      %v3878 = vrot.slane %v3548, 2
      %v3879 = vsel %vm3821, %v3877, %v3878
      %v3880 = vrot.slane %v3549, 2
      %v3881 = vsel %vm3821, %v3878, %v3880
      %v3882 = vrot.slane %v3550, 2
      %v3883 = vrot.slane %v3551, 2
      %v3884 = vsel %vm3821, %v3882, %v3883
      %v3885 = vrot.slane %v3552, 2
      %v3886 = vsel %vm3821, %v3883, %v3885
      %v3887 = vrot.slane %v3553, 2
      %v3888 = vrot.slane %v3554, 2
      %v3889 = vsel %vm3821, %v3887, %v3888
      %v3890 = vrot.slane %v3555, 2
      %v3891 = vsel %vm3821, %v3888, %v3890
      %v3892 = vrot.slane %v3556, 2
      %v3893 = vrot.slane %v3557, 2
      %v3894 = vsel %vm3821, %v3892, %v3893
      %v3895 = vrot.slane %v3558, 2
      %v3896 = vsel %vm3821, %v3893, %v3895
      %v3897 = vrot.slane %v3559, 2
      %v3898 = vrot.slane %v3560, 2
      %v3899 = vsel %vm3821, %v3897, %v3898
      %v3900 = vrot.slane %v3561, 2
      %v3901 = vsel %vm3821, %v3898, %v3900
      %v3902 = vrot.slane %v3562, 2
      %v3903 = vrot.slane %v3563, 2
      %v3904 = vsel %vm3821, %v3902, %v3903
      %v3905 = vrot.slane %v3564, 2
      %v3906 = vsel %vm3821, %v3903, %v3905
      %v3907 = vrot.slane %v3565, 2
      %v3908 = vrot.slane %v3566, 2
      %v3909 = vsel %vm3821, %v3907, %v3908
      %v3910 = vrot.slane %v3567, 2
      %v3911 = vsel %vm3821, %v3908, %v3910
      %3912 = vrot.lane.b32.xlu0 %v3824, 32
      %v3913 = vpop.permute.xlu0 %3912
      %3914 = vrot.lane.b32.xlu0 %v3826, 32
      %v3915 = vpop.permute.xlu0 %3914
      %3916 = vrot.lane.b32.xlu0 %v3829, 32
      %v3917 = vpop.permute.xlu0 %3916
      %3918 = vrot.lane.b32.xlu0 %v3831, 32
      %v3919 = vpop.permute.xlu0 %3918
      %3920 = vrot.lane.b32.xlu0 %v3834, 32
      %v3921 = vpop.permute.xlu0 %3920
      %3922 = vrot.lane.b32.xlu0 %v3836, 32
      %v3923 = vpop.permute.xlu0 %3922
      %3924 = vrot.lane.b32.xlu0 %v3839, 32
      %v3925 = vpop.permute.xlu0 %3924
      %3926 = vrot.lane.b32.xlu0 %v3841, 32
      %v3927 = vpop.permute.xlu0 %3926
      %3928 = vrot.lane.b32.xlu0 %v3844, 32
      %v3929 = vpop.permute.xlu0 %3928
      %3930 = vrot.lane.b32.xlu0 %v3846, 32
      %v3931 = vpop.permute.xlu0 %3930
      %3932 = vrot.lane.b32.xlu0 %v3849, 32
      %v3933 = vpop.permute.xlu0 %3932
      %3934 = vrot.lane.b32.xlu0 %v3851, 32
      %v3935 = vpop.permute.xlu0 %3934
      %3936 = vrot.lane.b32.xlu0 %v3854, 32
      %v3937 = vpop.permute.xlu0 %3936
      %3938 = vrot.lane.b32.xlu0 %v3856, 32
      %v3939 = vpop.permute.xlu0 %3938
      %3940 = vrot.lane.b32.xlu0 %v3859, 32
      %v3941 = vpop.permute.xlu0 %3940
      %3942 = vrot.lane.b32.xlu0 %v3861, 32
      %v3943 = vpop.permute.xlu0 %3942
      %3944 = vrot.lane.b32.xlu0 %v3864, 32
      %v3945 = vpop.permute.xlu0 %3944
      %3946 = vrot.lane.b32.xlu0 %v3866, 32
      %v3947 = vpop.permute.xlu0 %3946
      %3948 = vrot.lane.b32.xlu0 %v3869, 32
      %v3949 = vpop.permute.xlu0 %3948
      %3950 = vrot.lane.b32.xlu0 %v3871, 32
      %v3951 = vpop.permute.xlu0 %3950
      %3952 = vrot.lane.b32.xlu0 %v3874, 32
      %v3953 = vpop.permute.xlu0 %3952
      %3954 = vrot.lane.b32.xlu0 %v3876, 32
      %v3955 = vpop.permute.xlu0 %3954
      %3956 = vrot.lane.b32.xlu0 %v3879, 32
      %v3957 = vpop.permute.xlu0 %3956
      %3958 = vrot.lane.b32.xlu0 %v3881, 32
      %v3959 = vpop.permute.xlu0 %3958
      %3960 = vrot.lane.b32.xlu0 %v3884, 32
      %v3961 = vpop.permute.xlu0 %3960
      %3962 = vrot.lane.b32.xlu0 %v3886, 32
      %v3963 = vpop.permute.xlu0 %3962
      %3964 = vrot.lane.b32.xlu0 %v3889, 32
      %v3965 = vpop.permute.xlu0 %3964
      %3966 = vrot.lane.b32.xlu0 %v3891, 32
      %v3967 = vpop.permute.xlu0 %3966
      %3968 = vrot.lane.b32.xlu0 %v3894, 32
      %v3969 = vpop.permute.xlu0 %3968
      %3970 = vrot.lane.b32.xlu0 %v3896, 32
      %v3971 = vpop.permute.xlu0 %3970
      %3972 = vrot.lane.b32.xlu0 %v3899, 32
      %v3973 = vpop.permute.xlu0 %3972
      %3974 = vrot.lane.b32.xlu0 %v3901, 32
      %v3975 = vpop.permute.xlu0 %3974
      %3976 = vrot.lane.b32.xlu0 %v3904, 32
      %v3977 = vpop.permute.xlu0 %3976
      %3978 = vrot.lane.b32.xlu0 %v3906, 32
      %v3979 = vpop.permute.xlu0 %3978
      %3980 = vrot.lane.b32.xlu0 %v3909, 32
      %v3981 = vpop.permute.xlu0 %3980
      %3982 = vrot.lane.b32.xlu0 %v3911, 32
      %v3983 = vpop.permute.xlu0 %3982
      %vm4020 = vcmask 130048
      %v4021 = vsel %vm4020, %v3514, %v3714
      %v4022 = vsel %vm4020, %v3515, %v3716
      %v4023 = vsel %vm4020, %v3517, %v3718
      %v4024 = vsel %vm4020, %v3518, %v3720
      %v4025 = vsel %vm4020, %v3520, %v3722
      %v4026 = vsel %vm4020, %v3521, %v3724
      %v4027 = vsel %vm4020, %v3523, %v3726
      %v4028 = vsel %vm4020, %v3524, %v3728
      %v4029 = vsel %vm4020, %v3526, %v3730
      %v4030 = vsel %vm4020, %v3527, %v3732
      %v4031 = vsel %vm4020, %v3529, %v3734
      %v4032 = vsel %vm4020, %v3530, %v3736
      %v4033 = vsel %vm4020, %v3532, %v3738
      %v4034 = vsel %vm4020, %v3533, %v3740
      %v4035 = vsel %vm4020, %v3535, %v3742
      %v4036 = vsel %vm4020, %v3536, %v3744
      %v4037 = vsel %vm4020, %v3538, %v3746
      %v4038 = vsel %vm4020, %v3539, %v3748
      %v4039 = vsel %vm4020, %v3541, %v3750
      %v4040 = vsel %vm4020, %v3542, %v3752
      %v4041 = vsel %vm4020, %v3544, %v3754
      %v4042 = vsel %vm4020, %v3545, %v3756
      %v4043 = vsel %vm4020, %v3547, %v3758
      %v4044 = vsel %vm4020, %v3548, %v3760
      %v4045 = vsel %vm4020, %v3550, %v3762
      %v4046 = vsel %vm4020, %v3551, %v3764
      %v4047 = vsel %vm4020, %v3553, %v3766
      %v4048 = vsel %vm4020, %v3554, %v3768
      %v4049 = vsel %vm4020, %v3556, %v3770
      %v4050 = vsel %vm4020, %v3557, %v3772
      %v4051 = vsel %vm4020, %v3559, %v3774
      %v4052 = vsel %vm4020, %v3560, %v3776
      %v4053 = vsel %vm4020, %v3562, %v3778
      %v4054 = vsel %vm4020, %v3563, %v3780
      %v4055 = vsel %vm4020, %v3565, %v3782
      %v4056 = vsel %vm4020, %v3566, %v3784
      %vm4057 = vcmask 261120
      %v4058 = vsel %vm4057, %v4021, %v3913
      %v4059 = vsel %vm4057, %v4022, %v3915
      %v4060 = vsel %vm4057, %v4023, %v3917
      %v4061 = vsel %vm4057, %v4024, %v3919
      %v4062 = vsel %vm4057, %v4025, %v3921
      %v4063 = vsel %vm4057, %v4026, %v3923
      %v4064 = vsel %vm4057, %v4027, %v3925
      %v4065 = vsel %vm4057, %v4028, %v3927
      %v4066 = vsel %vm4057, %v4029, %v3929
      %v4067 = vsel %vm4057, %v4030, %v3931
      %v4068 = vsel %vm4057, %v4031, %v3933
      %v4069 = vsel %vm4057, %v4032, %v3935
      %v4070 = vsel %vm4057, %v4033, %v3937
      %v4071 = vsel %vm4057, %v4034, %v3939
      %v4072 = vsel %vm4057, %v4035, %v3941
      %v4073 = vsel %vm4057, %v4036, %v3943
      %v4074 = vsel %vm4057, %v4037, %v3945
      %v4075 = vsel %vm4057, %v4038, %v3947
      %v4076 = vsel %vm4057, %v4039, %v3949
      %v4077 = vsel %vm4057, %v4040, %v3951
      %v4078 = vsel %vm4057, %v4041, %v3953
      %v4079 = vsel %vm4057, %v4042, %v3955
      %v4080 = vsel %vm4057, %v4043, %v3957
      %v4081 = vsel %vm4057, %v4044, %v3959
      %v4082 = vsel %vm4057, %v4045, %v3961
      %v4083 = vsel %vm4057, %v4046, %v3963
      %v4084 = vsel %vm4057, %v4047, %v3965
      %v4085 = vsel %vm4057, %v4048, %v3967
      %v4086 = vsel %vm4057, %v4049, %v3969
      %v4087 = vsel %vm4057, %v4050, %v3971
      %v4088 = vsel %vm4057, %v4051, %v3973
      %v4089 = vsel %vm4057, %v4052, %v3975
      %v4090 = vsel %vm4057, %v4053, %v3977
      %v4091 = vsel %vm4057, %v4054, %v3979
      %v4092 = vsel %vm4057, %v4055, %v3981
      %v4093 = vsel %vm4057, %v4056, %v3983
      %v4094 = vld [vmem:[%s3] sm:$0xff]
      %v4095 = vld [vmem:[%s3 + $0x8] sm:$0xff]
      %v4096 = vld [vmem:[%s3 + $0x10] sm:$0xff]
      %v4097 = vld [vmem:[%s3 + $0x18] sm:$0xff]
      %v4098 = vld [vmem:[%s3 + $0x20] sm:$0xff]
      %v4099 = vld [vmem:[%s3 + $0x28] sm:$0xff]
      %s4100 = scalar_lea.vmem %s3, 48
      %v4101 = vld [vmem:[%s4100] sm:$0xff]
      %v4102 = vld [vmem:[%s4100 + $0x8] sm:$0xff]
      %v4103 = vld [vmem:[%s4100 + $0x10] sm:$0xff]
      %v4104 = vld [vmem:[%s4100 + $0x18] sm:$0xff]
      %v4105 = vld [vmem:[%s4100 + $0x20] sm:$0xff]
      %v4106 = vld [vmem:[%s4100 + $0x28] sm:$0xff]
      %vm4107 = vcmask 392192
      %v4109 = vsel %vm4107, %v4060, 0
      %v4112 = vsel %vm4107, %v4061, 0
      %v4115 = vsel %vm4107, %v4062, 0
      %v4118 = vsel %vm4107, %v4063, 0
      %v4121 = vsel %vm4107, %v4064, 0
      %v4124 = vsel %vm4107, %v4065, 0
      %v4127 = vsel %vm4107, %v4066, 0
      %v4130 = vsel %vm4107, %v4067, 0
      %v4133 = vsel %vm4107, %v4068, 0
      %v4136 = vsel %vm4107, %v4069, 0
      %v4139 = vsel %vm4107, %v4070, 0
      %v4142 = vsel %vm4107, %v4071, 0
      %v4145 = vsel %vm4107, %v4072, 0
      %v4148 = vsel %vm4107, %v4073, 0
      %v4151 = vsel %vm4107, %v4074, 0
      %v4154 = vsel %vm4107, %v4075, 0
      %v4157 = vsel %vm4107, %v4076, 0
      %v4160 = vsel %vm4107, %v4077, 0
      %v4163 = vsel %vm4107, %v4078, 0
      %v4166 = vsel %vm4107, %v4079, 0
      %v4169 = vsel %vm4107, %v4080, 0
      %v4172 = vsel %vm4107, %v4081, 0
      %v4175 = vsel %vm4107, %v4082, 0
      %v4178 = vsel %vm4107, %v4083, 0
      %v4181 = vsel %vm4107, %v4084, 0
      %v4184 = vsel %vm4107, %v4085, 0
      %v4187 = vsel %vm4107, %v4086, 0
      %v4190 = vsel %vm4107, %v4087, 0
      %v4193 = vsel %vm4107, %v4088, 0
      %v4196 = vsel %vm4107, %v4089, 0
      %v4199 = vsel %vm4107, %v4090, 0
      %v4202 = vsel %vm4107, %v4091, 0
      %4204 = vmatprep.subr.mxu0 0.0
      %4205 = vmatpush1.msra.mxu0 %v4101
      %4206 = vmatprep.subr.mxu0 0.0
      %4207 = vmatpush1.msra.mxu0 %v4102
      %4208 = vmatprep.subr.mxu0 0.0
      %4209 = vmatpush1.msra.mxu0 %v4103
      %4210 = vmatprep.subr.mxu0 0.0
      %4211 = vmatpush1.msra.mxu0 %v4104
      %4212 = vmatprep.subr.mxu0 0.0
      %4213 = vmatpush1.msra.mxu0 %v4105
      %4214 = vmatprep.subr.mxu0 0.0
      %4215 = vmatpush1.msra.mxu0 %v4106
      %4216 = vmatprep.subr.mxu0 0.0
      %4217 = vmatpush1.msra.mxu0 0.0
      %4218 = vmatprep.subr.mxu0 0.0
      %4219 = vmatpush1.msra.mxu0 0.0
      %4220 = vmatprep.subr.mxu0 0.0
      %4221 = vmatpush1.msra.mxu0 0.0
      %4222 = vmatprep.subr.mxu0 0.0
      %4223 = vmatpush1.msra.mxu0 0.0
      %4224 = vmatprep.subr.mxu0 0.0
      %4225 = vmatpush1.msra.mxu0 0.0
      %4226 = vmatprep.subr.mxu0 0.0
      %4227 = vmatpush1.msra.mxu0 0.0
      %4228 = vmatprep.subr.mxu0 0.0
      %4229 = vmatpush1.msra.mxu0 0.0
      %4230 = vmatprep.subr.mxu0 0.0
      %4231 = vmatpush1.msra.mxu0 0.0
      %4232 = vmatprep.subr.mxu0 0.0
      %4233 = vmatpush1.msra.mxu0 0.0
      %4234 = vmatprep.subr.mxu0 0.0
      %4235 = vmatpush1.msra.mxu0 0.0
      %4236 = vmatprep.subr.mxu0 0.0
      %4237 = vmatpush1.msra.mxu0 0.0
      %4238 = vmatprep.subr.mxu0 0.0
      %4239 = vmatpush1.msra.mxu0 0.0
      %4240 = vmatprep.subr.mxu0 0.0
      %4241 = vmatpush1.msra.mxu0 0.0
      %4242 = vmatprep.subr.mxu0 0.0
      %4243 = vmatpush1.msra.mxu0 0.0
      %4244 = vmatprep.subr.mxu0 0.0
      %4245 = vmatpush1.msra.mxu0 0.0
      %4246 = vmatprep.subr.mxu0 0.0
      %4247 = vmatpush1.msra.mxu0 0.0
      %4248 = vmatprep.subr.mxu0 0.0
      %4249 = vmatpush1.msra.mxu0 0.0
      %4250 = vmatprep.subr.mxu0 0.0
      %4251 = vmatpush1.msra.mxu0 0.0
      %4252 = vmatprep.subr.mxu0 0.0
      %4253 = vmatpush1.msra.mxu0 0.0
      %4254 = vmatprep.subr.mxu0 0.0
      %4255 = vmatpush1.msra.mxu0 0.0
      %4256 = vmatprep.subr.mxu0 0.0
      %4257 = vmatpush1.msra.mxu0 0.0
      %4258 = vmatprep.subr.mxu0 0.0
      %4259 = vmatpush1.msra.mxu0 0.0
      %4260 = vmatprep.subr.mxu0 0.0
      %4261 = vmatpush1.msra.mxu0 0.0
      %4262 = vmatprep.subr.mxu0 0.0
      %4263 = vmatpush1.msra.mxu0 0.0
      %4264 = vmatprep.subr.mxu0 0.0
      %4265 = vmatpush1.msra.mxu0 0.0
      %4266 = vmatprep.subr.mxu0 0.0
      %4267 = vmatpush1.msra.mxu0 0.0
      %4268 = vmatprep.mubr.f32.mxu0 0.0
      %4269 = vmatmul.mubr.f32.gmra.mrb[0].mxu0 %v4109
      %v4270 = vpop.f32.mrb[0].mxu0
      %v4271 = vadd.f32 0.0, %v4270
      %v4272 = vpop.f32.mrb[0].mxu0
      %4273 = vmatprep.mubr.f32.mxu0 0.0
      %4274 = vmatmul.mubr.f32.gmra.mrb[0].mxu0 %v4112
      %v4275 = vpop.f32.mrb[0].mxu0
      %v4276 = vadd.f32 0.0, %v4275
      %v4277 = vpop.f32.mrb[0].mxu0
      %4278 = vmatprep.mubr.f32.mxu0 0.0
      %4279 = vmatmul.mubr.f32.gmra.mrb[0].mxu0 %v4115
      %v4280 = vpop.f32.mrb[0].mxu0
      %v4281 = vadd.f32 0.0, %v4280
      %v4282 = vpop.f32.mrb[0].mxu0
      %4283 = vmatprep.mubr.f32.mxu0 0.0
      %4284 = vmatmul.mubr.f32.gmra.mrb[0].mxu0 %v4118
      %v4285 = vpop.f32.mrb[0].mxu0
      %v4286 = vadd.f32 0.0, %v4285
      %v4287 = vpop.f32.mrb[0].mxu0
      %4288 = vmatprep.mubr.f32.mxu0 0.0
      %4289 = vmatmul.mubr.f32.gmra.mrb[0].mxu0 %v4121
      %v4290 = vpop.f32.mrb[0].mxu0
      %v4291 = vadd.f32 0.0, %v4290
      %v4292 = vpop.f32.mrb[0].mxu0
      %4293 = vmatprep.mubr.f32.mxu0 0.0
      %4294 = vmatmul.mubr.f32.gmra.mrb[0].mxu0 %v4124
      %v4295 = vpop.f32.mrb[0].mxu0
      %v4296 = vadd.f32 0.0, %v4295
      %v4297 = vpop.f32.mrb[0].mxu0
      %4298 = vmatprep.mubr.f32.mxu0 0.0
      %4299 = vmatmul.mubr.f32.gmra.mrb[0].mxu0 %v4127
      %v4300 = vpop.f32.mrb[0].mxu0
      %v4301 = vadd.f32 0.0, %v4300
      %v4302 = vpop.f32.mrb[0].mxu0
      %4303 = vmatprep.mubr.f32.mxu0 0.0
      %4304 = vmatmul.mubr.f32.gmra.mrb[0].mxu0 %v4130
      %v4305 = vpop.f32.mrb[0].mxu0
      %v4306 = vadd.f32 0.0, %v4305
      %v4307 = vpop.f32.mrb[0].mxu0
      %4308 = vmatprep.mubr.f32.mxu0 0.0
      %4309 = vmatmul.mubr.f32.gmra.mrb[0].mxu0 %v4133
      %v4310 = vpop.f32.mrb[0].mxu0
      %v4311 = vadd.f32 0.0, %v4310
      %v4312 = vpop.f32.mrb[0].mxu0
      %4313 = vmatprep.mubr.f32.mxu0 0.0
      %4314 = vmatmul.mubr.f32.gmra.mrb[0].mxu0 %v4136
      %v4315 = vpop.f32.mrb[0].mxu0
      %v4316 = vadd.f32 0.0, %v4315
      %v4317 = vpop.f32.mrb[0].mxu0
      %4318 = vmatprep.mubr.f32.mxu0 0.0
      %4319 = vmatmul.mubr.f32.gmra.mrb[0].mxu0 %v4139
      %v4320 = vpop.f32.mrb[0].mxu0
      %v4321 = vadd.f32 0.0, %v4320
      %v4322 = vpop.f32.mrb[0].mxu0
      %4323 = vmatprep.mubr.f32.mxu0 0.0
      %4324 = vmatmul.mubr.f32.gmra.mrb[0].mxu0 %v4142
      %v4325 = vpop.f32.mrb[0].mxu0
      %v4326 = vadd.f32 0.0, %v4325
      %v4327 = vpop.f32.mrb[0].mxu0
      %4328 = vmatprep.mubr.f32.mxu0 0.0
      %4329 = vmatmul.mubr.f32.gmra.mrb[0].mxu0 %v4145
      %v4330 = vpop.f32.mrb[0].mxu0
      %v4331 = vadd.f32 0.0, %v4330
      %v4332 = vpop.f32.mrb[0].mxu0
      %4333 = vmatprep.mubr.f32.mxu0 0.0
      %4334 = vmatmul.mubr.f32.gmra.mrb[0].mxu0 %v4148
      %v4335 = vpop.f32.mrb[0].mxu0
      %v4336 = vadd.f32 0.0, %v4335
      %v4337 = vpop.f32.mrb[0].mxu0
      %4338 = vmatprep.mubr.f32.mxu0 0.0
      %4339 = vmatmul.mubr.f32.gmra.mrb[0].mxu0 %v4151
      %v4340 = vpop.f32.mrb[0].mxu0
      %v4341 = vadd.f32 0.0, %v4340
      %v4342 = vpop.f32.mrb[0].mxu0
      %4343 = vmatprep.mubr.f32.mxu0 0.0
      %4344 = vmatmul.mubr.f32.gmra.mrb[0].mxu0 %v4154
      %v4345 = vpop.f32.mrb[0].mxu0
      %v4346 = vadd.f32 0.0, %v4345
      %v4347 = vpop.f32.mrb[0].mxu0
      %4348 = vmatprep.mubr.f32.mxu0 0.0
      %4349 = vmatmul.mubr.f32.gmra.mrb[0].mxu0 %v4157
      %v4350 = vpop.f32.mrb[0].mxu0
      %v4351 = vadd.f32 0.0, %v4350
      %v4352 = vpop.f32.mrb[0].mxu0
      %4353 = vmatprep.mubr.f32.mxu0 0.0
      %4354 = vmatmul.mubr.f32.gmra.mrb[0].mxu0 %v4160
      %v4355 = vpop.f32.mrb[0].mxu0
      %v4356 = vadd.f32 0.0, %v4355
      %v4357 = vpop.f32.mrb[0].mxu0
      %4358 = vmatprep.mubr.f32.mxu0 0.0
      %4359 = vmatmul.mubr.f32.gmra.mrb[0].mxu0 %v4163
      %v4360 = vpop.f32.mrb[0].mxu0
      %v4361 = vadd.f32 0.0, %v4360
      %v4362 = vpop.f32.mrb[0].mxu0
      %4363 = vmatprep.mubr.f32.mxu0 0.0
      %4364 = vmatmul.mubr.f32.gmra.mrb[0].mxu0 %v4166
      %v4365 = vpop.f32.mrb[0].mxu0
      %v4366 = vadd.f32 0.0, %v4365
      %v4367 = vpop.f32.mrb[0].mxu0
      %4368 = vmatprep.mubr.f32.mxu0 0.0
      %4369 = vmatmul.mubr.f32.gmra.mrb[0].mxu0 %v4169
      %v4370 = vpop.f32.mrb[0].mxu0
      %v4371 = vadd.f32 0.0, %v4370
      %v4372 = vpop.f32.mrb[0].mxu0
      %4373 = vmatprep.mubr.f32.mxu0 0.0
      %4374 = vmatmul.mubr.f32.gmra.mrb[0].mxu0 %v4172
      %v4375 = vpop.f32.mrb[0].mxu0
      %v4376 = vadd.f32 0.0, %v4375
      %v4377 = vpop.f32.mrb[0].mxu0
      %4378 = vmatprep.mubr.f32.mxu0 0.0
      %4379 = vmatmul.mubr.f32.gmra.mrb[0].mxu0 %v4175
      %v4380 = vpop.f32.mrb[0].mxu0
      %v4381 = vadd.f32 0.0, %v4380
      %v4382 = vpop.f32.mrb[0].mxu0
      %4383 = vmatprep.mubr.f32.mxu0 0.0
      %4384 = vmatmul.mubr.f32.gmra.mrb[0].mxu0 %v4178
      %v4385 = vpop.f32.mrb[0].mxu0
      %v4386 = vadd.f32 0.0, %v4385
      %v4387 = vpop.f32.mrb[0].mxu0
      %4388 = vmatprep.mubr.f32.mxu0 0.0
      %4389 = vmatmul.mubr.f32.gmra.mrb[0].mxu0 %v4181
      %v4390 = vpop.f32.mrb[0].mxu0
      %v4391 = vadd.f32 0.0, %v4390
      %v4392 = vpop.f32.mrb[0].mxu0
      %4393 = vmatprep.mubr.f32.mxu0 0.0
      %4394 = vmatmul.mubr.f32.gmra.mrb[0].mxu0 %v4184
      %v4395 = vpop.f32.mrb[0].mxu0
      %v4396 = vadd.f32 0.0, %v4395
      %v4397 = vpop.f32.mrb[0].mxu0
      %4398 = vmatprep.mubr.f32.mxu0 0.0
      %4399 = vmatmul.mubr.f32.gmra.mrb[0].mxu0 %v4187
      %v4400 = vpop.f32.mrb[0].mxu0
      %v4401 = vadd.f32 0.0, %v4400
      %v4402 = vpop.f32.mrb[0].mxu0
      %4403 = vmatprep.mubr.f32.mxu0 0.0
      %4404 = vmatmul.mubr.f32.gmra.mrb[0].mxu0 %v4190
      %v4405 = vpop.f32.mrb[0].mxu0
      %v4406 = vadd.f32 0.0, %v4405
      %v4407 = vpop.f32.mrb[0].mxu0
      %4408 = vmatprep.mubr.f32.mxu0 0.0
      %4409 = vmatmul.mubr.f32.gmra.mrb[0].mxu0 %v4193
      %v4410 = vpop.f32.mrb[0].mxu0
      %v4411 = vadd.f32 0.0, %v4410
      %v4412 = vpop.f32.mrb[0].mxu0
      %4413 = vmatprep.mubr.f32.mxu0 0.0
      %4414 = vmatmul.mubr.f32.gmra.mrb[0].mxu0 %v4196
      %v4415 = vpop.f32.mrb[0].mxu0
      %v4416 = vadd.f32 0.0, %v4415
      %v4417 = vpop.f32.mrb[0].mxu0
      %4418 = vmatprep.mubr.f32.mxu0 0.0
      %4419 = vmatmul.mubr.f32.gmra.mrb[0].mxu0 %v4199
      %v4420 = vpop.f32.mrb[0].mxu0
      %v4421 = vadd.f32 0.0, %v4420
      %v4422 = vpop.f32.mrb[0].mxu0
      %4423 = vmatprep.mubr.f32.mxu0 0.0
      %4424 = vmatmul.mubr.f32.gmra.mrb[0].mxu0 %v4202
      %v4425 = vpop.f32.mrb[0].mxu0
      %v4426 = vadd.f32 0.0, %v4425
      %v4427 = vpop.f32.mrb[0].mxu0
      %4428 = vdwg.mxu0
      %v4430 = vsel %vm4107, %v4058, 0
      %v4433 = vsel %vm4107, %v4059, 0
      %4435 = vmatprep.subr.mxu0 0.0
      %4436 = vmatpush1.msra.mxu0 %v4094
      %4437 = vmatprep.subr.mxu0 0.0
      %4438 = vmatpush1.msra.mxu0 %v4095
      %4439 = vmatprep.subr.mxu0 0.0
      %4440 = vmatpush1.msra.mxu0 %v4096
      %4441 = vmatprep.subr.mxu0 0.0
      %4442 = vmatpush1.msra.mxu0 %v4097
      %4443 = vmatprep.subr.mxu0 0.0
      %4444 = vmatpush1.msra.mxu0 %v4098
      %4445 = vmatprep.subr.mxu0 0.0
      %4446 = vmatpush1.msra.mxu0 %v4099
      %4447 = vmatprep.subr.mxu0 0.0
      %4448 = vmatpush1.msra.mxu0 0.0
      %4449 = vmatprep.subr.mxu0 0.0
      %4450 = vmatpush1.msra.mxu0 0.0
      %4451 = vmatprep.subr.mxu0 0.0
      %4452 = vmatpush1.msra.mxu0 0.0
      %4453 = vmatprep.subr.mxu0 0.0
      %4454 = vmatpush1.msra.mxu0 0.0
      %4455 = vmatprep.subr.mxu0 0.0
      %4456 = vmatpush1.msra.mxu0 0.0
      %4457 = vmatprep.subr.mxu0 0.0
      %4458 = vmatpush1.msra.mxu0 0.0
      %4459 = vmatprep.subr.mxu0 0.0
      %4460 = vmatpush1.msra.mxu0 0.0
      %4461 = vmatprep.subr.mxu0 0.0
      %4462 = vmatpush1.msra.mxu0 0.0
      %4463 = vmatprep.subr.mxu0 0.0
      %4464 = vmatpush1.msra.mxu0 0.0
      %4465 = vmatprep.subr.mxu0 0.0
      %4466 = vmatpush1.msra.mxu0 0.0
      %4467 = vmatprep.subr.mxu0 0.0
      %4468 = vmatpush1.msra.mxu0 0.0
      %4469 = vmatprep.subr.mxu0 0.0
      %4470 = vmatpush1.msra.mxu0 0.0
      %4471 = vmatprep.subr.mxu0 0.0
      %4472 = vmatpush1.msra.mxu0 0.0
      %4473 = vmatprep.subr.mxu0 0.0
      %4474 = vmatpush1.msra.mxu0 0.0
      %4475 = vmatprep.subr.mxu0 0.0
      %4476 = vmatpush1.msra.mxu0 0.0
      %4477 = vmatprep.subr.mxu0 0.0
      %4478 = vmatpush1.msra.mxu0 0.0
      %4479 = vmatprep.subr.mxu0 0.0
      %4480 = vmatpush1.msra.mxu0 0.0
      %4481 = vmatprep.subr.mxu0 0.0
      %4482 = vmatpush1.msra.mxu0 0.0
      %4483 = vmatprep.subr.mxu0 0.0
      %4484 = vmatpush1.msra.mxu0 0.0
      %4485 = vmatprep.subr.mxu0 0.0
      %4486 = vmatpush1.msra.mxu0 0.0
      %4487 = vmatprep.subr.mxu0 0.0
      %4488 = vmatpush1.msra.mxu0 0.0
      %4489 = vmatprep.subr.mxu0 0.0
      %4490 = vmatpush1.msra.mxu0 0.0
      %4491 = vmatprep.subr.mxu0 0.0
      %4492 = vmatpush1.msra.mxu0 0.0
      %4493 = vmatprep.subr.mxu0 0.0
      %4494 = vmatpush1.msra.mxu0 0.0
      %4495 = vmatprep.subr.mxu0 0.0
      %4496 = vmatpush1.msra.mxu0 0.0
      %4497 = vmatprep.subr.mxu0 0.0
      %4498 = vmatpush1.msra.mxu0 0.0
      %4499 = vmatprep.mubr.f32.mxu0 0.0
      %4500 = vmatmul.mubr.f32.gmra.mrb[0].mxu0 %v4430
      %v4501 = vpop.f32.mrb[0].mxu0
      %v4502 = vadd.f32 %v4271, %v4501
      %v4503 = vpop.f32.mrb[0].mxu0
      %4504 = vmatprep.mubr.f32.mxu0 0.0
      %4505 = vmatmul.mubr.f32.gmra.mrb[0].mxu0 %v4433
      %v4506 = vpop.f32.mrb[0].mxu0
      %v4507 = vadd.f32 %v4276, %v4506
      %v4508 = vpop.f32.mrb[0].mxu0
      %4509 = vmatprep.mubr.f32.mxu0 0.0
      %4510 = vmatmul.mubr.f32.gmra.mrb[0].mxu0 %v4109
      %v4511 = vpop.f32.mrb[0].mxu0
      %v4512 = vadd.f32 %v4281, %v4511
      %v4513 = vpop.f32.mrb[0].mxu0
      %4514 = vmatprep.mubr.f32.mxu0 0.0
      %4515 = vmatmul.mubr.f32.gmra.mrb[0].mxu0 %v4112
      %v4516 = vpop.f32.mrb[0].mxu0
      %v4517 = vadd.f32 %v4286, %v4516
      %v4518 = vpop.f32.mrb[0].mxu0
      %4519 = vmatprep.mubr.f32.mxu0 0.0
      %4520 = vmatmul.mubr.f32.gmra.mrb[0].mxu0 %v4115
      %v4521 = vpop.f32.mrb[0].mxu0
      %v4522 = vadd.f32 %v4291, %v4521
      %v4523 = vpop.f32.mrb[0].mxu0
      %4524 = vmatprep.mubr.f32.mxu0 0.0
      %4525 = vmatmul.mubr.f32.gmra.mrb[0].mxu0 %v4118
      %v4526 = vpop.f32.mrb[0].mxu0
      %v4527 = vadd.f32 %v4296, %v4526
      %v4528 = vpop.f32.mrb[0].mxu0
      %4529 = vmatprep.mubr.f32.mxu0 0.0
      %4530 = vmatmul.mubr.f32.gmra.mrb[0].mxu0 %v4121
      %v4531 = vpop.f32.mrb[0].mxu0
      %v4532 = vadd.f32 %v4301, %v4531
      %v4533 = vpop.f32.mrb[0].mxu0
      %4534 = vmatprep.mubr.f32.mxu0 0.0
      %4535 = vmatmul.mubr.f32.gmra.mrb[0].mxu0 %v4124
      %v4536 = vpop.f32.mrb[0].mxu0
      %v4537 = vadd.f32 %v4306, %v4536
      %v4538 = vpop.f32.mrb[0].mxu0
      %4539 = vmatprep.mubr.f32.mxu0 0.0
      %4540 = vmatmul.mubr.f32.gmra.mrb[0].mxu0 %v4127
      %v4541 = vpop.f32.mrb[0].mxu0
      %v4542 = vadd.f32 %v4311, %v4541
      %v4543 = vpop.f32.mrb[0].mxu0
      %4544 = vmatprep.mubr.f32.mxu0 0.0
      %4545 = vmatmul.mubr.f32.gmra.mrb[0].mxu0 %v4130
      %v4546 = vpop.f32.mrb[0].mxu0
      %v4547 = vadd.f32 %v4316, %v4546
      %v4548 = vpop.f32.mrb[0].mxu0
      %4549 = vmatprep.mubr.f32.mxu0 0.0
      %4550 = vmatmul.mubr.f32.gmra.mrb[0].mxu0 %v4133
      %v4551 = vpop.f32.mrb[0].mxu0
      %v4552 = vadd.f32 %v4321, %v4551
      %v4553 = vpop.f32.mrb[0].mxu0
      %4554 = vmatprep.mubr.f32.mxu0 0.0
      %4555 = vmatmul.mubr.f32.gmra.mrb[0].mxu0 %v4136
      %v4556 = vpop.f32.mrb[0].mxu0
      %v4557 = vadd.f32 %v4326, %v4556
      %v4558 = vpop.f32.mrb[0].mxu0
      %4559 = vmatprep.mubr.f32.mxu0 0.0
      %4560 = vmatmul.mubr.f32.gmra.mrb[0].mxu0 %v4139
      %v4561 = vpop.f32.mrb[0].mxu0
      %v4562 = vadd.f32 %v4331, %v4561
      %v4563 = vpop.f32.mrb[0].mxu0
      %4564 = vmatprep.mubr.f32.mxu0 0.0
      %4565 = vmatmul.mubr.f32.gmra.mrb[0].mxu0 %v4142
      %v4566 = vpop.f32.mrb[0].mxu0
      %v4567 = vadd.f32 %v4336, %v4566
      %v4568 = vpop.f32.mrb[0].mxu0
      %4569 = vmatprep.mubr.f32.mxu0 0.0
      %4570 = vmatmul.mubr.f32.gmra.mrb[0].mxu0 %v4145
      %v4571 = vpop.f32.mrb[0].mxu0
      %v4572 = vadd.f32 %v4341, %v4571
      %v4573 = vpop.f32.mrb[0].mxu0
      %4574 = vmatprep.mubr.f32.mxu0 0.0
      %4575 = vmatmul.mubr.f32.gmra.mrb[0].mxu0 %v4148
      %v4576 = vpop.f32.mrb[0].mxu0
      %v4577 = vadd.f32 %v4346, %v4576
      %v4578 = vpop.f32.mrb[0].mxu0
      %4579 = vmatprep.mubr.f32.mxu0 0.0
      %4580 = vmatmul.mubr.f32.gmra.mrb[0].mxu0 %v4151
      %v4581 = vpop.f32.mrb[0].mxu0
      %v4582 = vadd.f32 %v4351, %v4581
      %v4583 = vpop.f32.mrb[0].mxu0
      %4584 = vmatprep.mubr.f32.mxu0 0.0
      %4585 = vmatmul.mubr.f32.gmra.mrb[0].mxu0 %v4154
      %v4586 = vpop.f32.mrb[0].mxu0
      %v4587 = vadd.f32 %v4356, %v4586
      %v4588 = vpop.f32.mrb[0].mxu0
      %4589 = vmatprep.mubr.f32.mxu0 0.0
      %4590 = vmatmul.mubr.f32.gmra.mrb[0].mxu0 %v4157
      %v4591 = vpop.f32.mrb[0].mxu0
      %v4592 = vadd.f32 %v4361, %v4591
      %v4593 = vpop.f32.mrb[0].mxu0
      %4594 = vmatprep.mubr.f32.mxu0 0.0
      %4595 = vmatmul.mubr.f32.gmra.mrb[0].mxu0 %v4160
      %v4596 = vpop.f32.mrb[0].mxu0
      %v4597 = vadd.f32 %v4366, %v4596
      %v4598 = vpop.f32.mrb[0].mxu0
      %4599 = vmatprep.mubr.f32.mxu0 0.0
      %4600 = vmatmul.mubr.f32.gmra.mrb[0].mxu0 %v4163
      %v4601 = vpop.f32.mrb[0].mxu0
      %v4602 = vadd.f32 %v4371, %v4601
      %v4603 = vpop.f32.mrb[0].mxu0
      %4604 = vmatprep.mubr.f32.mxu0 0.0
      %4605 = vmatmul.mubr.f32.gmra.mrb[0].mxu0 %v4166
      %v4606 = vpop.f32.mrb[0].mxu0
      %v4607 = vadd.f32 %v4376, %v4606
      %v4608 = vpop.f32.mrb[0].mxu0
      %4609 = vmatprep.mubr.f32.mxu0 0.0
      %4610 = vmatmul.mubr.f32.gmra.mrb[0].mxu0 %v4169
      %v4611 = vpop.f32.mrb[0].mxu0
      %v4612 = vadd.f32 %v4381, %v4611
      %v4613 = vpop.f32.mrb[0].mxu0
      %4614 = vmatprep.mubr.f32.mxu0 0.0
      %4615 = vmatmul.mubr.f32.gmra.mrb[0].mxu0 %v4172
      %v4616 = vpop.f32.mrb[0].mxu0
      %v4617 = vadd.f32 %v4386, %v4616
      %v4618 = vpop.f32.mrb[0].mxu0
      %4619 = vmatprep.mubr.f32.mxu0 0.0
      %4620 = vmatmul.mubr.f32.gmra.mrb[0].mxu0 %v4175
      %v4621 = vpop.f32.mrb[0].mxu0
      %v4622 = vadd.f32 %v4391, %v4621
      %v4623 = vpop.f32.mrb[0].mxu0
      %4624 = vmatprep.mubr.f32.mxu0 0.0
      %4625 = vmatmul.mubr.f32.gmra.mrb[0].mxu0 %v4178
      %v4626 = vpop.f32.mrb[0].mxu0
      %v4627 = vadd.f32 %v4396, %v4626
      %v4628 = vpop.f32.mrb[0].mxu0
      %4629 = vmatprep.mubr.f32.mxu0 0.0
      %4630 = vmatmul.mubr.f32.gmra.mrb[0].mxu0 %v4181
      %v4631 = vpop.f32.mrb[0].mxu0
      %v4632 = vadd.f32 %v4401, %v4631
      %v4633 = vpop.f32.mrb[0].mxu0
      %4634 = vmatprep.mubr.f32.mxu0 0.0
      %4635 = vmatmul.mubr.f32.gmra.mrb[0].mxu0 %v4184
      %v4636 = vpop.f32.mrb[0].mxu0
      %v4637 = vadd.f32 %v4406, %v4636
      %v4638 = vpop.f32.mrb[0].mxu0
      %4639 = vmatprep.mubr.f32.mxu0 0.0
      %4640 = vmatmul.mubr.f32.gmra.mrb[0].mxu0 %v4187
      %v4641 = vpop.f32.mrb[0].mxu0
      %v4642 = vadd.f32 %v4411, %v4641
      %v4643 = vpop.f32.mrb[0].mxu0
      %4644 = vmatprep.mubr.f32.mxu0 0.0
      %4645 = vmatmul.mubr.f32.gmra.mrb[0].mxu0 %v4190
      %v4646 = vpop.f32.mrb[0].mxu0
      %v4647 = vadd.f32 %v4416, %v4646
      %v4648 = vpop.f32.mrb[0].mxu0
      %4649 = vmatprep.mubr.f32.mxu0 0.0
      %4650 = vmatmul.mubr.f32.gmra.mrb[0].mxu0 %v4193
      %v4651 = vpop.f32.mrb[0].mxu0
      %v4652 = vadd.f32 %v4421, %v4651
      %v4653 = vpop.f32.mrb[0].mxu0
      %4654 = vmatprep.mubr.f32.mxu0 0.0
      %4655 = vmatmul.mubr.f32.gmra.mrb[0].mxu0 %v4196
      %v4656 = vpop.f32.mrb[0].mxu0
      %v4657 = vadd.f32 %v4426, %v4656
      %v4658 = vpop.f32.mrb[0].mxu0
      %4659 = vdwg.mxu0
      %s4660 = scalar_lea.vmem %s3, 96
      %v4661 = vld [vmem:[%s4660] sm:$0xff]
      %v4662 = vld [vmem:[%s4660 + $0x8] sm:$0xff]
      %v4663 = vld [vmem:[%s4660 + $0x10] sm:$0xff]
      %v4664 = vld [vmem:[%s4660 + $0x18] sm:$0xff]
      %v4665 = vld [vmem:[%s4660 + $0x20] sm:$0xff]
      %v4666 = vld [vmem:[%s4660 + $0x28] sm:$0xff]
      %v4668 = vsel %vm4107, %v4092, 0
      %v4671 = vsel %vm4107, %v4093, 0
      %4673 = vmatprep.subr.mxu0 0.0
      %4674 = vmatpush1.msra.mxu0 %v4661
      %4675 = vmatprep.subr.mxu0 0.0
      %4676 = vmatpush1.msra.mxu0 %v4662
      %4677 = vmatprep.subr.mxu0 0.0
      %4678 = vmatpush1.msra.mxu0 %v4663
      %4679 = vmatprep.subr.mxu0 0.0
      %4680 = vmatpush1.msra.mxu0 %v4664
      %4681 = vmatprep.subr.mxu0 0.0
      %4682 = vmatpush1.msra.mxu0 %v4665
      %4683 = vmatprep.subr.mxu0 0.0
      %4684 = vmatpush1.msra.mxu0 %v4666
      %4685 = vmatprep.subr.mxu0 0.0
      %4686 = vmatpush1.msra.mxu0 0.0
      %4687 = vmatprep.subr.mxu0 0.0
      %4688 = vmatpush1.msra.mxu0 0.0
      %4689 = vmatprep.subr.mxu0 0.0
      %4690 = vmatpush1.msra.mxu0 0.0
      %4691 = vmatprep.subr.mxu0 0.0
      %4692 = vmatpush1.msra.mxu0 0.0
      %4693 = vmatprep.subr.mxu0 0.0
      %4694 = vmatpush1.msra.mxu0 0.0
      %4695 = vmatprep.subr.mxu0 0.0
      %4696 = vmatpush1.msra.mxu0 0.0
      %4697 = vmatprep.subr.mxu0 0.0
      %4698 = vmatpush1.msra.mxu0 0.0
      %4699 = vmatprep.subr.mxu0 0.0
      %4700 = vmatpush1.msra.mxu0 0.0
      %4701 = vmatprep.subr.mxu0 0.0
      %4702 = vmatpush1.msra.mxu0 0.0
      %4703 = vmatprep.subr.mxu0 0.0
      %4704 = vmatpush1.msra.mxu0 0.0
      %4705 = vmatprep.subr.mxu0 0.0
      %4706 = vmatpush1.msra.mxu0 0.0
      %4707 = vmatprep.subr.mxu0 0.0
      %4708 = vmatpush1.msra.mxu0 0.0
      %4709 = vmatprep.subr.mxu0 0.0
      %4710 = vmatpush1.msra.mxu0 0.0
      %4711 = vmatprep.subr.mxu0 0.0
      %4712 = vmatpush1.msra.mxu0 0.0
      %4713 = vmatprep.subr.mxu0 0.0
      %4714 = vmatpush1.msra.mxu0 0.0
      %4715 = vmatprep.subr.mxu0 0.0
      %4716 = vmatpush1.msra.mxu0 0.0
      %4717 = vmatprep.subr.mxu0 0.0
      %4718 = vmatpush1.msra.mxu0 0.0
      %4719 = vmatprep.subr.mxu0 0.0
      %4720 = vmatpush1.msra.mxu0 0.0
      %4721 = vmatprep.subr.mxu0 0.0
      %4722 = vmatpush1.msra.mxu0 0.0
      %4723 = vmatprep.subr.mxu0 0.0
      %4724 = vmatpush1.msra.mxu0 0.0
      %4725 = vmatprep.subr.mxu0 0.0
      %4726 = vmatpush1.msra.mxu0 0.0
      %4727 = vmatprep.subr.mxu0 0.0
      %4728 = vmatpush1.msra.mxu0 0.0
      %4729 = vmatprep.subr.mxu0 0.0
      %4730 = vmatpush1.msra.mxu0 0.0
      %4731 = vmatprep.subr.mxu0 0.0
      %4732 = vmatpush1.msra.mxu0 0.0
      %4733 = vmatprep.subr.mxu0 0.0
      %4734 = vmatpush1.msra.mxu0 0.0
      %4735 = vmatprep.subr.mxu0 0.0
      %4736 = vmatpush1.msra.mxu0 0.0
      %4737 = vmatprep.mubr.f32.mxu0 0.0
      %4738 = vmatmul.mubr.f32.gmra.mrb[0].mxu0 %v4115
      %v4739 = vpop.f32.mrb[0].mxu0
      %v4740 = vadd.f32 0.0, %v4739
      %v4741 = vpop.f32.mrb[0].mxu0
      %4742 = vmatprep.mubr.f32.mxu0 0.0
      %4743 = vmatmul.mubr.f32.gmra.mrb[0].mxu0 %v4118
      %v4744 = vpop.f32.mrb[0].mxu0
      %v4745 = vadd.f32 0.0, %v4744
      %v4746 = vpop.f32.mrb[0].mxu0
      %4747 = vmatprep.mubr.f32.mxu0 0.0
      %4748 = vmatmul.mubr.f32.gmra.mrb[0].mxu0 %v4121
      %v4749 = vpop.f32.mrb[0].mxu0
      %v4750 = vadd.f32 0.0, %v4749
      %v4751 = vpop.f32.mrb[0].mxu0
      %4752 = vmatprep.mubr.f32.mxu0 0.0
      %4753 = vmatmul.mubr.f32.gmra.mrb[0].mxu0 %v4124
      %v4754 = vpop.f32.mrb[0].mxu0
      %v4755 = vadd.f32 0.0, %v4754
      %v4756 = vpop.f32.mrb[0].mxu0
      %4757 = vmatprep.mubr.f32.mxu0 0.0
      %4758 = vmatmul.mubr.f32.gmra.mrb[0].mxu0 %v4127
      %v4759 = vpop.f32.mrb[0].mxu0
      %v4760 = vadd.f32 0.0, %v4759
      %v4761 = vpop.f32.mrb[0].mxu0
      %4762 = vmatprep.mubr.f32.mxu0 0.0
      %4763 = vmatmul.mubr.f32.gmra.mrb[0].mxu0 %v4130
      %v4764 = vpop.f32.mrb[0].mxu0
      %v4765 = vadd.f32 0.0, %v4764
      %v4766 = vpop.f32.mrb[0].mxu0
      %4767 = vmatprep.mubr.f32.mxu0 0.0
      %4768 = vmatmul.mubr.f32.gmra.mrb[0].mxu0 %v4133
      %v4769 = vpop.f32.mrb[0].mxu0
      %v4770 = vadd.f32 0.0, %v4769
      %v4771 = vpop.f32.mrb[0].mxu0
      %4772 = vmatprep.mubr.f32.mxu0 0.0
      %4773 = vmatmul.mubr.f32.gmra.mrb[0].mxu0 %v4136
      %v4774 = vpop.f32.mrb[0].mxu0
      %v4775 = vadd.f32 0.0, %v4774
      %v4776 = vpop.f32.mrb[0].mxu0
      %4777 = vmatprep.mubr.f32.mxu0 0.0
      %4778 = vmatmul.mubr.f32.gmra.mrb[0].mxu0 %v4139
      %v4779 = vpop.f32.mrb[0].mxu0
      %v4780 = vadd.f32 0.0, %v4779
      %v4781 = vpop.f32.mrb[0].mxu0
      %4782 = vmatprep.mubr.f32.mxu0 0.0
      %4783 = vmatmul.mubr.f32.gmra.mrb[0].mxu0 %v4142
      %v4784 = vpop.f32.mrb[0].mxu0
      %v4785 = vadd.f32 0.0, %v4784
      %v4786 = vpop.f32.mrb[0].mxu0
      %4787 = vmatprep.mubr.f32.mxu0 0.0
      %4788 = vmatmul.mubr.f32.gmra.mrb[0].mxu0 %v4145
      %v4789 = vpop.f32.mrb[0].mxu0
      %v4790 = vadd.f32 0.0, %v4789
      %v4791 = vpop.f32.mrb[0].mxu0
      %4792 = vmatprep.mubr.f32.mxu0 0.0
      %4793 = vmatmul.mubr.f32.gmra.mrb[0].mxu0 %v4148
      %v4794 = vpop.f32.mrb[0].mxu0
      %v4795 = vadd.f32 0.0, %v4794
      %v4796 = vpop.f32.mrb[0].mxu0
      %4797 = vmatprep.mubr.f32.mxu0 0.0
      %4798 = vmatmul.mubr.f32.gmra.mrb[0].mxu0 %v4151
      %v4799 = vpop.f32.mrb[0].mxu0
      %v4800 = vadd.f32 0.0, %v4799
      %v4801 = vpop.f32.mrb[0].mxu0
      %4802 = vmatprep.mubr.f32.mxu0 0.0
      %4803 = vmatmul.mubr.f32.gmra.mrb[0].mxu0 %v4154
      %v4804 = vpop.f32.mrb[0].mxu0
      %v4805 = vadd.f32 0.0, %v4804
      %v4806 = vpop.f32.mrb[0].mxu0
      %4807 = vmatprep.mubr.f32.mxu0 0.0
      %4808 = vmatmul.mubr.f32.gmra.mrb[0].mxu0 %v4157
      %v4809 = vpop.f32.mrb[0].mxu0
      %v4810 = vadd.f32 0.0, %v4809
      %v4811 = vpop.f32.mrb[0].mxu0
      %4812 = vmatprep.mubr.f32.mxu0 0.0
      %4813 = vmatmul.mubr.f32.gmra.mrb[0].mxu0 %v4160
      %v4814 = vpop.f32.mrb[0].mxu0
      %v4815 = vadd.f32 0.0, %v4814
      %v4816 = vpop.f32.mrb[0].mxu0
      %4817 = vmatprep.mubr.f32.mxu0 0.0
      %4818 = vmatmul.mubr.f32.gmra.mrb[0].mxu0 %v4163
      %v4819 = vpop.f32.mrb[0].mxu0
      %v4820 = vadd.f32 0.0, %v4819
      %v4821 = vpop.f32.mrb[0].mxu0
      %4822 = vmatprep.mubr.f32.mxu0 0.0
      %4823 = vmatmul.mubr.f32.gmra.mrb[0].mxu0 %v4166
      %v4824 = vpop.f32.mrb[0].mxu0
      %v4825 = vadd.f32 0.0, %v4824
      %v4826 = vpop.f32.mrb[0].mxu0
      %4827 = vmatprep.mubr.f32.mxu0 0.0
      %4828 = vmatmul.mubr.f32.gmra.mrb[0].mxu0 %v4169
      %v4829 = vpop.f32.mrb[0].mxu0
      %v4830 = vadd.f32 0.0, %v4829
      %v4831 = vpop.f32.mrb[0].mxu0
      %4832 = vmatprep.mubr.f32.mxu0 0.0
      %4833 = vmatmul.mubr.f32.gmra.mrb[0].mxu0 %v4172
      %v4834 = vpop.f32.mrb[0].mxu0
      %v4835 = vadd.f32 0.0, %v4834
      %v4836 = vpop.f32.mrb[0].mxu0
      %4837 = vmatprep.mubr.f32.mxu0 0.0
      %4838 = vmatmul.mubr.f32.gmra.mrb[0].mxu0 %v4175
      %v4839 = vpop.f32.mrb[0].mxu0
      %v4840 = vadd.f32 0.0, %v4839
      %v4841 = vpop.f32.mrb[0].mxu0
      %4842 = vmatprep.mubr.f32.mxu0 0.0
      %4843 = vmatmul.mubr.f32.gmra.mrb[0].mxu0 %v4178
      %v4844 = vpop.f32.mrb[0].mxu0
      %v4845 = vadd.f32 0.0, %v4844
      %v4846 = vpop.f32.mrb[0].mxu0
      %4847 = vmatprep.mubr.f32.mxu0 0.0
      %4848 = vmatmul.mubr.f32.gmra.mrb[0].mxu0 %v4181
      %v4849 = vpop.f32.mrb[0].mxu0
      %v4850 = vadd.f32 0.0, %v4849
      %v4851 = vpop.f32.mrb[0].mxu0
      %4852 = vmatprep.mubr.f32.mxu0 0.0
      %4853 = vmatmul.mubr.f32.gmra.mrb[0].mxu0 %v4184
      %v4854 = vpop.f32.mrb[0].mxu0
      %v4855 = vadd.f32 0.0, %v4854
      %v4856 = vpop.f32.mrb[0].mxu0
      %4857 = vmatprep.mubr.f32.mxu0 0.0
      %4858 = vmatmul.mubr.f32.gmra.mrb[0].mxu0 %v4187
      %v4859 = vpop.f32.mrb[0].mxu0
      %v4860 = vadd.f32 0.0, %v4859
      %v4861 = vpop.f32.mrb[0].mxu0
      %4862 = vmatprep.mubr.f32.mxu0 0.0
      %4863 = vmatmul.mubr.f32.gmra.mrb[0].mxu0 %v4190
      %v4864 = vpop.f32.mrb[0].mxu0
      %v4865 = vadd.f32 0.0, %v4864
      %v4866 = vpop.f32.mrb[0].mxu0
      %4867 = vmatprep.mubr.f32.mxu0 0.0
      %4868 = vmatmul.mubr.f32.gmra.mrb[0].mxu0 %v4193
      %v4869 = vpop.f32.mrb[0].mxu0
      %v4870 = vadd.f32 0.0, %v4869
      %v4871 = vpop.f32.mrb[0].mxu0
      %4872 = vmatprep.mubr.f32.mxu0 0.0
      %4873 = vmatmul.mubr.f32.gmra.mrb[0].mxu0 %v4196
      %v4874 = vpop.f32.mrb[0].mxu0
      %v4875 = vadd.f32 0.0, %v4874
      %v4876 = vpop.f32.mrb[0].mxu0
      %4877 = vmatprep.mubr.f32.mxu0 0.0
      %4878 = vmatmul.mubr.f32.gmra.mrb[0].mxu0 %v4199
      %v4879 = vpop.f32.mrb[0].mxu0
      %v4880 = vadd.f32 0.0, %v4879
      %v4881 = vpop.f32.mrb[0].mxu0
      %4882 = vmatprep.mubr.f32.mxu0 0.0
      %4883 = vmatmul.mubr.f32.gmra.mrb[0].mxu0 %v4202
      %v4884 = vpop.f32.mrb[0].mxu0
      %v4885 = vadd.f32 0.0, %v4884
      %v4886 = vpop.f32.mrb[0].mxu0
      %4887 = vmatprep.mubr.f32.mxu0 0.0
      %4888 = vmatmul.mubr.f32.gmra.mrb[0].mxu0 %v4668
      %v4889 = vpop.f32.mrb[0].mxu0
      %v4890 = vadd.f32 0.0, %v4889
      %v4891 = vpop.f32.mrb[0].mxu0
      %4892 = vmatprep.mubr.f32.mxu0 0.0
      %4893 = vmatmul.mubr.f32.gmra.mrb[0].mxu0 %v4671
      %v4894 = vpop.f32.mrb[0].mxu0
      %v4895 = vadd.f32 0.0, %v4894
      %v4896 = vpop.f32.mrb[0].mxu0
      %4897 = vdwg.mxu0
      %v4898 = vadd.f32 %v4502, %v4740
      %v4899 = vadd.f32 %v4507, %v4745
      %v4900 = vadd.f32 %v4512, %v4750
      %v4901 = vadd.f32 %v4517, %v4755
      %v4902 = vadd.f32 %v4522, %v4760
      %v4903 = vadd.f32 %v4527, %v4765
      %v4904 = vadd.f32 %v4532, %v4770
      %v4905 = vadd.f32 %v4537, %v4775
      %v4906 = vadd.f32 %v4542, %v4780
      %v4907 = vadd.f32 %v4547, %v4785
      %v4908 = vadd.f32 %v4552, %v4790
      %v4909 = vadd.f32 %v4557, %v4795
      %v4910 = vadd.f32 %v4562, %v4800
      %v4911 = vadd.f32 %v4567, %v4805
      %v4912 = vadd.f32 %v4572, %v4810
      %v4913 = vadd.f32 %v4577, %v4815
      %v4914 = vadd.f32 %v4582, %v4820
      %v4915 = vadd.f32 %v4587, %v4825
      %v4916 = vadd.f32 %v4592, %v4830
      %v4917 = vadd.f32 %v4597, %v4835
      %v4918 = vadd.f32 %v4602, %v4840
      %v4919 = vadd.f32 %v4607, %v4845
      %v4920 = vadd.f32 %v4612, %v4850
      %v4921 = vadd.f32 %v4617, %v4855
      %v4922 = vadd.f32 %v4622, %v4860
      %v4923 = vadd.f32 %v4627, %v4865
      %v4924 = vadd.f32 %v4632, %v4870
      %v4925 = vadd.f32 %v4637, %v4875
      %v4926 = vadd.f32 %v4642, %v4880
      %v4927 = vadd.f32 %v4647, %v4885
      %v4928 = vadd.f32 %v4652, %v4890
      %v4929 = vadd.f32 %v4657, %v4895
      %v4930 = vmax.f32 %v4898, %v4900
      %v4931 = vmax.f32 %v4899, %v4901
      %v4932 = vmax.f32 %v4902, %v4904
      %v4933 = vmax.f32 %v4903, %v4905
      %v4934 = vmax.f32 %v4906, %v4908
      %v4935 = vmax.f32 %v4907, %v4909
      %v4936 = vmax.f32 %v4910, %v4912
      %v4937 = vmax.f32 %v4911, %v4913
      %v4938 = vmax.f32 %v4914, %v4916
      %v4939 = vmax.f32 %v4915, %v4917
      %v4940 = vmax.f32 %v4918, %v4920
      %v4941 = vmax.f32 %v4919, %v4921
      %v4942 = vmax.f32 %v4922, %v4924
      %v4943 = vmax.f32 %v4923, %v4925
      %v4944 = vmax.f32 %v4926, %v4928
      %v4945 = vmax.f32 %v4927, %v4929
      %4946 = vst [vmem:[#allocation3] sm:$0xff] %v4930
      %4947 = vst [vmem:[#allocation3 + $0x8] sm:$0xff] %v4931
      %4948 = vst [vmem:[#allocation3 + $0x10] sm:$0xff] %v4932
      %4949 = vst [vmem:[#allocation3 + $0x18] sm:$0xff] %v4933
      %4950 = vst [vmem:[#allocation3 + $0x20] sm:$0xff] %v4934
      %4951 = vst [vmem:[#allocation3 + $0x28] sm:$0xff] %v4935
      %4952 = vst [vmem:[#allocation3 + $0x30] sm:$0xff] %v4936
      %4953 = vst [vmem:[#allocation3 + $0x38] sm:$0xff] %v4937
      %4954 = vst [vmem:[#allocation3 + $0x40] sm:$0xff] %v4938
      %4955 = vst [vmem:[#allocation3 + $0x48] sm:$0xff] %v4939
      %4956 = vst [vmem:[#allocation3 + $0x50] sm:$0xff] %v4940
      %4957 = vst [vmem:[#allocation3 + $0x58] sm:$0xff] %v4941
      %4958 = vst [vmem:[#allocation3 + $0x60] sm:$0xff] %v4942
      %4959 = vst [vmem:[#allocation3 + $0x68] sm:$0xff] %v4943
      %4960 = vst [vmem:[#allocation3 + $0x70] sm:$0xff] %v4944
      %4961 = vst [vmem:[#allocation3 + $0x78] sm:$0xff] %v4945
      %v4962 = vld [vmem:[#allocation3] ss:$2 sm:$0xff]
      %s4963 = scalar_lea.vmem [#allocation3], 16
      %v4964 = vld [vmem:[%s4963] ss:$2 sm:$0xff]
      %s4965 = scalar_lea.vmem [#allocation3], 32
      %v4966 = vld [vmem:[%s4965] ss:$2 sm:$0xff]
      %s4967 = scalar_lea.vmem [#allocation3], 48
      %v4968 = vld [vmem:[%s4967] ss:$2 sm:$0xff]
      %s4969 = scalar_lea.vmem [#allocation3], 64
      %v4970 = vld [vmem:[%s4969] ss:$2 sm:$0xff]
      %s4971 = scalar_lea.vmem [#allocation3], 80
      %v4972 = vld [vmem:[%s4971] ss:$2 sm:$0xff]
      %s4973 = scalar_lea.vmem [#allocation3], 96
      %v4974 = vld [vmem:[%s4973] ss:$2 sm:$0xff]
      %s4975 = scalar_lea.vmem [#allocation3], 112
      %v4976 = vld [vmem:[%s4975] ss:$2 sm:$0xff]
      %s4977 = scalar_lea.vmem [#allocation3], 1
      %v4978 = vld [vmem:[%s4977] ss:$2 sm:$0xff]
      %s4979 = scalar_lea.vmem [#allocation3], 17
      %v4980 = vld [vmem:[%s4979] ss:$2 sm:$0xff]
      %s4981 = scalar_lea.vmem [#allocation3], 33
      %v4982 = vld [vmem:[%s4981] ss:$2 sm:$0xff]
      %s4983 = scalar_lea.vmem [#allocation3], 49
      %v4984 = vld [vmem:[%s4983] ss:$2 sm:$0xff]
      %s4985 = scalar_lea.vmem [#allocation3], 65
      %v4986 = vld [vmem:[%s4985] ss:$2 sm:$0xff]
      %s4987 = scalar_lea.vmem [#allocation3], 81
      %v4988 = vld [vmem:[%s4987] ss:$2 sm:$0xff]
      %s4989 = scalar_lea.vmem [#allocation3], 97
      %v4990 = vld [vmem:[%s4989] ss:$2 sm:$0xff]
      %s4991 = scalar_lea.vmem [#allocation3], 113
      %v4992 = vld [vmem:[%s4991] ss:$2 sm:$0xff]
      %v4993 = vmax.f32 %v4962, %v4978
      %v4994 = vmax.f32 %v4964, %v4980
      %v4995 = vmax.f32 %v4966, %v4982
      %v4996 = vmax.f32 %v4968, %v4984
      %v4997 = vmax.f32 %v4970, %v4986
      %v4998 = vmax.f32 %v4972, %v4988
      %v4999 = vmax.f32 %v4974, %v4990
      %v5000 = vmax.f32 %v4976, %v4992
      %v5001 = vld [vmem:[%s4] sm:$0x1]
      %v5003 = vlaneseq
      %v5004 = vshrl.u32 %v5003, 7
      %v5005 = vsub.s32 0, %v5004
      %v5006 = vrot.slane %v5001, %v5005
      %v5008 = vadd.f32 %v4993, %v5006
      %v5009 = vadd.f32 %v4994, %v5006
      %v5010 = vadd.f32 %v4995, %v5006
      %v5011 = vadd.f32 %v4996, %v5006
      %v5012 = vadd.f32 %v4997, %v5006
      %v5013 = vadd.f32 %v4998, %v5006
      %v5014 = vadd.f32 %v4999, %v5006
      %v5015 = vadd.f32 %v5000, %v5006
      %v5016 = vtanh.pop %v5008
      %v5017 = vtanh.pop %v5009
      %v5018 = vtanh.pop %v5010
      %v5019 = vtanh.pop %v5011
      %v5020 = vtanh.pop %v5012
      %v5021 = vtanh.pop %v5013
      %v5022 = vtanh.pop %v5014
      %v5023 = vtanh.pop %v5015
      %v5032 = vrot.slane %v5016, 1
      %v5033 = vrot.slane %v5017, 1
      %v5034 = vrot.slane %v5018, 1
      %v5035 = vrot.slane %v5019, 1
      %v5036 = vrot.slane %v5020, 1
      %v5037 = vrot.slane %v5021, 1
      %v5038 = vrot.slane %v5022, 1
      %v5039 = vrot.slane %v5023, 1
      %5040 = vrot.lane.b32.xlu0 %v5032, 48
      %v5041 = vpop.permute.xlu0 %5040
      %5042 = vrot.lane.b32.xlu0 %v5033, 48
      %v5043 = vpop.permute.xlu0 %5042
      %5044 = vrot.lane.b32.xlu0 %v5034, 48
      %v5045 = vpop.permute.xlu0 %5044
      %5046 = vrot.lane.b32.xlu0 %v5035, 48
      %v5047 = vpop.permute.xlu0 %5046
      %5048 = vrot.lane.b32.xlu0 %v5036, 48
      %v5049 = vpop.permute.xlu0 %5048
      %5050 = vrot.lane.b32.xlu0 %v5037, 48
      %v5051 = vpop.permute.xlu0 %5050
      %5052 = vrot.lane.b32.xlu0 %v5038, 48
      %v5053 = vpop.permute.xlu0 %5052
      %5054 = vrot.lane.b32.xlu0 %v5039, 48
      %v5055 = vpop.permute.xlu0 %5054
      %v5064 = vrot.slane %v5016, 2
      %v5065 = vrot.slane %v5017, 2
      %v5066 = vrot.slane %v5018, 2
      %v5067 = vrot.slane %v5019, 2
      %v5068 = vrot.slane %v5020, 2
      %v5069 = vrot.slane %v5021, 2
      %v5070 = vrot.slane %v5022, 2
      %v5071 = vrot.slane %v5023, 2
      %5072 = vrot.lane.b32.xlu0 %v5064, 96
      %v5073 = vpop.permute.xlu0 %5072
      %5074 = vrot.lane.b32.xlu0 %v5065, 96
      %v5075 = vpop.permute.xlu0 %5074
      %5076 = vrot.lane.b32.xlu0 %v5066, 96
      %v5077 = vpop.permute.xlu0 %5076
      %5078 = vrot.lane.b32.xlu0 %v5067, 96
      %v5079 = vpop.permute.xlu0 %5078
      %5080 = vrot.lane.b32.xlu0 %v5068, 96
      %v5081 = vpop.permute.xlu0 %5080
      %5082 = vrot.lane.b32.xlu0 %v5069, 96
      %v5083 = vpop.permute.xlu0 %5082
      %5084 = vrot.lane.b32.xlu0 %v5070, 96
      %v5085 = vpop.permute.xlu0 %5084
      %5086 = vrot.lane.b32.xlu0 %v5071, 96
      %v5087 = vpop.permute.xlu0 %5086
      %v5096 = vsel %vm4107, %v5016, %v5041
      %v5097 = vsel %vm4107, %v5017, %v5043
      %v5098 = vsel %vm4107, %v5018, %v5045
      %v5099 = vsel %vm4107, %v5019, %v5047
      %v5100 = vsel %vm4107, %v5020, %v5049
      %v5101 = vsel %vm4107, %v5021, %v5051
      %v5102 = vsel %vm4107, %v5022, %v5053
      %v5103 = vsel %vm4107, %v5023, %v5055
      %vm5104 = vcmask 785408
      %v5105 = vsel %vm5104, %v5096, %v5073
      %v5106 = vsel %vm5104, %v5097, %v5075
      %v5107 = vsel %vm5104, %v5098, %v5077
      %v5108 = vsel %vm5104, %v5099, %v5079
      %v5109 = vsel %vm5104, %v5100, %v5081
      %v5110 = vsel %vm5104, %v5101, %v5083
      %v5111 = vsel %vm5104, %v5102, %v5085
      %v5112 = vsel %vm5104, %v5103, %v5087
      %v5119 = vcombine.low %v5105, %v5073
      %v5120 = vcombine.high %v5105, %v5073
      %v5122 = vunpack.c.l.s4 1983009808
      %v5123 = vunpack.c.0.s8 %v5122
      %v5124 = vlaneseq
      %v5125 = vshrl.u32 %v5124, 7
      %v5126 = vsub.s32 %v5123, %v5125
      %v5127 = vrot.slane %v5119, %v5126
      %v5129 = vunpack.c.l.s4 1983009808
      %v5130 = vunpack.c.0.s8 %v5129
      %v5131 = vlaneseq
      %v5132 = vshrl.u32 %v5131, 7
      %v5133 = vsub.s32 %v5130, %v5132
      %v5134 = vrot.slane %v5120, %v5133
      %v5135 = vcombine.high %v5127, %v5127
      %v5136 = vcombine.low %v5106, %v5075
      %v5137 = vcombine.high %v5106, %v5075
      %v5139 = vunpack.c.l.s4 1983009808
      %v5140 = vunpack.c.0.s8 %v5139
      %v5141 = vlaneseq
      %v5142 = vshrl.u32 %v5141, 7
      %v5143 = vsub.s32 %v5140, %v5142
      %v5144 = vrot.slane %v5136, %v5143
      %v5146 = vunpack.c.l.s4 1983009808
      %v5147 = vunpack.c.0.s8 %v5146
      %v5148 = vlaneseq
      %v5149 = vshrl.u32 %v5148, 7
      %v5150 = vsub.s32 %v5147, %v5149
      %v5151 = vrot.slane %v5137, %v5150
      %v5152 = vcombine.high %v5144, %v5144
      %v5153 = vcombine.low %v5107, %v5077
      %v5154 = vcombine.high %v5107, %v5077
      %v5156 = vunpack.c.l.s4 1983009808
      %v5157 = vunpack.c.0.s8 %v5156
      %v5158 = vlaneseq
      %v5159 = vshrl.u32 %v5158, 7
      %v5160 = vsub.s32 %v5157, %v5159
      %v5161 = vrot.slane %v5153, %v5160
      %v5163 = vunpack.c.l.s4 1983009808
      %v5164 = vunpack.c.0.s8 %v5163
      %v5165 = vlaneseq
      %v5166 = vshrl.u32 %v5165, 7
      %v5167 = vsub.s32 %v5164, %v5166
      %v5168 = vrot.slane %v5154, %v5167
      %v5169 = vcombine.high %v5161, %v5161
      %v5170 = vcombine.low %v5108, %v5079
      %v5171 = vcombine.high %v5108, %v5079
      %v5173 = vunpack.c.l.s4 1983009808
      %v5174 = vunpack.c.0.s8 %v5173
      %v5175 = vlaneseq
      %v5176 = vshrl.u32 %v5175, 7
      %v5177 = vsub.s32 %v5174, %v5176
      %v5178 = vrot.slane %v5170, %v5177
      %v5180 = vunpack.c.l.s4 1983009808
      %v5181 = vunpack.c.0.s8 %v5180
      %v5182 = vlaneseq
      %v5183 = vshrl.u32 %v5182, 7
      %v5184 = vsub.s32 %v5181, %v5183
      %v5185 = vrot.slane %v5171, %v5184
      %v5186 = vcombine.high %v5178, %v5178
      %v5187 = vcombine.low %v5109, %v5081
      %v5188 = vcombine.high %v5109, %v5081
      %v5190 = vunpack.c.l.s4 1983009808
      %v5191 = vunpack.c.0.s8 %v5190
      %v5192 = vlaneseq
      %v5193 = vshrl.u32 %v5192, 7
      %v5194 = vsub.s32 %v5191, %v5193
      %v5195 = vrot.slane %v5187, %v5194
      %v5197 = vunpack.c.l.s4 1983009808
      %v5198 = vunpack.c.0.s8 %v5197
      %v5199 = vlaneseq
      %v5200 = vshrl.u32 %v5199, 7
      %v5201 = vsub.s32 %v5198, %v5200
      %v5202 = vrot.slane %v5188, %v5201
      %v5203 = vcombine.high %v5195, %v5195
      %v5204 = vcombine.low %v5110, %v5083
      %v5205 = vcombine.high %v5110, %v5083
      %v5207 = vunpack.c.l.s4 1983009808
      %v5208 = vunpack.c.0.s8 %v5207
      %v5209 = vlaneseq
      %v5210 = vshrl.u32 %v5209, 7
      %v5211 = vsub.s32 %v5208, %v5210
      %v5212 = vrot.slane %v5204, %v5211
      %v5214 = vunpack.c.l.s4 1983009808
      %v5215 = vunpack.c.0.s8 %v5214
      %v5216 = vlaneseq
      %v5217 = vshrl.u32 %v5216, 7
      %v5218 = vsub.s32 %v5215, %v5217
      %v5219 = vrot.slane %v5205, %v5218
      %v5220 = vcombine.high %v5212, %v5212
      %v5221 = vld [vmem:[%s5] sm:$0xff]
      %v5222 = vld [vmem:[%s5 + $0x8] sm:$0xff]
      %v5223 = vld [vmem:[%s5 + $0x10] sm:$0xff]
      %v5224 = vld [vmem:[%s5 + $0x18] sm:$0xff]
      %v5225 = vld [vmem:[%s5 + $0x20] sm:$0xff]
      %v5226 = vld [vmem:[%s5 + $0x28] sm:$0xff]
      %v5227 = vld [vmem:[%s5 + $0x30] sm:$0xff]
      %v5228 = vld [vmem:[%s5 + $0x38] sm:$0xff]
      %v5229 = vld [vmem:[%s5 + $0x40] sm:$0xff]
      %v5230 = vld [vmem:[%s5 + $0x48] sm:$0xff]
      %v5231 = vld [vmem:[%s5 + $0x50] sm:$0xff]
      %v5232 = vld [vmem:[%s5 + $0x58] sm:$0xff]
      %v5233 = vld [vmem:[%s5 + $0x60] sm:$0xff]
      %v5234 = vld [vmem:[%s5 + $0x68] sm:$0xff]
      %v5235 = vld [vmem:[%s5 + $0x70] sm:$0xff]
      %v5236 = vld [vmem:[%s5 + $0x78] sm:$0xff]
      %v5237 = vld [vmem:[%s5 + $0x80] sm:$0xff]
      %v5238 = vld [vmem:[%s5 + $0x88] sm:$0xff]
      %v5240 = vcombine.low %v5111, %v5085
      %v5241 = vcombine.high %v5111, %v5085
      %v5243 = vunpack.c.l.s4 1983009808
      %v5244 = vunpack.c.0.s8 %v5243
      %v5245 = vlaneseq
      %v5246 = vshrl.u32 %v5245, 7
      %v5247 = vsub.s32 %v5244, %v5246
      %v5248 = vrot.slane %v5240, %v5247
      %v5250 = vunpack.c.l.s4 1983009808
      %v5251 = vunpack.c.0.s8 %v5250
      %v5252 = vlaneseq
      %v5253 = vshrl.u32 %v5252, 7
      %v5254 = vsub.s32 %v5251, %v5253
      %v5255 = vrot.slane %v5241, %v5254
      %v5256 = vcombine.high %v5248, %v5248
      %s5257 = scalar_lea.vmem %s5, 144
      %v5258 = vld [vmem:[%s5257] sm:$0xff]
      %v5259 = vld [vmem:[%s5257 + $0x8] sm:$0xff]
      %v5260 = vld [vmem:[%s5257 + $0x10] sm:$0xff]
      %v5261 = vld [vmem:[%s5257 + $0x18] sm:$0xff]
      %v5262 = vld [vmem:[%s5257 + $0x20] sm:$0xff]
      %v5263 = vld [vmem:[%s5257 + $0x28] sm:$0xff]
      %v5264 = vld [vmem:[%s5257 + $0x30] sm:$0xff]
      %v5265 = vld [vmem:[%s5257 + $0x38] sm:$0xff]
      %v5266 = vld [vmem:[%s5257 + $0x40] sm:$0xff]
      %v5267 = vld [vmem:[%s5257 + $0x48] sm:$0xff]
      %v5268 = vld [vmem:[%s5257 + $0x50] sm:$0xff]
      %v5269 = vld [vmem:[%s5257 + $0x58] sm:$0xff]
      %v5270 = vld [vmem:[%s5257 + $0x60] sm:$0xff]
      %v5271 = vld [vmem:[%s5257 + $0x68] sm:$0xff]
      %v5272 = vld [vmem:[%s5257 + $0x70] sm:$0xff]
      %v5273 = vld [vmem:[%s5257 + $0x78] sm:$0xff]
      %v5274 = vld [vmem:[%s5257 + $0x80] sm:$0xff]
      %v5275 = vld [vmem:[%s5257 + $0x88] sm:$0xff]
      %v5276 = vcombine.low %v5144, %v5152
      %v5277 = vcombine.low %v5151, %v5161
      %v5279 = vunpack.c.l.s4 1983009808
      %v5280 = vunpack.c.0.s8 %v5279
      %v5281 = vlaneseq
      %v5282 = vshrl.u32 %v5281, 7
      %v5283 = vsub.s32 %v5280, %v5282
      %v5284 = vrot.slane %v5276, %v5283
      %v5286 = vunpack.c.l.s4 1983009808
      %v5287 = vunpack.c.0.s8 %v5286
      %v5288 = vlaneseq
      %v5289 = vshrl.u32 %v5288, 7
      %v5290 = vsub.s32 %v5287, %v5289
      %v5291 = vrot.slane %v5277, %v5290
      %v5292 = vcombine.low %v5284, %v5291
      %v5293 = vcombine.high %v5284, %v5291
      %v5294 = vcombine.low %v5169, %v5168
      %v5295 = vcombine.low %v5178, %v5186
      %v5297 = vunpack.c.l.s4 1983009808
      %v5298 = vunpack.c.0.s8 %v5297
      %v5299 = vlaneseq
      %v5300 = vshrl.u32 %v5299, 7
      %v5301 = vsub.s32 %v5298, %v5300
      %v5302 = vrot.slane %v5294, %v5301
      %v5304 = vunpack.c.l.s4 1983009808
      %v5305 = vunpack.c.0.s8 %v5304
      %v5306 = vlaneseq
      %v5307 = vshrl.u32 %v5306, 7
      %v5308 = vsub.s32 %v5305, %v5307
      %v5309 = vrot.slane %v5295, %v5308
      %v5310 = vcombine.low %v5302, %v5309
      %v5311 = vcombine.high %v5302, %v5309
      %v5312 = vcombine.low %v5185, %v5195
      %v5313 = vcombine.low %v5203, %v5202
      %v5315 = vunpack.c.l.s4 1983009808
      %v5316 = vunpack.c.0.s8 %v5315
      %v5317 = vlaneseq
      %v5318 = vshrl.u32 %v5317, 7
      %v5319 = vsub.s32 %v5316, %v5318
      %v5320 = vrot.slane %v5312, %v5319
      %v5322 = vunpack.c.l.s4 1983009808
      %v5323 = vunpack.c.0.s8 %v5322
      %v5324 = vlaneseq
      %v5325 = vshrl.u32 %v5324, 7
      %v5326 = vsub.s32 %v5323, %v5325
      %v5327 = vrot.slane %v5313, %v5326
      %v5328 = vcombine.low %v5320, %v5327
      %v5329 = vcombine.high %v5320, %v5327
      %v5330 = vcombine.low %v5212, %v5220
      %v5331 = vcombine.low %v5219, %v5248
      %v5333 = vunpack.c.l.s4 1983009808
      %v5334 = vunpack.c.0.s8 %v5333
      %v5335 = vlaneseq
      %v5336 = vshrl.u32 %v5335, 7
      %v5337 = vsub.s32 %v5334, %v5336
      %v5338 = vrot.slane %v5330, %v5337
      %v5340 = vunpack.c.l.s4 1983009808
      %v5341 = vunpack.c.0.s8 %v5340
      %v5342 = vlaneseq
      %v5343 = vshrl.u32 %v5342, 7
      %v5344 = vsub.s32 %v5341, %v5343
      %v5345 = vrot.slane %v5331, %v5344
      %v5346 = vcombine.low %v5338, %v5345
      %v5347 = vcombine.high %v5338, %v5345
      %v5348 = vcombine.low %v5256, %v5255
      %v5350 = vunpack.c.l.s4 1983009808
      %v5351 = vunpack.c.0.s8 %v5350
      %v5352 = vlaneseq
      %v5353 = vshrl.u32 %v5352, 7
      %v5354 = vsub.s32 %v5351, %v5353
      %v5355 = vrot.slane %v5348, %v5354
      %v5356 = vcombine.high %v5355, %v5355
      %v5362 = vsel %vm4020, %v5293, 0
      %v5364 = vsel %vm4020, %v5311, 0
      %v5366 = vsel %vm4020, %v5329, 0
      %v5368 = vsel %vm4020, %v5347, 0
      %v5370 = vsel %vm4020, %v5356, 0
      %5372 = vmatprep.subr.mxu0 0.0
      %5373 = vmatpush1.msra.mxu0 %v5258
      %5374 = vmatprep.subr.mxu0 0.0
      %5375 = vmatpush1.msra.mxu0 %v5259
      %5376 = vmatprep.subr.mxu0 0.0
      %5377 = vmatpush1.msra.mxu0 %v5260
      %5378 = vmatprep.subr.mxu0 0.0
      %5379 = vmatpush1.msra.mxu0 %v5261
      %5380 = vmatprep.subr.mxu0 0.0
      %5381 = vmatpush1.msra.mxu0 %v5262
      %5382 = vmatprep.subr.mxu0 0.0
      %5383 = vmatpush1.msra.mxu0 %v5263
      %5384 = vmatprep.subr.mxu0 0.0
      %5385 = vmatpush1.msra.mxu0 %v5264
      %5386 = vmatprep.subr.mxu0 0.0
      %5387 = vmatpush1.msra.mxu0 %v5265
      %5388 = vmatprep.subr.mxu0 0.0
      %5389 = vmatpush1.msra.mxu0 %v5266
      %5390 = vmatprep.subr.mxu0 0.0
      %5391 = vmatpush1.msra.mxu0 %v5267
      %5392 = vmatprep.subr.mxu0 0.0
      %5393 = vmatpush1.msra.mxu0 %v5268
      %5394 = vmatprep.subr.mxu0 0.0
      %5395 = vmatpush1.msra.mxu0 %v5269
      %5396 = vmatprep.subr.mxu0 0.0
      %5397 = vmatpush1.msra.mxu0 %v5270
      %5398 = vmatprep.subr.mxu0 0.0
      %5399 = vmatpush1.msra.mxu0 %v5271
      %5400 = vmatprep.subr.mxu0 0.0
      %5401 = vmatpush1.msra.mxu0 %v5272
      %5402 = vmatprep.subr.mxu0 0.0
      %5403 = vmatpush1.msra.mxu0 %v5273
      %5404 = vmatprep.subr.mxu0 0.0
      %5405 = vmatpush1.msra.mxu0 %v5274
      %5406 = vmatprep.subr.mxu0 0.0
      %5407 = vmatpush1.msra.mxu0 %v5275
      %5408 = vmatprep.subr.mxu0 0.0
      %5409 = vmatpush1.msra.mxu0 0.0
      %5410 = vmatprep.subr.mxu0 0.0
      %5411 = vmatpush1.msra.mxu0 0.0
      %5412 = vmatprep.subr.mxu0 0.0
      %5413 = vmatpush1.msra.mxu0 0.0
      %5414 = vmatprep.subr.mxu0 0.0
      %5415 = vmatpush1.msra.mxu0 0.0
      %5416 = vmatprep.subr.mxu0 0.0
      %5417 = vmatpush1.msra.mxu0 0.0
      %5418 = vmatprep.subr.mxu0 0.0
      %5419 = vmatpush1.msra.mxu0 0.0
      %5420 = vmatprep.subr.mxu0 0.0
      %5421 = vmatpush1.msra.mxu0 0.0
      %5422 = vmatprep.subr.mxu0 0.0
      %5423 = vmatpush1.msra.mxu0 0.0
      %5424 = vmatprep.subr.mxu0 0.0
      %5425 = vmatpush1.msra.mxu0 0.0
      %5426 = vmatprep.subr.mxu0 0.0
      %5427 = vmatpush1.msra.mxu0 0.0
      %5428 = vmatprep.subr.mxu0 0.0
      %5429 = vmatpush1.msra.mxu0 0.0
      %5430 = vmatprep.subr.mxu0 0.0
      %5431 = vmatpush1.msra.mxu0 0.0
      %5432 = vmatprep.subr.mxu0 0.0
      %5433 = vmatpush1.msra.mxu0 0.0
      %5434 = vmatprep.subr.mxu0 0.0
      %5435 = vmatpush1.msra.mxu0 0.0
      %5436 = vmatprep.mubr.f32.mxu0 %v5362
      %5437 = vmatmul.mubr.f32.gmra.mrb[0].mxu0 %v5292
      %v5438 = vpop.f32.mrb[0].mxu0
      %v5439 = vadd.f32 0.0, %v5438
      %v5440 = vpop.f32.mrb[0].mxu0
      %5441 = vmatprep.mubr.f32.mxu0 %v5364
      %5442 = vmatmul.mubr.f32.gmra.mrb[0].mxu0 %v5310
      %v5443 = vpop.f32.mrb[0].mxu0
      %v5444 = vadd.f32 0.0, %v5443
      %v5445 = vpop.f32.mrb[0].mxu0
      %5446 = vmatprep.mubr.f32.mxu0 %v5366
      %5447 = vmatmul.mubr.f32.gmra.mrb[0].mxu0 %v5328
      %v5448 = vpop.f32.mrb[0].mxu0
      %v5449 = vadd.f32 0.0, %v5448
      %v5450 = vpop.f32.mrb[0].mxu0
      %5451 = vmatprep.mubr.f32.mxu0 %v5368
      %5452 = vmatmul.mubr.f32.gmra.mrb[0].mxu0 %v5346
      %v5453 = vpop.f32.mrb[0].mxu0
      %v5454 = vadd.f32 0.0, %v5453
      %v5455 = vpop.f32.mrb[0].mxu0
      %5456 = vmatprep.mubr.f32.mxu0 %v5370
      %5457 = vmatmul.mubr.f32.gmra.mrb[0].mxu0 %v5355
      %v5458 = vpop.f32.mrb[0].mxu0
      %v5459 = vadd.f32 0.0, %v5458
      %v5460 = vpop.f32.mrb[0].mxu0
      %5461 = vdwg.mxu0
      %v5462 = vcombine.low %v5127, %v5135
      %v5463 = vcombine.low %v5134, %v5144
      %v5465 = vunpack.c.l.s4 1983009808
      %v5466 = vunpack.c.0.s8 %v5465
      %v5467 = vlaneseq
      %v5468 = vshrl.u32 %v5467, 7
      %v5469 = vsub.s32 %v5466, %v5468
      %v5470 = vrot.slane %v5462, %v5469
      %v5472 = vunpack.c.l.s4 1983009808
      %v5473 = vunpack.c.0.s8 %v5472
      %v5474 = vlaneseq
      %v5475 = vshrl.u32 %v5474, 7
      %v5476 = vsub.s32 %v5473, %v5475
      %v5477 = vrot.slane %v5463, %v5476
      %v5478 = vcombine.low %v5470, %v5477
      %v5479 = vcombine.high %v5470, %v5477
      %v5480 = vcombine.low %v5152, %v5151
      %v5481 = vcombine.low %v5161, %v5169
      %v5483 = vunpack.c.l.s4 1983009808
      %v5484 = vunpack.c.0.s8 %v5483
      %v5485 = vlaneseq
      %v5486 = vshrl.u32 %v5485, 7
      %v5487 = vsub.s32 %v5484, %v5486
      %v5488 = vrot.slane %v5480, %v5487
      %v5490 = vunpack.c.l.s4 1983009808
      %v5491 = vunpack.c.0.s8 %v5490
      %v5492 = vlaneseq
      %v5493 = vshrl.u32 %v5492, 7
      %v5494 = vsub.s32 %v5491, %v5493
      %v5495 = vrot.slane %v5481, %v5494
      %v5496 = vcombine.low %v5488, %v5495
      %v5497 = vcombine.high %v5488, %v5495
      %v5498 = vcombine.low %v5168, %v5178
      %v5499 = vcombine.low %v5186, %v5185
      %v5501 = vunpack.c.l.s4 1983009808
      %v5502 = vunpack.c.0.s8 %v5501
      %v5503 = vlaneseq
      %v5504 = vshrl.u32 %v5503, 7
      %v5505 = vsub.s32 %v5502, %v5504
      %v5506 = vrot.slane %v5498, %v5505
      %v5508 = vunpack.c.l.s4 1983009808
      %v5509 = vunpack.c.0.s8 %v5508
      %v5510 = vlaneseq
      %v5511 = vshrl.u32 %v5510, 7
      %v5512 = vsub.s32 %v5509, %v5511
      %v5513 = vrot.slane %v5499, %v5512
      %v5514 = vcombine.low %v5506, %v5513
      %v5515 = vcombine.high %v5506, %v5513
      %v5516 = vcombine.low %v5195, %v5203
      %v5517 = vcombine.low %v5202, %v5212
      %v5519 = vunpack.c.l.s4 1983009808
      %v5520 = vunpack.c.0.s8 %v5519
      %v5521 = vlaneseq
      %v5522 = vshrl.u32 %v5521, 7
      %v5523 = vsub.s32 %v5520, %v5522
      %v5524 = vrot.slane %v5516, %v5523
      %v5526 = vunpack.c.l.s4 1983009808
      %v5527 = vunpack.c.0.s8 %v5526
      %v5528 = vlaneseq
      %v5529 = vshrl.u32 %v5528, 7
      %v5530 = vsub.s32 %v5527, %v5529
      %v5531 = vrot.slane %v5517, %v5530
      %v5532 = vcombine.low %v5524, %v5531
      %v5533 = vcombine.high %v5524, %v5531
      %v5534 = vcombine.low %v5220, %v5219
      %v5536 = vunpack.c.l.s4 1983009808
      %v5537 = vunpack.c.0.s8 %v5536
      %v5538 = vlaneseq
      %v5539 = vshrl.u32 %v5538, 7
      %v5540 = vsub.s32 %v5537, %v5539
      %v5541 = vrot.slane %v5534, %v5540
      %v5542 = vcombine.high %v5541, %v5541
      %v5548 = vsel %vm4020, %v5479, 0
      %v5550 = vsel %vm4020, %v5497, 0
      %v5552 = vsel %vm4020, %v5515, 0
      %v5554 = vsel %vm4020, %v5533, 0
      %v5556 = vsel %vm4020, %v5542, 0
      %5558 = vmatprep.subr.mxu0 0.0
      %5559 = vmatpush1.msra.mxu0 %v5221
      %5560 = vmatprep.subr.mxu0 0.0
      %5561 = vmatpush1.msra.mxu0 %v5222
      %5562 = vmatprep.subr.mxu0 0.0
      %5563 = vmatpush1.msra.mxu0 %v5223
      %5564 = vmatprep.subr.mxu0 0.0
      %5565 = vmatpush1.msra.mxu0 %v5224
      %5566 = vmatprep.subr.mxu0 0.0
      %5567 = vmatpush1.msra.mxu0 %v5225
      %5568 = vmatprep.subr.mxu0 0.0
      %5569 = vmatpush1.msra.mxu0 %v5226
      %5570 = vmatprep.subr.mxu0 0.0
      %5571 = vmatpush1.msra.mxu0 %v5227
      %5572 = vmatprep.subr.mxu0 0.0
      %5573 = vmatpush1.msra.mxu0 %v5228
      %5574 = vmatprep.subr.mxu0 0.0
      %5575 = vmatpush1.msra.mxu0 %v5229
      %5576 = vmatprep.subr.mxu0 0.0
      %5577 = vmatpush1.msra.mxu0 %v5230
      %5578 = vmatprep.subr.mxu0 0.0
      %5579 = vmatpush1.msra.mxu0 %v5231
      %5580 = vmatprep.subr.mxu0 0.0
      %5581 = vmatpush1.msra.mxu0 %v5232
      %5582 = vmatprep.subr.mxu0 0.0
      %5583 = vmatpush1.msra.mxu0 %v5233
      %5584 = vmatprep.subr.mxu0 0.0
      %5585 = vmatpush1.msra.mxu0 %v5234
      %5586 = vmatprep.subr.mxu0 0.0
      %5587 = vmatpush1.msra.mxu0 %v5235
      %5588 = vmatprep.subr.mxu0 0.0
      %5589 = vmatpush1.msra.mxu0 %v5236
      %5590 = vmatprep.subr.mxu0 0.0
      %5591 = vmatpush1.msra.mxu0 %v5237
      %5592 = vmatprep.subr.mxu0 0.0
      %5593 = vmatpush1.msra.mxu0 %v5238
      %5594 = vmatprep.subr.mxu0 0.0
      %5595 = vmatpush1.msra.mxu0 0.0
      %5596 = vmatprep.subr.mxu0 0.0
      %5597 = vmatpush1.msra.mxu0 0.0
      %5598 = vmatprep.subr.mxu0 0.0
      %5599 = vmatpush1.msra.mxu0 0.0
      %5600 = vmatprep.subr.mxu0 0.0
      %5601 = vmatpush1.msra.mxu0 0.0
      %5602 = vmatprep.subr.mxu0 0.0
      %5603 = vmatpush1.msra.mxu0 0.0
      %5604 = vmatprep.subr.mxu0 0.0
      %5605 = vmatpush1.msra.mxu0 0.0
      %5606 = vmatprep.subr.mxu0 0.0
      %5607 = vmatpush1.msra.mxu0 0.0
      %5608 = vmatprep.subr.mxu0 0.0
      %5609 = vmatpush1.msra.mxu0 0.0
      %5610 = vmatprep.subr.mxu0 0.0
      %5611 = vmatpush1.msra.mxu0 0.0
      %5612 = vmatprep.subr.mxu0 0.0
      %5613 = vmatpush1.msra.mxu0 0.0
      %5614 = vmatprep.subr.mxu0 0.0
      %5615 = vmatpush1.msra.mxu0 0.0
      %5616 = vmatprep.subr.mxu0 0.0
      %5617 = vmatpush1.msra.mxu0 0.0
      %5618 = vmatprep.subr.mxu0 0.0
      %5619 = vmatpush1.msra.mxu0 0.0
      %5620 = vmatprep.subr.mxu0 0.0
      %5621 = vmatpush1.msra.mxu0 0.0
      %5622 = vmatprep.mubr.f32.mxu0 %v5548
      %5623 = vmatmul.mubr.f32.gmra.mrb[0].mxu0 %v5478
      %v5624 = vpop.f32.mrb[0].mxu0
      %v5625 = vadd.f32 %v5439, %v5624
      %v5626 = vpop.f32.mrb[0].mxu0
      %5627 = vmatprep.mubr.f32.mxu0 %v5550
      %5628 = vmatmul.mubr.f32.gmra.mrb[0].mxu0 %v5496
      %v5629 = vpop.f32.mrb[0].mxu0
      %v5630 = vadd.f32 %v5444, %v5629
      %v5631 = vpop.f32.mrb[0].mxu0
      %5632 = vmatprep.mubr.f32.mxu0 %v5552
      %5633 = vmatmul.mubr.f32.gmra.mrb[0].mxu0 %v5514
      %v5634 = vpop.f32.mrb[0].mxu0
      %v5635 = vadd.f32 %v5449, %v5634
      %v5636 = vpop.f32.mrb[0].mxu0
      %5637 = vmatprep.mubr.f32.mxu0 %v5554
      %5638 = vmatmul.mubr.f32.gmra.mrb[0].mxu0 %v5532
      %v5639 = vpop.f32.mrb[0].mxu0
      %v5640 = vadd.f32 %v5454, %v5639
      %v5641 = vpop.f32.mrb[0].mxu0
      %5642 = vmatprep.mubr.f32.mxu0 %v5556
      %5643 = vmatmul.mubr.f32.gmra.mrb[0].mxu0 %v5541
      %v5644 = vpop.f32.mrb[0].mxu0
      %v5645 = vadd.f32 %v5459, %v5644
      %v5646 = vpop.f32.mrb[0].mxu0
      %5647 = vdwg.mxu0
      %v5649 = vcombine.low %v5112, %v5087
      %v5650 = vcombine.high %v5112, %v5087
      %v5652 = vunpack.c.l.s4 1983009808
      %v5653 = vunpack.c.0.s8 %v5652
      %v5654 = vlaneseq
      %v5655 = vshrl.u32 %v5654, 7
      %v5656 = vsub.s32 %v5653, %v5655
      %v5657 = vrot.slane %v5649, %v5656
      %v5659 = vunpack.c.l.s4 1983009808
      %v5660 = vunpack.c.0.s8 %v5659
      %v5661 = vlaneseq
      %v5662 = vshrl.u32 %v5661, 7
      %v5663 = vsub.s32 %v5660, %v5662
      %v5664 = vrot.slane %v5650, %v5663
      %v5665 = vcombine.high %v5657, %v5657
      %s5666 = scalar_lea.vmem %s5, 288
      %v5667 = vld [vmem:[%s5666] sm:$0xff]
      %v5668 = vld [vmem:[%s5666 + $0x8] sm:$0xff]
      %v5669 = vld [vmem:[%s5666 + $0x10] sm:$0xff]
      %v5670 = vld [vmem:[%s5666 + $0x18] sm:$0xff]
      %v5671 = vld [vmem:[%s5666 + $0x20] sm:$0xff]
      %v5672 = vld [vmem:[%s5666 + $0x28] sm:$0xff]
      %v5673 = vld [vmem:[%s5666 + $0x30] sm:$0xff]
      %v5674 = vld [vmem:[%s5666 + $0x38] sm:$0xff]
      %v5675 = vld [vmem:[%s5666 + $0x40] sm:$0xff]
      %v5676 = vld [vmem:[%s5666 + $0x48] sm:$0xff]
      %v5677 = vld [vmem:[%s5666 + $0x50] sm:$0xff]
      %v5678 = vld [vmem:[%s5666 + $0x58] sm:$0xff]
      %v5679 = vld [vmem:[%s5666 + $0x60] sm:$0xff]
      %v5680 = vld [vmem:[%s5666 + $0x68] sm:$0xff]
      %v5681 = vld [vmem:[%s5666 + $0x70] sm:$0xff]
      %v5682 = vld [vmem:[%s5666 + $0x78] sm:$0xff]
      %v5683 = vld [vmem:[%s5666 + $0x80] sm:$0xff]
      %v5684 = vld [vmem:[%s5666 + $0x88] sm:$0xff]
      %v5685 = vcombine.low %v5495, %v5506
      %v5686 = vcombine.high %v5495, %v5506
      %v5687 = vcombine.low %v5513, %v5524
      %v5688 = vcombine.high %v5513, %v5524
      %v5689 = vcombine.low %v5531, %v5541
      %v5690 = vcombine.high %v5531, %v5541
      %v5691 = vcombine.low %v5248, %v5256
      %v5692 = vcombine.low %v5255, %v5657
      %v5694 = vunpack.c.l.s4 1983009808
      %v5695 = vunpack.c.0.s8 %v5694
      %v5696 = vlaneseq
      %v5697 = vshrl.u32 %v5696, 7
      %v5698 = vsub.s32 %v5695, %v5697
      %v5699 = vrot.slane %v5691, %v5698
      %v5701 = vunpack.c.l.s4 1983009808
      %v5702 = vunpack.c.0.s8 %v5701
      %v5703 = vlaneseq
      %v5704 = vshrl.u32 %v5703, 7
      %v5705 = vsub.s32 %v5702, %v5704
      %v5706 = vrot.slane %v5692, %v5705
      %v5707 = vcombine.low %v5699, %v5706
      %v5708 = vcombine.high %v5699, %v5706
      %v5709 = vcombine.low %v5665, %v5664
      %v5711 = vunpack.c.l.s4 1983009808
      %v5712 = vunpack.c.0.s8 %v5711
      %v5713 = vlaneseq
      %v5714 = vshrl.u32 %v5713, 7
      %v5715 = vsub.s32 %v5712, %v5714
      %v5716 = vrot.slane %v5709, %v5715
      %v5717 = vcombine.high %v5716, %v5716
      %v5723 = vsel %vm4020, %v5686, 0
      %v5725 = vsel %vm4020, %v5688, 0
      %v5727 = vsel %vm4020, %v5690, 0
      %v5729 = vsel %vm4020, %v5708, 0
      %v5731 = vsel %vm4020, %v5717, 0
      %5733 = vmatprep.subr.mxu0 0.0
      %5734 = vmatpush1.msra.mxu0 %v5667
      %5735 = vmatprep.subr.mxu0 0.0
      %5736 = vmatpush1.msra.mxu0 %v5668
      %5737 = vmatprep.subr.mxu0 0.0
      %5738 = vmatpush1.msra.mxu0 %v5669
      %5739 = vmatprep.subr.mxu0 0.0
      %5740 = vmatpush1.msra.mxu0 %v5670
      %5741 = vmatprep.subr.mxu0 0.0
      %5742 = vmatpush1.msra.mxu0 %v5671
      %5743 = vmatprep.subr.mxu0 0.0
      %5744 = vmatpush1.msra.mxu0 %v5672
      %5745 = vmatprep.subr.mxu0 0.0
      %5746 = vmatpush1.msra.mxu0 %v5673
      %5747 = vmatprep.subr.mxu0 0.0
      %5748 = vmatpush1.msra.mxu0 %v5674
      %5749 = vmatprep.subr.mxu0 0.0
      %5750 = vmatpush1.msra.mxu0 %v5675
      %5751 = vmatprep.subr.mxu0 0.0
      %5752 = vmatpush1.msra.mxu0 %v5676
      %5753 = vmatprep.subr.mxu0 0.0
      %5754 = vmatpush1.msra.mxu0 %v5677
      %5755 = vmatprep.subr.mxu0 0.0
      %5756 = vmatpush1.msra.mxu0 %v5678
      %5757 = vmatprep.subr.mxu0 0.0
      %5758 = vmatpush1.msra.mxu0 %v5679
      %5759 = vmatprep.subr.mxu0 0.0
      %5760 = vmatpush1.msra.mxu0 %v5680
      %5761 = vmatprep.subr.mxu0 0.0
      %5762 = vmatpush1.msra.mxu0 %v5681
      %5763 = vmatprep.subr.mxu0 0.0
      %5764 = vmatpush1.msra.mxu0 %v5682
      %5765 = vmatprep.subr.mxu0 0.0
      %5766 = vmatpush1.msra.mxu0 %v5683
      %5767 = vmatprep.subr.mxu0 0.0
      %5768 = vmatpush1.msra.mxu0 %v5684
      %5769 = vmatprep.subr.mxu0 0.0
      %5770 = vmatpush1.msra.mxu0 0.0
      %5771 = vmatprep.subr.mxu0 0.0
      %5772 = vmatpush1.msra.mxu0 0.0
      %5773 = vmatprep.subr.mxu0 0.0
      %5774 = vmatpush1.msra.mxu0 0.0
      %5775 = vmatprep.subr.mxu0 0.0
      %5776 = vmatpush1.msra.mxu0 0.0
      %5777 = vmatprep.subr.mxu0 0.0
      %5778 = vmatpush1.msra.mxu0 0.0
      %5779 = vmatprep.subr.mxu0 0.0
      %5780 = vmatpush1.msra.mxu0 0.0
      %5781 = vmatprep.subr.mxu0 0.0
      %5782 = vmatpush1.msra.mxu0 0.0
      %5783 = vmatprep.subr.mxu0 0.0
      %5784 = vmatpush1.msra.mxu0 0.0
      %5785 = vmatprep.subr.mxu0 0.0
      %5786 = vmatpush1.msra.mxu0 0.0
      %5787 = vmatprep.subr.mxu0 0.0
      %5788 = vmatpush1.msra.mxu0 0.0
      %5789 = vmatprep.subr.mxu0 0.0
      %5790 = vmatpush1.msra.mxu0 0.0
      %5791 = vmatprep.subr.mxu0 0.0
      %5792 = vmatpush1.msra.mxu0 0.0
      %5793 = vmatprep.subr.mxu0 0.0
      %5794 = vmatpush1.msra.mxu0 0.0
      %5795 = vmatprep.subr.mxu0 0.0
      %5796 = vmatpush1.msra.mxu0 0.0
      %5797 = vmatprep.mubr.f32.mxu0 %v5723
      %5798 = vmatmul.mubr.f32.gmra.mrb[0].mxu0 %v5685
      %v5799 = vpop.f32.mrb[0].mxu0
      %v5800 = vadd.f32 0.0, %v5799
      %v5801 = vpop.f32.mrb[0].mxu0
      %5802 = vmatprep.mubr.f32.mxu0 %v5725
      %5803 = vmatmul.mubr.f32.gmra.mrb[0].mxu0 %v5687
      %v5804 = vpop.f32.mrb[0].mxu0
      %v5805 = vadd.f32 0.0, %v5804
      %v5806 = vpop.f32.mrb[0].mxu0
      %5807 = vmatprep.mubr.f32.mxu0 %v5727
      %5808 = vmatmul.mubr.f32.gmra.mrb[0].mxu0 %v5689
      %v5809 = vpop.f32.mrb[0].mxu0
      %v5810 = vadd.f32 0.0, %v5809
      %v5811 = vpop.f32.mrb[0].mxu0
      %5812 = vmatprep.mubr.f32.mxu0 %v5729
      %5813 = vmatmul.mubr.f32.gmra.mrb[0].mxu0 %v5707
      %v5814 = vpop.f32.mrb[0].mxu0
      %v5815 = vadd.f32 0.0, %v5814
      %v5816 = vpop.f32.mrb[0].mxu0
      %5817 = vmatprep.mubr.f32.mxu0 %v5731
      %5818 = vmatmul.mubr.f32.gmra.mrb[0].mxu0 %v5716
      %v5819 = vpop.f32.mrb[0].mxu0
      %v5820 = vadd.f32 0.0, %v5819
      %v5821 = vpop.f32.mrb[0].mxu0
      %5822 = vdwg.mxu0
      %v5823 = vadd.f32 %v5625, %v5800
      %v5824 = vadd.f32 %v5630, %v5805
      %v5825 = vadd.f32 %v5635, %v5810
      %v5826 = vadd.f32 %v5640, %v5815
      %v5827 = vadd.f32 %v5645, %v5820
      %v5833 = vcombine.high %v5823, %v5823
      %v5835 = vunpack.c.l.s4 1983009808
      %v5836 = vunpack.c.0.s8 %v5835
      %v5837 = vlaneseq
      %v5838 = vshrl.u32 %v5837, 7
      %v5839 = vsub.s32 %v5836, %v5838
      %v5840 = vrot.slane %v5823, %v5839
      %v5842 = vunpack.c.l.s4 1983009808
      %v5843 = vunpack.c.0.s8 %v5842
      %v5844 = vlaneseq
      %v5845 = vshrl.u32 %v5844, 7
      %v5846 = vsub.s32 %v5843, %v5845
      %v5847 = vrot.slane %v5833, %v5846
      %v5848 = vcombine.high %v5840, %v5840
      %v5849 = vcombine.high %v5847, %v5847
      %v5850 = vcombine.high %v5824, %v5824
      %v5852 = vunpack.c.l.s4 1983009808
      %v5853 = vunpack.c.0.s8 %v5852
      %v5854 = vlaneseq
      %v5855 = vshrl.u32 %v5854, 7
      %v5856 = vsub.s32 %v5853, %v5855
      %v5857 = vrot.slane %v5824, %v5856
      %v5859 = vunpack.c.l.s4 1983009808
      %v5860 = vunpack.c.0.s8 %v5859
      %v5861 = vlaneseq
      %v5862 = vshrl.u32 %v5861, 7
      %v5863 = vsub.s32 %v5860, %v5862
      %v5864 = vrot.slane %v5850, %v5863
      %v5865 = vcombine.high %v5857, %v5857
      %v5866 = vcombine.high %v5864, %v5864
      %v5867 = vcombine.high %v5825, %v5825
      %v5869 = vunpack.c.l.s4 1983009808
      %v5870 = vunpack.c.0.s8 %v5869
      %v5871 = vlaneseq
      %v5872 = vshrl.u32 %v5871, 7
      %v5873 = vsub.s32 %v5870, %v5872
      %v5874 = vrot.slane %v5825, %v5873
      %v5876 = vunpack.c.l.s4 1983009808
      %v5877 = vunpack.c.0.s8 %v5876
      %v5878 = vlaneseq
      %v5879 = vshrl.u32 %v5878, 7
      %v5880 = vsub.s32 %v5877, %v5879
      %v5881 = vrot.slane %v5867, %v5880
      %v5882 = vcombine.high %v5874, %v5874
      %v5883 = vcombine.high %v5881, %v5881
      %v5884 = vcombine.high %v5826, %v5826
      %v5886 = vunpack.c.l.s4 1983009808
      %v5887 = vunpack.c.0.s8 %v5886
      %v5888 = vlaneseq
      %v5889 = vshrl.u32 %v5888, 7
      %v5890 = vsub.s32 %v5887, %v5889
      %v5891 = vrot.slane %v5826, %v5890
      %v5893 = vunpack.c.l.s4 1983009808
      %v5894 = vunpack.c.0.s8 %v5893
      %v5895 = vlaneseq
      %v5896 = vshrl.u32 %v5895, 7
      %v5897 = vsub.s32 %v5894, %v5896
      %v5898 = vrot.slane %v5884, %v5897
      %v5899 = vcombine.high %v5891, %v5891
      %v5900 = vcombine.high %v5898, %v5898
      %v5902 = vunpack.c.l.s4 1983009808
      %v5903 = vunpack.c.0.s8 %v5902
      %v5904 = vlaneseq
      %v5905 = vshrl.u32 %v5904, 7
      %v5906 = vsub.s32 %v5903, %v5905
      %v5907 = vrot.slane %v5827, %v5906
      %v5908 = vcombine.high %v5907, %v5907
      %v5927 = vmax.f32 %v5840, %v5849
      %v5928 = vmax.f32 %v5848, %v5857
      %v5929 = vmax.f32 %v5847, %v5865
      %v5930 = vmax.f32 %v5864, %v5882
      %v5931 = vmax.f32 %v5866, %v5881
      %v5932 = vmax.f32 %v5874, %v5883
      %v5933 = vmax.f32 %v5891, %v5900
      %v5934 = vmax.f32 %v5899, %v5907
      %v5935 = vmax.f32 %v5898, %v5908
      %v5945 = vcombine.low %v5927, %v5928
      %v5947 = vunpack.c.l.s4 1983009808
      %v5948 = vunpack.c.0.s8 %v5947
      %v5949 = vlaneseq
      %v5950 = vshrl.u32 %v5949, 7
      %v5951 = vsub.s32 %v5948, %v5950
      %v5952 = vrot.slane %v5945, %v5951
      %v5954 = vunpack.c.l.s4 1983009808
      %v5955 = vunpack.c.0.s8 %v5954
      %v5956 = vlaneseq
      %v5957 = vshrl.u32 %v5956, 7
      %v5958 = vsub.s32 %v5955, %v5957
      %v5959 = vrot.slane %v5929, %v5958
      %v5960 = vcombine.low %v5952, %v5959
      %v5961 = vcombine.low %v5930, %v5931
      %v5963 = vunpack.c.l.s4 1983009808
      %v5964 = vunpack.c.0.s8 %v5963
      %v5965 = vlaneseq
      %v5966 = vshrl.u32 %v5965, 7
      %v5967 = vsub.s32 %v5964, %v5966
      %v5968 = vrot.slane %v5961, %v5967
      %v5970 = vunpack.c.l.s4 1983009808
      %v5971 = vunpack.c.0.s8 %v5970
      %v5972 = vlaneseq
      %v5973 = vshrl.u32 %v5972, 7
      %v5974 = vsub.s32 %v5971, %v5973
      %v5975 = vrot.slane %v5932, %v5974
      %v5976 = vcombine.low %v5968, %v5975
      %v5977 = vcombine.low %v5933, %v5934
      %v5979 = vunpack.c.l.s4 1983009808
      %v5980 = vunpack.c.0.s8 %v5979
      %v5981 = vlaneseq
      %v5982 = vshrl.u32 %v5981, 7
      %v5983 = vsub.s32 %v5980, %v5982
      %v5984 = vrot.slane %v5977, %v5983
      %v5986 = vunpack.c.l.s4 1983009808
      %v5987 = vunpack.c.0.s8 %v5986
      %v5988 = vlaneseq
      %v5989 = vshrl.u32 %v5988, 7
      %v5990 = vsub.s32 %v5987, %v5989
      %v5991 = vrot.slane %v5935, %v5990
      %v5992 = vcombine.low %v5984, %v5991
      %5996 = vst [vmem:[#allocation4] sm:$0x3f] %v5960
      %5997 = vst [vmem:[#allocation4 + $0x8] sm:$0x3f] %v5976
      %5998 = vst [vmem:[#allocation4 + $0x10] sm:$0x3f] %v5992
      %v5999 = vld [vmem:[#allocation4] ss:$2 sm:$0x7]
      %s6000 = scalar_lea.vmem [#allocation4], 8
      %v6001 = vld [vmem:[%s6000] ss:$2 sm:$0x7]
      %s6002 = scalar_lea.vmem [#allocation4], 16
      %v6003 = vld [vmem:[%s6002] ss:$2 sm:$0x7]
      %s6004 = scalar_lea.vmem [#allocation4], 1
      %v6005 = vld [vmem:[%s6004] ss:$2 sm:$0x7]
      %s6006 = scalar_lea.vmem [#allocation4], 9
      %v6007 = vld [vmem:[%s6006] ss:$2 sm:$0x7]
      %s6008 = scalar_lea.vmem [#allocation4], 17
      %v6009 = vld [vmem:[%s6008] ss:$2 sm:$0x7]
      %v6010 = vmax.f32 %v5999, %v6005
      %v6011 = vmax.f32 %v6001, %v6007
      %v6012 = vmax.f32 %v6003, %v6009
      %v6013 = vld [vmem:[%s6] sm:$0x1]
      %v6015 = vlaneseq
      %v6016 = vshrl.u32 %v6015, 7
      %v6017 = vsub.s32 0, %v6016
      %v6018 = vrot.slane %v6013, %v6017
      %v6020 = vadd.f32 %v6010, %v6018
      %v6021 = vadd.f32 %v6011, %v6018
      %v6022 = vadd.f32 %v6012, %v6018
      %v6023 = vtanh.pop %v6020
      %v6024 = vtanh.pop %v6021
      %v6025 = vtanh.pop %v6022
      %v6029 = vrot.slane %v6023, 1
      %v6030 = vrot.slane %v6024, 1
      %v6031 = vrot.slane %v6025, 1
      %6032 = vrot.lane.b32.xlu0 %v6029, 64
      %v6033 = vpop.permute.xlu0 %6032
      %6034 = vrot.lane.b32.xlu0 %v6030, 64
      %v6035 = vpop.permute.xlu0 %6034
      %6036 = vrot.lane.b32.xlu0 %v6031, 64
      %v6037 = vpop.permute.xlu0 %6036
      %vm6041 = vcmask 523264
      %v6042 = vsel %vm6041, %v6023, %v6033
      %v6043 = vsel %vm6041, %v6024, %v6035
      %v6044 = vsel %vm6041, %v6025, %v6037
      %v6048 = vcombine.low %v6042, %v6043
      %v6050 = vunpack.c.l.s4 1983009808
      %v6051 = vunpack.c.0.s8 %v6050
      %v6052 = vlaneseq
      %v6053 = vshrl.u32 %v6052, 7
      %v6054 = vsub.s32 %v6051, %v6053
      %v6055 = vrot.slane %v6048, %v6054
      %v6056 = vcombine.low %v6043, %v6044
      %v6058 = vunpack.c.l.s4 1983009808
      %v6059 = vunpack.c.0.s8 %v6058
      %v6060 = vlaneseq
      %v6061 = vshrl.u32 %v6060, 7
      %v6062 = vsub.s32 %v6059, %v6061
      %v6063 = vrot.slane %v6056, %v6062
      %v6064 = vcombine.low %v6055, %v6063
      %v6066 = vunpack.c.l.s4 1983009808
      %v6067 = vunpack.c.0.s8 %v6066
      %v6068 = vlaneseq
      %v6069 = vshrl.u32 %v6068, 7
      %v6070 = vsub.s32 %v6067, %v6069
      %v6071 = vrot.slane %v6064, %v6070
      %v6072 = vcombine.high %v6071, %v6071
      %vm6075 = vcmask 1043456
      %v6076 = vsel %vm6075, %v6071, 0.0
      %v6077 = vsel %vm6075, %v6072, 0.0
      %v6078 = vld [vmem:[%s7] sm:$0xff]
      %v6079 = vld [vmem:[%s7 + $0x8] sm:$0xff]
      %v6080 = vld [vmem:[%s7 + $0x10] sm:$0xff]
      %v6081 = vld [vmem:[%s7 + $0x18] sm:$0xff]
      %v6082 = vld [vmem:[%s7 + $0x20] sm:$0xff]
      %v6083 = vld [vmem:[%s7 + $0x28] sm:$0xff]
      %v6084 = vld [vmem:[%s7 + $0x30] sm:$0xff]
      %v6085 = vld [vmem:[%s7 + $0x38] sm:$0xff]
      %v6086 = vld [vmem:[%s7 + $0x40] sm:$0xff]
      %v6087 = vld [vmem:[%s7 + $0x48] sm:$0xff]
      %v6088 = vld [vmem:[%s7 + $0x50] sm:$0xff]
      %v6089 = vld [vmem:[%s7 + $0x58] sm:$0xff]
      %v6090 = vld [vmem:[%s7 + $0x60] sm:$0xff]
      %v6091 = vld [vmem:[%s7 + $0x68] sm:$0xff]
      %v6092 = vld [vmem:[%s7 + $0x70] sm:$0xff]
      %v6093 = vld [vmem:[%s7 + $0x78] sm:$0xff]
      %v6094 = vld [vmem:[%s7 + $0x80] sm:$0xff]
      %v6095 = vld [vmem:[%s7 + $0x88] sm:$0xff]
      %v6096 = vld [vmem:[%s7 + $0x90] sm:$0xff]
      %v6097 = vld [vmem:[%s7 + $0x98] sm:$0xff]
      %v6098 = vld [vmem:[%s7 + $0xa0] sm:$0xff]
      %v6099 = vld [vmem:[%s7 + $0xa8] sm:$0xff]
      %v6100 = vld [vmem:[%s7 + $0xb0] sm:$0xff]
      %v6101 = vld [vmem:[%s7 + $0xb8] sm:$0xff]
      %v6102 = vld [vmem:[%s7 + $0xc0] sm:$0xff]
      %v6103 = vld [vmem:[%s7 + $0xc8] sm:$0xff]
      %v6104 = vld [vmem:[%s7 + $0xd0] sm:$0xff]
      %v6105 = vld [vmem:[%s7 + $0xd8] sm:$0xff]
      %v6106 = vld [vmem:[%s7 + $0xe0] sm:$0xff]
      %v6107 = vld [vmem:[%s7 + $0xe8] sm:$0xff]
      %v6108 = vld [vmem:[%s7 + $0xf0] sm:$0xff]
      %v6109 = vld [vmem:[%s7 + $0xf8] sm:$0xff]
      %v6110 = vld [vmem:[%s8] sm:$0x1]
      %v6112 = vlaneseq
      %v6113 = vshrl.u32 %v6112, 7
      %v6114 = vsub.s32 0, %v6113
      %v6115 = vrot.slane %v6110, %v6114
      %6117 = vmatprep.subr.mxu0 0.0
      %6118 = vmatpush1.msra.mxu0 %v6078
      %6119 = vmatprep.subr.mxu0 0.0
      %6120 = vmatpush1.msra.mxu0 %v6079
      %6121 = vmatprep.subr.mxu0 0.0
      %6122 = vmatpush1.msra.mxu0 %v6080
      %6123 = vmatprep.subr.mxu0 0.0
      %6124 = vmatpush1.msra.mxu0 %v6081
      %6125 = vmatprep.subr.mxu0 0.0
      %6126 = vmatpush1.msra.mxu0 %v6082
      %6127 = vmatprep.subr.mxu0 0.0
      %6128 = vmatpush1.msra.mxu0 %v6083
      %6129 = vmatprep.subr.mxu0 0.0
      %6130 = vmatpush1.msra.mxu0 %v6084
      %6131 = vmatprep.subr.mxu0 0.0
      %6132 = vmatpush1.msra.mxu0 %v6085
      %6133 = vmatprep.subr.mxu0 0.0
      %6134 = vmatpush1.msra.mxu0 %v6086
      %6135 = vmatprep.subr.mxu0 0.0
      %6136 = vmatpush1.msra.mxu0 %v6087
      %6137 = vmatprep.subr.mxu0 0.0
      %6138 = vmatpush1.msra.mxu0 %v6088
      %6139 = vmatprep.subr.mxu0 0.0
      %6140 = vmatpush1.msra.mxu0 %v6089
      %6141 = vmatprep.subr.mxu0 0.0
      %6142 = vmatpush1.msra.mxu0 %v6090
      %6143 = vmatprep.subr.mxu0 0.0
      %6144 = vmatpush1.msra.mxu0 %v6091
      %6145 = vmatprep.subr.mxu0 0.0
      %6146 = vmatpush1.msra.mxu0 %v6092
      %6147 = vmatprep.subr.mxu0 0.0
      %6148 = vmatpush1.msra.mxu0 %v6093
      %6149 = vmatprep.subr.mxu0 0.0
      %6150 = vmatpush1.msra.mxu0 %v6094
      %6151 = vmatprep.subr.mxu0 0.0
      %6152 = vmatpush1.msra.mxu0 %v6095
      %6153 = vmatprep.subr.mxu0 0.0
      %6154 = vmatpush1.msra.mxu0 %v6096
      %6155 = vmatprep.subr.mxu0 0.0
      %6156 = vmatpush1.msra.mxu0 %v6097
      %6157 = vmatprep.subr.mxu0 0.0
      %6158 = vmatpush1.msra.mxu0 %v6098
      %6159 = vmatprep.subr.mxu0 0.0
      %6160 = vmatpush1.msra.mxu0 %v6099
      %6161 = vmatprep.subr.mxu0 0.0
      %6162 = vmatpush1.msra.mxu0 %v6100
      %6163 = vmatprep.subr.mxu0 0.0
      %6164 = vmatpush1.msra.mxu0 %v6101
      %6165 = vmatprep.subr.mxu0 0.0
      %6166 = vmatpush1.msra.mxu0 %v6102
      %6167 = vmatprep.subr.mxu0 0.0
      %6168 = vmatpush1.msra.mxu0 %v6103
      %6169 = vmatprep.subr.mxu0 0.0
      %6170 = vmatpush1.msra.mxu0 %v6104
      %6171 = vmatprep.subr.mxu0 0.0
      %6172 = vmatpush1.msra.mxu0 %v6105
      %6173 = vmatprep.subr.mxu0 0.0
      %6174 = vmatpush1.msra.mxu0 %v6106
      %6175 = vmatprep.subr.mxu0 0.0
      %6176 = vmatpush1.msra.mxu0 %v6107
      %6177 = vmatprep.subr.mxu0 0.0
      %6178 = vmatpush1.msra.mxu0 %v6108
      %6179 = vmatprep.subr.mxu0 0.0
      %6180 = vmatpush1.msra.mxu0 %v6109
      %6181 = vmatprep.mubr.f32.mxu0 %v6077
      %6182 = vmatmul.mubr.f32.gmra.mrb[0].mxu0 %v6076
      %v6183 = vpop.f32.mrb[0].mxu0
      %v6184 = vadd.f32 %v6115, %v6183
      %v6185 = vpop.f32.mrb[0].mxu0
      %6186 = vdwg.mxu0
      %v6187 = vtanh.pop %v6184
      %v6189 = vrot.slane %v6187, 1
      %v6191 = vrot.slane %v6187, 2
      %v6193 = vrot.slane %v6187, 3
      %v6195 = vlaneseq
      %v6196 = vshrl.u32 %v6195, 7
      %v6197 = vsub.s32 0, %v6196
      %v6198 = vrot.slane %v6187, %v6197
      %v6199 = vlaneseq
      %v6200 = vshrl.u32 %v6199, 7
      %v6201 = vsub.s32 0, %v6200
      %v6202 = vrot.slane %v6189, %v6201
      %v6203 = vlaneseq
      %v6204 = vshrl.u32 %v6203, 7
      %v6205 = vsub.s32 0, %v6204
      %v6206 = vrot.slane %v6191, %v6205
      %v6207 = vlaneseq
      %v6208 = vshrl.u32 %v6207, 7
      %v6209 = vsub.s32 0, %v6208
      %v6210 = vrot.slane %v6193, %v6209
      %v6211 = vld [vmem:[%s9] sm:$0xff]
      %v6212 = vld [vmem:[%s9 + $0x8] sm:$0xff]
      %v6213 = vld [vmem:[%s9 + $0x10] sm:$0xff]
      %v6214 = vld [vmem:[%s9 + $0x18] sm:$0xff]
      %v6215 = vld [vmem:[%s9 + $0x20] sm:$0xff]
      %v6216 = vld [vmem:[%s9 + $0x28] sm:$0xff]
      %v6217 = vld [vmem:[%s9 + $0x30] sm:$0xff]
      %v6218 = vld [vmem:[%s9 + $0x38] sm:$0xff]
      %v6219 = vld [vmem:[%s9 + $0x40] sm:$0xff]
      %v6220 = vld [vmem:[%s9 + $0x48] sm:$0xff]
      %v6221 = vld [vmem:[%s9 + $0x50] sm:$0xff]
      %v6222 = vld [vmem:[%s9 + $0x58] sm:$0xff]
      %v6223 = vld [vmem:[%s9 + $0x60] sm:$0xff]
      %v6224 = vld [vmem:[%s9 + $0x68] sm:$0xff]
      %v6225 = vld [vmem:[%s9 + $0x70] sm:$0xff]
      %v6226 = vld [vmem:[%s9 + $0x78] sm:$0xff]
      %v6227 = vld [vmem:[%s9 + $0x80] sm:$0xff]
      %v6228 = vld [vmem:[%s9 + $0x88] sm:$0xff]
      %v6229 = vld [vmem:[%s9 + $0x90] sm:$0xff]
      %v6230 = vld [vmem:[%s9 + $0x98] sm:$0xff]
      %v6231 = vld [vmem:[%s9 + $0xa0] sm:$0xff]
      %v6232 = vld [vmem:[%s9 + $0xa8] sm:$0xff]
      %v6233 = vld [vmem:[%s9 + $0xb0] sm:$0xff]
      %v6234 = vld [vmem:[%s9 + $0xb8] sm:$0xff]
      %v6235 = vld [vmem:[%s9 + $0xc0] sm:$0xff]
      %v6236 = vld [vmem:[%s9 + $0xc8] sm:$0xff]
      %v6237 = vld [vmem:[%s9 + $0xd0] sm:$0xff]
      %v6238 = vld [vmem:[%s9 + $0xd8] sm:$0xff]
      %v6239 = vld [vmem:[%s9 + $0xe0] sm:$0xff]
      %v6240 = vld [vmem:[%s9 + $0xe8] sm:$0xff]
      %v6241 = vld [vmem:[%s9 + $0xf0] sm:$0xff]
      %v6242 = vld [vmem:[%s9 + $0xf8] sm:$0xff]
      %v6243 = vld [vmem:[%s9 + $0x100] sm:$0xff]
      %v6244 = vld [vmem:[%s9 + $0x108] sm:$0xff]
      %v6245 = vld [vmem:[%s9 + $0x110] sm:$0xff]
      %v6246 = vld [vmem:[%s9 + $0x118] sm:$0xff]
      %v6247 = vld [vmem:[%s9 + $0x120] sm:$0xff]
      %v6248 = vld [vmem:[%s9 + $0x128] sm:$0xff]
      %v6249 = vld [vmem:[%s9 + $0x130] sm:$0xff]
      %v6250 = vld [vmem:[%s9 + $0x138] sm:$0xff]
      %v6251 = vld [vmem:[%s9 + $0x140] sm:$0xff]
      %v6252 = vld [vmem:[%s9 + $0x148] sm:$0xff]
      %v6253 = vld [vmem:[%s9 + $0x150] sm:$0xff]
      %v6254 = vld [vmem:[%s9 + $0x158] sm:$0xff]
      %v6255 = vld [vmem:[%s9 + $0x160] sm:$0xff]
      %v6256 = vld [vmem:[%s9 + $0x168] sm:$0xff]
      %v6257 = vld [vmem:[%s9 + $0x170] sm:$0xff]
      %v6258 = vld [vmem:[%s9 + $0x178] sm:$0xff]
      %v6259 = vld [vmem:[%s9 + $0x180] sm:$0xff]
      %v6260 = vld [vmem:[%s9 + $0x188] sm:$0xff]
      %v6261 = vld [vmem:[%s9 + $0x190] sm:$0xff]
      %v6262 = vld [vmem:[%s9 + $0x198] sm:$0xff]
      %v6263 = vld [vmem:[%s9 + $0x1a0] sm:$0xff]
      %v6264 = vld [vmem:[%s9 + $0x1a8] sm:$0xff]
      %v6265 = vld [vmem:[%s9 + $0x1b0] sm:$0xff]
      %v6266 = vld [vmem:[%s9 + $0x1b8] sm:$0xff]
      %v6267 = vld [vmem:[%s9 + $0x1c0] sm:$0xff]
      %v6268 = vld [vmem:[%s9 + $0x1c8] sm:$0xff]
      %v6269 = vld [vmem:[%s9 + $0x1d0] sm:$0xff]
      %v6270 = vld [vmem:[%s9 + $0x1d8] sm:$0xff]
      %v6271 = vld [vmem:[%s9 + $0x1e0] sm:$0xff]
      %v6272 = vld [vmem:[%s9 + $0x1e8] sm:$0xff]
      %v6273 = vld [vmem:[%s9 + $0x1f0] sm:$0xff]
      %v6274 = vld [vmem:[%s9 + $0x1f8] sm:$0xff]
      %v6275 = vld [vmem:[%s10] sm:$0x1]
      %v6277 = vlaneseq
      %v6278 = vshrl.u32 %v6277, 7
      %v6279 = vsub.s32 0, %v6278
      %v6280 = vrot.slane %v6275, %v6279
      %6282 = vmatprep.subr.mxu0 0.0
      %6283 = vmatpush1.msra.mxu0 %v6211
      %6284 = vmatprep.subr.mxu0 0.0
      %6285 = vmatpush1.msra.mxu0 %v6212
      %6286 = vmatprep.subr.mxu0 0.0
      %6287 = vmatpush1.msra.mxu0 %v6213
      %6288 = vmatprep.subr.mxu0 0.0
      %6289 = vmatpush1.msra.mxu0 %v6214
      %6290 = vmatprep.subr.mxu0 0.0
      %6291 = vmatpush1.msra.mxu0 %v6215
      %6292 = vmatprep.subr.mxu0 0.0
      %6293 = vmatpush1.msra.mxu0 %v6216
      %6294 = vmatprep.subr.mxu0 0.0
      %6295 = vmatpush1.msra.mxu0 %v6217
      %6296 = vmatprep.subr.mxu0 0.0
      %6297 = vmatpush1.msra.mxu0 %v6218
      %6298 = vmatprep.subr.mxu0 0.0
      %6299 = vmatpush1.msra.mxu0 %v6219
      %6300 = vmatprep.subr.mxu0 0.0
      %6301 = vmatpush1.msra.mxu0 %v6220
      %6302 = vmatprep.subr.mxu0 0.0
      %6303 = vmatpush1.msra.mxu0 %v6221
      %6304 = vmatprep.subr.mxu0 0.0
      %6305 = vmatpush1.msra.mxu0 %v6222
      %6306 = vmatprep.subr.mxu0 0.0
      %6307 = vmatpush1.msra.mxu0 %v6223
      %6308 = vmatprep.subr.mxu0 0.0
      %6309 = vmatpush1.msra.mxu0 %v6224
      %6310 = vmatprep.subr.mxu0 0.0
      %6311 = vmatpush1.msra.mxu0 %v6225
      %6312 = vmatprep.subr.mxu0 0.0
      %6313 = vmatpush1.msra.mxu0 %v6226
      %6314 = vmatprep.subr.mxu0 0.0
      %6315 = vmatpush1.msra.mxu0 %v6227
      %6316 = vmatprep.subr.mxu0 0.0
      %6317 = vmatpush1.msra.mxu0 %v6228
      %6318 = vmatprep.subr.mxu0 0.0
      %6319 = vmatpush1.msra.mxu0 %v6229
      %6320 = vmatprep.subr.mxu0 0.0
      %6321 = vmatpush1.msra.mxu0 %v6230
      %6322 = vmatprep.subr.mxu0 0.0
      %6323 = vmatpush1.msra.mxu0 %v6231
      %6324 = vmatprep.subr.mxu0 0.0
      %6325 = vmatpush1.msra.mxu0 %v6232
      %6326 = vmatprep.subr.mxu0 0.0
      %6327 = vmatpush1.msra.mxu0 %v6233
      %6328 = vmatprep.subr.mxu0 0.0
      %6329 = vmatpush1.msra.mxu0 %v6234
      %6330 = vmatprep.subr.mxu0 0.0
      %6331 = vmatpush1.msra.mxu0 %v6235
      %6332 = vmatprep.subr.mxu0 0.0
      %6333 = vmatpush1.msra.mxu0 %v6236
      %6334 = vmatprep.subr.mxu0 0.0
      %6335 = vmatpush1.msra.mxu0 %v6237
      %6336 = vmatprep.subr.mxu0 0.0
      %6337 = vmatpush1.msra.mxu0 %v6238
      %6338 = vmatprep.subr.mxu0 0.0
      %6339 = vmatpush1.msra.mxu0 %v6239
      %6340 = vmatprep.subr.mxu0 0.0
      %6341 = vmatpush1.msra.mxu0 %v6240
      %6342 = vmatprep.subr.mxu0 0.0
      %6343 = vmatpush1.msra.mxu0 %v6241
      %6344 = vmatprep.subr.mxu0 0.0
      %6345 = vmatpush1.msra.mxu0 %v6242
      %6346 = vmatprep.mubr.f32.mxu0 %v6202
      %6347 = vmatmul.mubr.f32.gmra.mrb[0].mxu0 %v6198
      %v6348 = vpop.f32.mrb[0].mxu0
      %v6349 = vadd.f32 %v6280, %v6348
      %v6350 = vpop.f32.mrb[0].mxu0
      %6351 = vdwg.mxu0
      %6352 = vmatprep.subr.mxu0 0.0
      %6353 = vmatpush1.msra.mxu0 %v6243
      %6354 = vmatprep.subr.mxu0 0.0
      %6355 = vmatpush1.msra.mxu0 %v6244
      %6356 = vmatprep.subr.mxu0 0.0
      %6357 = vmatpush1.msra.mxu0 %v6245
      %6358 = vmatprep.subr.mxu0 0.0
      %6359 = vmatpush1.msra.mxu0 %v6246
      %6360 = vmatprep.subr.mxu0 0.0
      %6361 = vmatpush1.msra.mxu0 %v6247
      %6362 = vmatprep.subr.mxu0 0.0
      %6363 = vmatpush1.msra.mxu0 %v6248
      %6364 = vmatprep.subr.mxu0 0.0
      %6365 = vmatpush1.msra.mxu0 %v6249
      %6366 = vmatprep.subr.mxu0 0.0
      %6367 = vmatpush1.msra.mxu0 %v6250
      %6368 = vmatprep.subr.mxu0 0.0
      %6369 = vmatpush1.msra.mxu0 %v6251
      %6370 = vmatprep.subr.mxu0 0.0
      %6371 = vmatpush1.msra.mxu0 %v6252
      %6372 = vmatprep.subr.mxu0 0.0
      %6373 = vmatpush1.msra.mxu0 %v6253
      %6374 = vmatprep.subr.mxu0 0.0
      %6375 = vmatpush1.msra.mxu0 %v6254
      %6376 = vmatprep.subr.mxu0 0.0
      %6377 = vmatpush1.msra.mxu0 %v6255
      %6378 = vmatprep.subr.mxu0 0.0
      %6379 = vmatpush1.msra.mxu0 %v6256
      %6380 = vmatprep.subr.mxu0 0.0
      %6381 = vmatpush1.msra.mxu0 %v6257
      %6382 = vmatprep.subr.mxu0 0.0
      %6383 = vmatpush1.msra.mxu0 %v6258
      %6384 = vmatprep.subr.mxu0 0.0
      %6385 = vmatpush1.msra.mxu0 %v6259
      %6386 = vmatprep.subr.mxu0 0.0
      %6387 = vmatpush1.msra.mxu0 %v6260
      %6388 = vmatprep.subr.mxu0 0.0
      %6389 = vmatpush1.msra.mxu0 %v6261
      %6390 = vmatprep.subr.mxu0 0.0
      %6391 = vmatpush1.msra.mxu0 %v6262
      %6392 = vmatprep.subr.mxu0 0.0
      %6393 = vmatpush1.msra.mxu0 %v6263
      %6394 = vmatprep.subr.mxu0 0.0
      %6395 = vmatpush1.msra.mxu0 %v6264
      %6396 = vmatprep.subr.mxu0 0.0
      %6397 = vmatpush1.msra.mxu0 %v6265
      %6398 = vmatprep.subr.mxu0 0.0
      %6399 = vmatpush1.msra.mxu0 %v6266
      %6400 = vmatprep.subr.mxu0 0.0
      %6401 = vmatpush1.msra.mxu0 %v6267
      %6402 = vmatprep.subr.mxu0 0.0
      %6403 = vmatpush1.msra.mxu0 %v6268
      %6404 = vmatprep.subr.mxu0 0.0
      %6405 = vmatpush1.msra.mxu0 %v6269
      %6406 = vmatprep.subr.mxu0 0.0
      %6407 = vmatpush1.msra.mxu0 %v6270
      %6408 = vmatprep.subr.mxu0 0.0
      %6409 = vmatpush1.msra.mxu0 %v6271
      %6410 = vmatprep.subr.mxu0 0.0
      %6411 = vmatpush1.msra.mxu0 %v6272
      %6412 = vmatprep.subr.mxu0 0.0
      %6413 = vmatpush1.msra.mxu0 %v6273
      %6414 = vmatprep.subr.mxu0 0.0
      %6415 = vmatpush1.msra.mxu0 %v6274
      %6416 = vmatprep.mubr.f32.mxu0 %v6210
      %6417 = vmatmul.mubr.f32.gmra.mrb[0].mxu0 %v6206
      %v6418 = vpop.f32.mrb[0].mxu0
      %v6419 = vadd.f32 %v6349, %v6418
      %v6420 = vpop.f32.mrb[0].mxu0
      %6421 = vdwg.mxu0
      %v6422 = vtanh.pop %v6419
      %v6423 = vld [vmem:[%s11] sm:$0xff]
      %v6424 = vld [vmem:[%s11 + $0x8] sm:$0xff]
      %v6425 = vld [vmem:[%s11 + $0x10] sm:$0xff]
      %v6426 = vld [vmem:[%s11 + $0x18] sm:$0xff]
      %v6427 = vld [vmem:[%s11 + $0x20] sm:$0xff]
      %v6428 = vld [vmem:[%s11 + $0x28] sm:$0xff]
      %v6429 = vld [vmem:[%s11 + $0x30] sm:$0xff]
      %v6430 = vld [vmem:[%s11 + $0x38] sm:$0xff]
      %v6431 = vld [vmem:[%s11 + $0x40] sm:$0xff]
      %v6432 = vld [vmem:[%s11 + $0x48] sm:$0xff]
      %v6433 = vld [vmem:[%s11 + $0x50] sm:$0xff]
      %v6434 = vld [vmem:[%s11 + $0x58] sm:$0xff]
      %v6435 = vld [vmem:[%s11 + $0x60] sm:$0xff]
      %v6436 = vld [vmem:[%s11 + $0x68] sm:$0xff]
      %v6437 = vld [vmem:[%s11 + $0x70] sm:$0xff]
      %v6438 = vld [vmem:[%s11 + $0x78] sm:$0xff]
      %v6439 = vld [vmem:[%s12] sm:$0x1]
      %v6441 = vlaneseq
      %v6442 = vshrl.u32 %v6441, 7
      %v6443 = vsub.s32 0, %v6442
      %v6444 = vrot.slane %v6439, %v6443
      %6446 = vmatprep.subr.mxu0 0.0
      %6447 = vmatpush1.msra.mxu0 %v6423
      %6448 = vmatprep.subr.mxu0 0.0
      %6449 = vmatpush1.msra.mxu0 %v6424
      %6450 = vmatprep.subr.mxu0 0.0
      %6451 = vmatpush1.msra.mxu0 %v6425
      %6452 = vmatprep.subr.mxu0 0.0
      %6453 = vmatpush1.msra.mxu0 %v6426
      %6454 = vmatprep.subr.mxu0 0.0
      %6455 = vmatpush1.msra.mxu0 %v6427
      %6456 = vmatprep.subr.mxu0 0.0
      %6457 = vmatpush1.msra.mxu0 %v6428
      %6458 = vmatprep.subr.mxu0 0.0
      %6459 = vmatpush1.msra.mxu0 %v6429
      %6460 = vmatprep.subr.mxu0 0.0
      %6461 = vmatpush1.msra.mxu0 %v6430
      %6462 = vmatprep.subr.mxu0 0.0
      %6463 = vmatpush1.msra.mxu0 %v6431
      %6464 = vmatprep.subr.mxu0 0.0
      %6465 = vmatpush1.msra.mxu0 %v6432
      %6466 = vmatprep.subr.mxu0 0.0
      %6467 = vmatpush1.msra.mxu0 %v6433
      %6468 = vmatprep.subr.mxu0 0.0
      %6469 = vmatpush1.msra.mxu0 %v6434
      %6470 = vmatprep.subr.mxu0 0.0
      %6471 = vmatpush1.msra.mxu0 %v6435
      %6472 = vmatprep.subr.mxu0 0.0
      %6473 = vmatpush1.msra.mxu0 %v6436
      %6474 = vmatprep.subr.mxu0 0.0
      %6475 = vmatpush1.msra.mxu0 %v6437
      %6476 = vmatprep.subr.mxu0 0.0
      %6477 = vmatpush1.msra.mxu0 %v6438
      %6478 = vmatprep.subr.mxu0 0.0
      %6479 = vmatpush1.msra.mxu0 0.0
      %6480 = vmatprep.subr.mxu0 0.0
      %6481 = vmatpush1.msra.mxu0 0.0
      %6482 = vmatprep.subr.mxu0 0.0
      %6483 = vmatpush1.msra.mxu0 0.0
      %6484 = vmatprep.subr.mxu0 0.0
      %6485 = vmatpush1.msra.mxu0 0.0
      %6486 = vmatprep.subr.mxu0 0.0
      %6487 = vmatpush1.msra.mxu0 0.0
      %6488 = vmatprep.subr.mxu0 0.0
      %6489 = vmatpush1.msra.mxu0 0.0
      %6490 = vmatprep.subr.mxu0 0.0
      %6491 = vmatpush1.msra.mxu0 0.0
      %6492 = vmatprep.subr.mxu0 0.0
      %6493 = vmatpush1.msra.mxu0 0.0
      %6494 = vmatprep.subr.mxu0 0.0
      %6495 = vmatpush1.msra.mxu0 0.0
      %6496 = vmatprep.subr.mxu0 0.0
      %6497 = vmatpush1.msra.mxu0 0.0
      %6498 = vmatprep.subr.mxu0 0.0
      %6499 = vmatpush1.msra.mxu0 0.0
      %6500 = vmatprep.subr.mxu0 0.0
      %6501 = vmatpush1.msra.mxu0 0.0
      %6502 = vmatprep.subr.mxu0 0.0
      %6503 = vmatpush1.msra.mxu0 0.0
      %6504 = vmatprep.subr.mxu0 0.0
      %6505 = vmatpush1.msra.mxu0 0.0
      %6506 = vmatprep.subr.mxu0 0.0
      %6507 = vmatpush1.msra.mxu0 0.0
      %6508 = vmatprep.subr.mxu0 0.0
      %6509 = vmatpush1.msra.mxu0 0.0
      %6510 = vmatprep.mubr.f32.mxu0 0.0
      %6511 = vmatmul.mubr.f32.gmra.mrb[0].mxu0 %v6422
      %v6512 = vpop.f32.mrb[0].mxu0
      %v6513 = vadd.f32 %v6444, %v6512
      %v6514 = vpop.f32.mrb[0].mxu0
      %6515 = vdwg.mxu0
      %6516 = vst [vmem:[%s438] sm:$0xff] %v6513
      %p6517 = scmp.lt.s32.totalorder %s24, 1
      %s6518 = scalar_select %p6517, %s24, 1
      %s6519 = smul.addr %s6518, 8
      %s6520 = scalar_lea.vmem %s13, %s6519
      // Predicated region
      $region73: #{mynet_forward.1} parent=71 // pred_check
        %p6521 = pneg %p320
      $region74: #{mynet_forward.1} parent=71 // pred_check_branch
        %6523 = sbr.rel (%p6521) target = $region76
      $region75: #{mynet_forward.1} parent=71 // pred_region
        _
      $region76: #{mynet_forward.1} parent=71 // pred_fallthru
        _
    $region72: #{mynet_forward.1} parent=5 // pred_fallthru
      _
    %p6524 = scmp.le.s32.totalorder 2, %s19
    // Predicated region
    $region77: #{mynet_forward.1} parent=5 // pred_check
      %p6525 = pneg %p6524
    $region78: #{mynet_forward.1} parent=5 // pred_check_branch
      %6527 = sbr.rel (%p6525) target = $region80
    $region79: #{mynet_forward.1} parent=5 // pred_region
      %s6528 = ssub.s32 %s19, 2
      // Predicated region
      $region81: #{mynet_forward.1} parent=79 // pred_check
        %p6529 = pneg %p326
      $region82: #{mynet_forward.1} parent=79 // pred_check_branch
        %6531 = sbr.rel (%p6529) target = $region84
      $region83: #{mynet_forward.1} parent=79 // pred_region
        %p6532 = scmp.lt.s32.totalorder %s25, 1
        %s6533 = scalar_select %p6532, %s25, 1
        %s6534 = smul.addr %s6533, 8
        %s6535 = scalar_lea.vmem %s13, %s6534
      $region84: #{mynet_forward.1} parent=79 // pred_fallthru
        _
    $region80: #{mynet_forward.1} parent=5 // pred_fallthru
      _
  $region6: #{mynet_forward.1} parent=0 // loop_footer
    %s23 = sadd.s32 1, %s19
  $region7: #{mynet_forward.1} parent=0 // loop_footer_branch
    %18 = sbr.rel target = $region3
  $region8: #{mynet_forward.1} parent=0 // loop_exit
    _

</llo_original>
